<compile_context>
chip_gen: v7x
topology: tpu7x:2x2x1
jax: 0.10.0
libtpu: 0.0.40
codegen_flags: <defaults>
</compile_context>

<pallas_src>
import functools

import jax
import jax.numpy as jnp
from jax.experimental import pallas as pl
from jax.experimental.pallas import tpu as pltpu


# Re-derive per generation: v5e/v6e have 128 MiB physical VMEM, v7x only 64 MiB.
_VMEM_LIMIT_BYTES = 32 * 1024 * 1024


def _round_up(x, m):
    return (x + m - 1) // m * m


def _compiler_params(dims):
    return pltpu.CompilerParams(dimension_semantics=dims,
                                vmem_limit_bytes=_VMEM_LIMIT_BYTES)


# ----------------------------------------------------------------------------
# Pallas kernels
# ----------------------------------------------------------------------------
def _upsample_kernel(x_ref, w_ref, b_ref, o_ref):
    # ConvTranspose2d(k=2, s=2) as one lane-dense matmul: rows of w are ordered
    # (di, dj, c_out), so the output holds the four parity planes stacked.
    y = jnp.dot(w_ref[...], x_ref[...], preferred_element_type=jnp.float32)
    o_ref[...] = (y + b_ref[...]).astype(o_ref.dtype)


def _conv3x3_stats_kernel(*refs, n_in, w_pad, halo):
    """Pass A: 3x3 conv on a halo'ed row tile + masked partial BN statistics.

    refs = x_0..x_{n_in-1} (Ci, TL+2*halo) bf16,
           w_0..w_{n_in-1} (9, Cout_p, Ci) bf16,
           mask (1, TL) f32,
           y (Cout_p, TL) f32 [out], s1 (Cout_p, 1) f32 [out], s2 (Cout_p, 1) f32 [out]
    """
    x_refs = refs[:n_in]
    w_refs = refs[n_in:2 * n_in]
    mask_ref = refs[2 * n_in]
    y_ref, s1_ref, s2_ref = refs[2 * n_in + 1:]
    tl = y_ref.shape[-1]

    acc = jnp.zeros(y_ref.shape, jnp.float32)
    for idx in range(n_in):                       # fused concat: one loop per input slice
        x = x_refs[idx][...]                      # (Ci, TL + 2*halo), loaded once
        wk = w_refs[idx]
        for a in range(3):                        # in-kernel im2col: 9 shifted matmuls
            for b in range(3):
                off = halo + (a - 1) * w_pad + (b - 1)
                acc += jnp.dot(wk[a * 3 + b], x[:, off:off + tl],
                               preferred_element_type=jnp.float32)
    y_ref[...] = acc

    m = mask_ref[...]                             # 1 at true conv-output centres, else 0
    ym = acc * m

    @pl.when(pl.program_id(1) == 0)               # batch axis ("arbitrary") accumulator init
    def _init():
        s1_ref[...] = jnp.zeros_like(s1_ref)
        s2_ref[...] = jnp.zeros_like(s2_ref)

    s1_ref[...] += jnp.sum(ym, axis=1, keepdims=True)
    s2_ref[...] += jnp.sum(ym * acc, axis=1, keepdims=True)


def _bn_relu_kernel(y_ref, scale_ref, shift_ref, mask_ref, z_ref):
    # Pass B: y*scale + shift, ReLU, zero the non-centre (padding/junk) positions so the
    # result is directly the padded-flat input of the next conv.
    z = jnp.maximum(y_ref[...] * scale_ref[...] + shift_ref[...], 0.0) * mask_ref[...]
    z_ref[...] = z.astype(z_ref.dtype)


def _bn_relu_seg_kernel(y_ref, scale_ref, shift_ref, mask_ref, segw_ref, segb_ref,
                        x_ref, pred_ref):
    # Pass B for the second conv, with the 1x1 seg head fused as a VPU/XLU dot
    # (sublane reduction) -- no extra pallas_call / HBM pass for `pred`.
    z = jnp.maximum(y_ref[...] * scale_ref[...] + shift_ref[...], 0.0) * mask_ref[...]
    x_ref[...] = z.astype(x_ref.dtype)
    p = jnp.sum(z * segw_ref[...], axis=0, keepdims=True) + segb_ref[...]
    pred_ref[...] = p.astype(pred_ref.dtype)


# ----------------------------------------------------------------------------
# pallas_call wrappers
# ----------------------------------------------------------------------------
def upsample_2x2(high_flat, w_all, b_all, tu):
    n, ch_p, hw_r = high_flat.shape
    n_tiles = hw_r // tu
    fco = w_all.shape[0]
    return pl.pallas_call(
        _upsample_kernel,
        grid=(n_tiles, n),
        in_specs=[
            pl.BlockSpec((None, ch_p, tu), lambda t, b: (b, 0, t)),
            pl.BlockSpec((fco, ch_p), lambda t, b: (0, 0)),
            pl.BlockSpec((fco, 1), lambda t, b: (0, 0)),
        ],
        out_specs=pl.BlockSpec((None, fco, tu), lambda t, b: (b, 0, t)),
        out_shape=jax.ShapeDtypeStruct((n, fco, hw_r), jnp.bfloat16),
        compiler_params=_compiler_params(("parallel", "parallel")),
    )(high_flat, w_all, b_all)


def conv3x3_pass_a(x_tiles, weights, mask, lp_r, tl, halo, w_pad):
    n = x_tiles[0].shape[0]
    n_tiles = lp_r // tl
    cout_p = weights[0].shape[1]
    n_in = len(x_tiles)

    in_specs = []
    for xt in x_tiles:
        ci, width = xt.shape[2], xt.shape[3]
        in_specs.append(pl.BlockSpec((None, None, ci, width), lambda t, b: (b, t, 0, 0)))
    for wt in weights:
        in_specs.append(pl.BlockSpec(wt.shape, lambda t, b: (0, 0, 0)))
    in_specs.append(pl.BlockSpec((1, tl), lambda t, b: (0, t)))

    out_shape = [
        jax.ShapeDtypeStruct((n, cout_p, lp_r), jnp.float32),       # pre-BN y
        jax.ShapeDtypeStruct((n_tiles, cout_p, 1), jnp.float32),    # per-tile sum
        jax.ShapeDtypeStruct((n_tiles, cout_p, 1), jnp.float32),    # per-tile sum of squares
    ]
    out_specs = [
        pl.BlockSpec((None, cout_p, tl), lambda t, b: (b, 0, t)),
        pl.BlockSpec((None, cout_p, 1), lambda t, b: (t, 0, 0)),
        pl.BlockSpec((None, cout_p, 1), lambda t, b: (t, 0, 0)),
    ]
    kern = functools.partial(_conv3x3_stats_kernel, n_in=n_in, w_pad=w_pad, halo=halo)
    return pl.pallas_call(
        kern,
        grid=(n_tiles, n),
        in_specs=in_specs,
        out_specs=out_specs,
        out_shape=out_shape,
        # row-tile axis parallel (megacore), batch axis arbitrary (stats accumulator).
        compiler_params=_compiler_params(("parallel", "arbitrary")),
    )(*x_tiles, *weights, mask)


def bn_relu(y, scale, shift, mask, tl, out_dtype):
    n, cout_p, lp_r = y.shape
    n_tiles = lp_r // tl
    return pl.pallas_call(
        _bn_relu_kernel,
        grid=(n_tiles, n),
        in_specs=[
            pl.BlockSpec((None, cout_p, tl), lambda t, b: (b, 0, t)),
            pl.BlockSpec((cout_p, 1), lambda t, b: (0, 0)),
            pl.BlockSpec((cout_p, 1), lambda t, b: (0, 0)),
            pl.BlockSpec((1, tl), lambda t, b: (0, t)),
        ],
        out_specs=pl.BlockSpec((None, cout_p, tl), lambda t, b: (b, 0, t)),
        out_shape=jax.ShapeDtypeStruct((n, cout_p, lp_r), out_dtype),
        compiler_params=_compiler_params(("parallel", "parallel")),
    )(y, scale, shift, mask)


def bn_relu_seg(y, scale, shift, mask, seg_w, seg_b, tl):
    n, cout_p, lp_r = y.shape
    n_tiles = lp_r // tl
    return pl.pallas_call(
        _bn_relu_seg_kernel,
        grid=(n_tiles, n),
        in_specs=[
            pl.BlockSpec((None, cout_p, tl), lambda t, b: (b, 0, t)),
            pl.BlockSpec((cout_p, 1), lambda t, b: (0, 0)),
            pl.BlockSpec((cout_p, 1), lambda t, b: (0, 0)),
            pl.BlockSpec((1, tl), lambda t, b: (0, t)),
            pl.BlockSpec((cout_p, 1), lambda t, b: (0, 0)),
            pl.BlockSpec((1, 1), lambda t, b: (0, 0)),
        ],
        out_specs=[
            pl.BlockSpec((None, cout_p, tl), lambda t, b: (b, 0, t)),
            pl.BlockSpec((None, 1, tl), lambda t, b: (b, 0, t)),
        ],
        out_shape=[
            jax.ShapeDtypeStruct((n, cout_p, lp_r), jnp.float32),
            jax.ShapeDtypeStruct((n, 1, lp_r), jnp.float32),
        ],
        compiler_params=_compiler_params(("parallel", "parallel")),
    )(y, scale, shift, mask, seg_w, seg_b)


def _bn_scale_shift(s1, s2, gamma, beta, count, eps):
    # Finalize the two-pass BatchNorm: biased batch variance, eps=1e-5, all in f32.
    s1 = jnp.sum(s1, axis=0)[:, 0]
    s2 = jnp.sum(s2, axis=0)[:, 0]
    mean = s1 / count
    var = jnp.maximum(s2 / count - mean * mean, 0.0)
    inv = jax.lax.rsqrt(var + eps)
    scale = gamma * inv
    shift = beta - mean * scale
    return scale.reshape(-1, 1), shift.reshape(-1, 1)


# ----------------------------------------------------------------------------
# One-time parameter preprocessing (hoisted out of the forward pass)
# ----------------------------------------------------------------------------
def prepare_params(params):
    """Reshuffle PyTorch-layout weights into channel-padded, bf16 matmul operands."""
    wt = params["up_w"]                      # (ch, ch, 2, 2)   ConvTranspose2d layout
    w1 = params["c1_w"]                      # (cout, ch + cl, 3, 3)
    w2 = params["c2_w"]                      # (cout, cout, 3, 3)
    ch = wt.shape[0]
    cout, cin1 = w1.shape[0], w1.shape[1]
    cl = cin1 - ch
    ch_p, cl_p, cout_p = _round_up(ch, 8), _round_up(cl, 8), _round_up(cout, 8)

    def pad2(a, r, c):
        return jnp.pad(a, ((0, r - a.shape[0]), (0, c - a.shape[1])))

    # ConvTranspose2d 2x2/s2 as one (4*ch_p, ch_p) matmul, row blocks ordered (di, dj).
    up_w = jnp.concatenate(
        [pad2(wt[:, :, a, b].T, ch_p, ch_p) for a in range(2) for b in range(2)], axis=0)
    up_b = jnp.tile(jnp.pad(params["up_b"], (0, ch_p - ch)), 4).reshape(4 * ch_p, 1)

    def taps(w, sl, cin_p):                  # (cout, cin_tot, 3, 3) -> (9, cout_p, cin_p)
        w = w[:, sl, :, :]
        return jnp.stack(
            [pad2(w[:, :, a, b], cout_p, cin_p) for a in range(3) for b in range(3)], axis=0)

    return {
        "up_w": up_w.astype(jnp.bfloat16),
        "up_b": up_b.astype(jnp.float32),
        "c1_w_up": taps(w1, slice(0, ch), ch_p).astype(jnp.bfloat16),
        "c1_w_low": taps(w1, slice(ch, ch + cl), cl_p).astype(jnp.bfloat16),
        "c2_w": taps(w2, slice(0, cout), cout_p).astype(jnp.bfloat16),
        "bn1_g": jnp.pad(params["bn1_g"], (0, cout_p - cout)).astype(jnp.float32),
        "bn1_b": jnp.pad(params["bn1_b"], (0, cout_p - cout)).astype(jnp.float32),
        "bn2_g": jnp.pad(params["bn2_g"], (0, cout_p - cout)).astype(jnp.float32),
        "bn2_b": jnp.pad(params["bn2_b"], (0, cout_p - cout)).astype(jnp.float32),
        "seg_w": jnp.pad(params["seg_w"].reshape(cout), (0, cout_p - cout))
                    .reshape(cout_p, 1).astype(jnp.float32),
        "seg_b": params["seg_b"].reshape(1, 1).astype(jnp.float32),
    }


# ----------------------------------------------------------------------------
# DecoderBlock forward
# ----------------------------------------------------------------------------
def decoder_block_forward(low_feat, high_feat, prep, *, out_channels,
                          tl=512, tu=512, eps=1e-5):
    assert tl % 128 == 0 and tu % 128 == 0
    n, ch, h, w = high_feat.shape
    _, cl, H, W = low_feat.shape
    assert H == 2 * h and W == 2 * w
    ch_p = prep["up_w"].shape[1]
    cl_p = prep["c1_w_low"].shape[2]
    cout_p = prep["c1_w_up"].shape[1]
    cout = out_channels

    w_pad = W + 2
    lp = (H + 2) * w_pad                       # padded-flat length
    halo = w_pad + 1                           # max |tap offset| of a 3x3 conv
    tl_eff = min(tl, _round_up(lp, 128))
    lp_r = _round_up(lp, tl_eff)
    n_tiles = lp_r // tl_eff

    # --- self.up: ConvTranspose2d(k=2, s=2) as a lane-dense Pallas matmul ---------------
    hw = h * w
    tu_eff = min(tu, _round_up(hw, 128))
    hw_r = _round_up(hw, tu_eff)
    hf = jnp.pad(high_feat, ((0, 0), (0, ch_p - ch), (0, 0), (0, 0))).reshape(n, ch_p, hw)
    hf = jnp.pad(hf, ((0, 0), (0, 0), (0, hw_r - hw))).astype(jnp.bfloat16)
    u4 = upsample_2x2(hf, prep["up_w"], prep["up_b"], tu_eff)          # (n, 4*ch_p, hw_r)
    # TODO(synk): this even/odd interleave of the (small) upsampled tensor is still an XLA
    # transpose; it could move in-kernel with strided pl.ds stores.
    u4 = u4[:, :, :hw].reshape(n, 2, 2, ch_p, h, w)
    up = jnp.transpose(u4, (0, 3, 4, 1, 5, 2)).reshape(n, ch_p, H, W)

    # --- channel-major padded-flat activations (concat is fused inside conv1) -----------
    def to_pad_flat(a):                        # (n, C, H, W) -> (n, C, (H+2)*(W+2))
        a = jnp.pad(a, ((0, 0), (0, 0), (1, 1), (1, 1)))
        return a.reshape(a.shape[0], a.shape[1], lp)

    up_pf = to_pad_flat(up)
    low_pf = to_pad_flat(
        jnp.pad(low_feat, ((0, 0), (0, cl_p - cl), (0, 0), (0, 0))).astype(jnp.bfloat16))

    # validity mask of true conv-output centres inside the padded-flat layout
    pidx = jnp.arange(lp_r)
    row, col = pidx // w_pad, pidx % w_pad
    mask = ((row >= 1) & (row <= H) & (col >= 1) & (col <= W))
    mask = mask.astype(jnp.float32).reshape(1, lp_r)
    count = jnp.float32(n * H * W)

    def halo_tiles(a_pf, length):              # (n, C, length) -> (n, n_tiles, C, TL+2*halo)
        a_h = jnp.pad(a_pf, ((0, 0), (0, 0), (halo, lp_r - length + halo)))
        return jnp.stack(
            [a_h[:, :, t * tl_eff: t * tl_eff + tl_eff + 2 * halo] for t in range(n_tiles)],
            axis=1)

    # --- decode[0]: Conv3x3(pad=1, no bias) + BN(batch stats) + ReLU ---------------------
    y1, s1a, s1b = conv3x3_pass_a(
        [halo_tiles(up_pf, lp), halo_tiles(low_pf, lp)],
        [prep["c1_w_up"], prep["c1_w_low"]], mask, lp_r, tl_eff, halo, w_pad)
    sc1, sh1 = _bn_scale_shift(s1a, s1b, prep["bn1_g"], prep["bn1_b"], count, eps)
    z1 = bn_relu(y1, sc1, sh1, mask, tl_eff, jnp.bfloat16)             # (n, cout_p, lp_r)

    # --- decode[1]: Conv3x3 + BN + ReLU, pass B fused with the 1x1 seg head --------------
    y2, s2a, s2b = conv3x3_pass_a(
        [halo_tiles(z1, lp_r)], [prep["c2_w"]], mask, lp_r, tl_eff, halo, w_pad)
    sc2, sh2 = _bn_scale_shift(s2a, s2b, prep["bn2_g"], prep["bn2_b"], count, eps)
    z2, pred = bn_relu_seg(y2, sc2, sh2, mask, prep["seg_w"], prep["seg_b"], tl_eff)

    # --- un-flatten back to NCHW ---------------------------------------------------------
    # TODO(synk): BatchNorm running_mean/running_var momentum updates are training-side
    # state mutation and are not modeled; normalization itself uses batch statistics.
    x_out = z2[:, :cout, :lp].reshape(n, cout, H + 2, w_pad)[:, :, 1:H + 1, 1:W + 1]
    pred = pred[:, :, :lp].reshape(n, 1, H + 2, w_pad)[:, :, 1:H + 1, 1:W + 1]
    return x_out, pred


# ----------------------------------------------------------------------------
# Deterministic parameter init (shapes from DecoderBlock.__init__) + f32 reference
# ----------------------------------------------------------------------------
def init_params(key, ch_high, ch_low, ch_out):
    cin = ch_high + ch_low
    ks = jax.random.split(key, 6)
    return {
        "up_w": 0.1 * jax.random.normal(ks[0], (ch_high, ch_high, 2, 2), jnp.float32),
        "up_b": 0.1 * jax.random.normal(ks[1], (ch_high,), jnp.float32),
        "c1_w": 0.1 * jax.random.normal(ks[2], (ch_out, cin, 3, 3), jnp.float32),
        "bn1_g": jnp.ones((ch_out,), jnp.float32),
        "bn1_b": jnp.zeros((ch_out,), jnp.float32),
        "c2_w": 0.1 * jax.random.normal(ks[3], (ch_out, ch_out, 3, 3), jnp.float32),
        "bn2_g": jnp.ones((ch_out,), jnp.float32),
        "bn2_b": jnp.zeros((ch_out,), jnp.float32),
        "seg_w": 0.1 * jax.random.normal(ks[4], (1, ch_out, 1, 1), jnp.float32),
        "seg_b": 0.1 * jax.random.normal(ks[5], (1,), jnp.float32),
    }


def _reference_forward(low_feat, high_feat, params, eps=1e-5):
    """Pure-JAX f32 reference of the PyTorch DecoderBlock forward (test only)."""
    n, ch, h, w = high_feat.shape
    H, W = 2 * h, 2 * w
    up = jnp.einsum("ncij,cdab->ndiajb", high_feat, params["up_w"]).reshape(n, ch, H, W)
    up = up + params["up_b"].reshape(1, ch, 1, 1)
    x = jnp.concatenate([up, low_feat], axis=1)

    def conv3(v, wgt):
        return jax.lax.conv_general_dilated(
            v, wgt, window_strides=(1, 1), padding=((1, 1), (1, 1)),
            dimension_numbers=("NCHW", "OIHW", "NCHW"))

    def bn_relu_ref(v, g, b):
        mean = jnp.mean(v, axis=(0, 2, 3), keepdims=True)
        var = jnp.mean(jnp.square(v - mean), axis=(0, 2, 3), keepdims=True)
        vh = (v - mean) * jax.lax.rsqrt(var + eps)
        return jnp.maximum(vh * g.reshape(1, -1, 1, 1) + b.reshape(1, -1, 1, 1), 0.0)

    x = bn_relu_ref(conv3(x, params["c1_w"]), params["bn1_g"], params["bn1_b"])
    x = bn_relu_ref(conv3(x, params["c2_w"]), params["bn2_g"], params["bn2_b"])
    pred = jax.lax.conv_general_dilated(
        x, params["seg_w"], window_strides=(1, 1), padding="VALID",
        dimension_numbers=("NCHW", "OIHW", "NCHW")) + params["seg_b"].reshape(1, 1, 1, 1)
    return x, pred


if __name__ == "__main__":
    key = jax.random.PRNGKey(0)
    k_p, k_hi, k_lo = jax.random.split(key, 3)

    N = 2
    ch_high, ch_low, ch_out = 8, 4, 8
    h = w = 8                       # high-res feature is (h, w); low feature is (2h, 2w)

    params = init_params(k_p, ch_high, ch_low, ch_out)
    high_feat = jax.random.normal(k_hi, (N, ch_high, h, w), jnp.float32)        # NCHW
    low_feat = jax.random.normal(k_lo, (N, ch_low, 2 * h, 2 * w), jnp.float32)  # NCHW

    prep = prepare_params(params)   # one-time weight reshuffle (hoisted out of forward)
    fwd = jax.jit(functools.partial(decoder_block_forward,
                                    out_channels=ch_out, tl=128, tu=128))
    x_out, pred = fwd(low_feat, high_feat, prep)
    jax.block_until_ready((x_out, pred))

    assert x_out.shape == (N, ch_out, 2 * h, 2 * w), x_out.shape
    assert pred.shape == (N, 1, 2 * h, 2 * w), pred.shape
    assert bool(jnp.all(jnp.isfinite(x_out))) and bool(jnp.all(jnp.isfinite(pred)))
    assert bool(jnp.all(x_out >= 0.0))  # ReLU output

    # bf16 MXU inputs => loose (but structure-catching) tolerance vs the f32 reference.
    x_ref, p_ref = _reference_forward(low_feat, high_feat, params)
    err_x = float(jnp.max(jnp.abs(x_out - x_ref)))
    err_p = float(jnp.max(jnp.abs(pred - p_ref)))
    assert err_x < 0.3 and err_p < 0.3, (err_x, err_p)

    print("KERNEL_OK")
</pallas_src>

<mosaic_0001>
module attributes {stable_mosaic.version = 11 : i64} {
  func.func @_upsample_kernel(%arg0: i32, %arg1: i32, %arg2: memref<1x8x128xbf16, #tpu.memory_space<vmem>>, %arg3: memref<32x8xbf16, #tpu.memory_space<vmem>>, %arg4: memref<32x1xf32, #tpu.memory_space<vmem>>, %arg5: memref<1x32x128xbf16, #tpu.memory_space<vmem>>) attributes {dimension_semantics = [#tpu.dimension_semantics<parallel>, #tpu.dimension_semantics<parallel>], iteration_bounds = array<i64: 1, 2>, scalar_prefetch = 0 : i64, scratch_operands = 0 : i64, tpu.core_type = #tpu.core_type<tc>, window_params = [{transform_indices = @transform_0, window_bounds = array<i64: 1, 8, 128>}, {pipeline_mode = #tpu.pipeline_mode<synchronous>, transform_indices = @transform_1, window_bounds = array<i64: 32, 8>}, {pipeline_mode = #tpu.pipeline_mode<synchronous>, transform_indices = @transform_2, window_bounds = array<i64: 32, 1>}, {transform_indices = @transform_3, window_bounds = array<i64: 1, 32, 128>}]} {
    %c0 = arith.constant 0 : index
    %c0_0 = arith.constant 0 : index
    %0 = vector.load %arg3[%c0, %c0_0] : memref<32x8xbf16, #tpu.memory_space<vmem>>, vector<32x8xbf16>
    %c0_1 = arith.constant 0 : index
    %c0_2 = arith.constant 0 : index
    %c0_3 = arith.constant 0 : index
    %1 = vector.load %arg2[%c0_1, %c0_2, %c0_3] : memref<1x8x128xbf16, #tpu.memory_space<vmem>>, vector<1x8x128xbf16>
    %2 = vector.shape_cast %1 : vector<1x8x128xbf16> to vector<8x128xbf16>
    %cst = arith.constant dense<0.000000e+00> : vector<32x128xf32>
    %3 = tpu.matmul %0, %2, %cst {dimension_numbers = #tpu.dot_dimension_numbers<[1], [0], [0], [1], [0, 0, 1, 1], [], []>} : vector<32x8xbf16>, vector<8x128xbf16>, vector<32x128xf32> -> vector<32x128xf32>
    %c0_4 = arith.constant 0 : index
    %c0_5 = arith.constant 0 : index
    %4 = vector.load %arg4[%c0_4, %c0_5] : memref<32x1xf32, #tpu.memory_space<vmem>>, vector<32x1xf32>
    %5 = vector.broadcast %4 : vector<32x1xf32> to vector<32x128xf32>
    %6 = arith.addf %3, %5 : vector<32x128xf32>
    %7 = arith.truncf %6 : vector<32x128xf32> to vector<32x128xbf16>
    %c0_6 = arith.constant 0 : index
    %c0_7 = arith.constant 0 : index
    %c0_8 = arith.constant 0 : index
    %8 = vector.load %arg5[%c0_6, %c0_7, %c0_8] : memref<1x32x128xbf16, #tpu.memory_space<vmem>>, vector<1x32x128xbf16>
    %9 = vector.shape_cast %8 : vector<1x32x128xbf16> to vector<32x128xbf16>
    %10 = vector.shape_cast %7 : vector<32x128xbf16> to vector<1x32x128xbf16>
    tpu.vector_store %arg5[%c0_6, %c0_7, %c0_8], %10 {strides = array<i32>} : memref<1x32x128xbf16, #tpu.memory_space<vmem>>, vector<1x32x128xbf16>,
    return
  }
  func.func @transform_0(%arg0: i32, %arg1: i32) -> (i32, i32, i32) {
    %c0_i32 = arith.constant 0 : i32
    %c0_i32_0 = arith.constant 0 : i32
    return %arg1, %c0_i32, %arg0 : i32, i32, i32
  }
  func.func @transform_1(%arg0: i32, %arg1: i32) -> (i32, i32) {
    %c0_i32 = arith.constant 0 : i32
    %c0_i32_0 = arith.constant 0 : i32
    %c0_i32_1 = arith.constant 0 : i32
    return %c0_i32, %c0_i32_0 : i32, i32
  }
  func.func @transform_2(%arg0: i32, %arg1: i32) -> (i32, i32) {
    %c0_i32 = arith.constant 0 : i32
    %c0_i32_0 = arith.constant 0 : i32
    %c0_i32_1 = arith.constant 0 : i32
    return %c0_i32, %c0_i32_0 : i32, i32
  }
  func.func @transform_3(%arg0: i32, %arg1: i32) -> (i32, i32, i32) {
    %c0_i32 = arith.constant 0 : i32
    %c0_i32_0 = arith.constant 0 : i32
    return %arg1, %c0_i32, %arg0 : i32, i32, i32
  }
}

module attributes {stable_mosaic.version = 11 : i64} {
  func.func @_bn_relu_kernel(%arg0: i32, %arg1: i32, %arg2: memref<1x8x128xf32, #tpu.memory_space<vmem>>, %arg3: memref<8x1xf32, #tpu.memory_space<vmem>>, %arg4: memref<8x1xf32, #tpu.memory_space<vmem>>, %arg5: memref<1x128xf32, #tpu.memory_space<vmem>>, %arg6: memref<1x8x128xbf16, #tpu.memory_space<vmem>>) attributes {dimension_semantics = [#tpu.dimension_semantics<parallel>, #tpu.dimension_semantics<parallel>], iteration_bounds = array<i64: 3, 2>, scalar_prefetch = 0 : i64, scratch_operands = 0 : i64, tpu.core_type = #tpu.core_type<tc>, window_params = [{transform_indices = @transform_0, window_bounds = array<i64: 1, 8, 128>}, {pipeline_mode = #tpu.pipeline_mode<synchronous>, transform_indices = @transform_1, window_bounds = array<i64: 8, 1>}, {pipeline_mode = #tpu.pipeline_mode<synchronous>, transform_indices = @transform_2, window_bounds = array<i64: 8, 1>}, {transform_indices = @transform_3, window_bounds = array<i64: 1, 128>}, {transform_indices = @transform_4, window_bounds = array<i64: 1, 8, 128>}]} {
    %c0 = arith.constant 0 : index
    %c0_0 = arith.constant 0 : index
    %c0_1 = arith.constant 0 : index
    %0 = vector.load %arg2[%c0, %c0_0, %c0_1] : memref<1x8x128xf32, #tpu.memory_space<vmem>>, vector<1x8x128xf32>
    %1 = vector.shape_cast %0 : vector<1x8x128xf32> to vector<8x128xf32>
    %c0_2 = arith.constant 0 : index
    %c0_3 = arith.constant 0 : index
    %2 = vector.load %arg3[%c0_2, %c0_3] : memref<8x1xf32, #tpu.memory_space<vmem>>, vector<8x1xf32>
    %3 = vector.broadcast %2 : vector<8x1xf32> to vector<8x128xf32>
    %4 = arith.mulf %1, %3 : vector<8x128xf32>
    %c0_4 = arith.constant 0 : index
    %c0_5 = arith.constant 0 : index
    %5 = vector.load %arg4[%c0_4, %c0_5] : memref<8x1xf32, #tpu.memory_space<vmem>>, vector<8x1xf32>
    %6 = vector.broadcast %5 : vector<8x1xf32> to vector<8x128xf32>
    %7 = arith.addf %4, %6 : vector<8x128xf32>
    %cst = arith.constant 0.000000e+00 : f32
    %8 = vector.broadcast %cst : f32 to vector<8x128xf32>
    %9 = arith.maximumf %7, %8 : vector<8x128xf32>
    %c0_6 = arith.constant 0 : index
    %c0_7 = arith.constant 0 : index
    %10 = vector.load %arg5[%c0_6, %c0_7] : memref<1x128xf32, #tpu.memory_space<vmem>>, vector<1x128xf32>
    %11 = vector.broadcast %10 : vector<1x128xf32> to vector<8x128xf32>
    %12 = arith.mulf %9, %11 : vector<8x128xf32>
    %13 = arith.truncf %12 : vector<8x128xf32> to vector<8x128xbf16>
    %c0_8 = arith.constant 0 : index
    %c0_9 = arith.constant 0 : index
    %c0_10 = arith.constant 0 : index
    %14 = vector.load %arg6[%c0_8, %c0_9, %c0_10] : memref<1x8x128xbf16, #tpu.memory_space<vmem>>, vector<1x8x128xbf16>
    %15 = vector.shape_cast %14 : vector<1x8x128xbf16> to vector<8x128xbf16>
    %16 = vector.shape_cast %13 : vector<8x128xbf16> to vector<1x8x128xbf16>
    tpu.vector_store %arg6[%c0_8, %c0_9, %c0_10], %16 {strides = array<i32>} : memref<1x8x128xbf16, #tpu.memory_space<vmem>>, vector<1x8x128xbf16>,
    return
  }
  func.func @transform_0(%arg0: i32, %arg1: i32) -> (i32, i32, i32) {
    %c0_i32 = arith.constant 0 : i32
    %c0_i32_0 = arith.constant 0 : i32
    return %arg1, %c0_i32, %arg0 : i32, i32, i32
  }
  func.func @transform_1(%arg0: i32, %arg1: i32) -> (i32, i32) {
    %c0_i32 = arith.constant 0 : i32
    %c0_i32_0 = arith.constant 0 : i32
    %c0_i32_1 = arith.constant 0 : i32
    return %c0_i32, %c0_i32_0 : i32, i32
  }
  func.func @transform_2(%arg0: i32, %arg1: i32) -> (i32, i32) {
    %c0_i32 = arith.constant 0 : i32
    %c0_i32_0 = arith.constant 0 : i32
    %c0_i32_1 = arith.constant 0 : i32
    return %c0_i32, %c0_i32_0 : i32, i32
  }
  func.func @transform_3(%arg0: i32, %arg1: i32) -> (i32, i32) {
    %c0_i32 = arith.constant 0 : i32
    %c0_i32_0 = arith.constant 0 : i32
    return %c0_i32, %arg0 : i32, i32
  }
  func.func @transform_4(%arg0: i32, %arg1: i32) -> (i32, i32, i32) {
    %c0_i32 = arith.constant 0 : i32
    %c0_i32_0 = arith.constant 0 : i32
    return %arg1, %c0_i32, %arg0 : i32, i32, i32
  }
}

module attributes {stable_mosaic.version = 11 : i64} {
  func.func @_conv3x3_stats_kernel(%arg0: i32, %arg1: i32, %arg2: memref<1x1x8x166xbf16, #tpu.memory_space<vmem>>, %arg3: memref<1x1x8x166xbf16, #tpu.memory_space<vmem>>, %arg4: memref<9x8x8xbf16, #tpu.memory_space<vmem>>, %arg5: memref<9x8x8xbf16, #tpu.memory_space<vmem>>, %arg6: memref<1x128xf32, #tpu.memory_space<vmem>>, %arg7: memref<1x8x128xf32, #tpu.memory_space<vmem>>, %arg8: memref<1x8x1xf32, #tpu.memory_space<vmem>>, %arg9: memref<1x8x1xf32, #tpu.memory_space<vmem>>) attributes {dimension_semantics = [#tpu.dimension_semantics<parallel>, #tpu.dimension_semantics<arbitrary>], iteration_bounds = array<i64: 3, 2>, scalar_prefetch = 0 : i64, scratch_operands = 0 : i64, tpu.core_type = #tpu.core_type<tc>, window_params = [{transform_indices = @transform_0, window_bounds = array<i64: 1, 1, 8, 166>}, {transform_indices = @transform_1, window_bounds = array<i64: 1, 1, 8, 166>}, {pipeline_mode = #tpu.pipeline_mode<synchronous>, transform_indices = @transform_2, window_bounds = array<i64: 9, 8, 8>}, {pipeline_mode = #tpu.pipeline_mode<synchronous>, transform_indices = @transform_3, window_bounds = array<i64: 9, 8, 8>}, {transform_indices = @transform_4, window_bounds = array<i64: 1, 128>}, {transform_indices = @transform_5, window_bounds = array<i64: 1, 8, 128>}, {transform_indices = @transform_6, window_bounds = array<i64: 1, 8, 1>}, {transform_indices = @transform_7, window_bounds = array<i64: 1, 8, 1>}]} {
    %cst = arith.constant 0.000000e+00 : f32
    %0 = vector.broadcast %cst : f32 to vector<8x128xf32>
    %c0 = arith.constant 0 : index
    %c0_0 = arith.constant 0 : index
    %c0_1 = arith.constant 0 : index
    %c0_2 = arith.constant 0 : index
    %1 = vector.load %arg2[%c0, %c0_0, %c0_1, %c0_2] : memref<1x1x8x166xbf16, #tpu.memory_space<vmem>>, vector<1x1x8x166xbf16>
    %2 = vector.shape_cast %1 : vector<1x1x8x166xbf16> to vector<8x166xbf16>
    %c0_3 = arith.constant 0 : index
    %c0_4 = arith.constant 0 : index
    %c0_5 = arith.constant 0 : index
    %3 = vector.load %arg4[%c0_3, %c0_4, %c0_5] : memref<9x8x8xbf16, #tpu.memory_space<vmem>>, vector<1x8x8xbf16>
    %4 = vector.shape_cast %3 : vector<1x8x8xbf16> to vector<8x8xbf16>
    %5 = vector.extract_strided_slice %2 {offsets = [0, 0], sizes = [8, 128], strides = [1, 1]} : vector<8x166xbf16> to vector<8x128xbf16>
    %cst_6 = arith.constant dense<0.000000e+00> : vector<8x128xf32>
    %6 = tpu.matmul %4, %5, %cst_6 {dimension_numbers = #tpu.dot_dimension_numbers<[1], [0], [0], [1], [0, 0, 1, 1], [], []>} : vector<8x8xbf16>, vector<8x128xbf16>, vector<8x128xf32> -> vector<8x128xf32>
    %7 = arith.addf %0, %6 : vector<8x128xf32>
    %c1 = arith.constant 1 : index
    %c0_7 = arith.constant 0 : index
    %c0_8 = arith.constant 0 : index
    %8 = vector.load %arg4[%c1, %c0_7, %c0_8] : memref<9x8x8xbf16, #tpu.memory_space<vmem>>, vector<1x8x8xbf16>
    %9 = vector.shape_cast %8 : vector<1x8x8xbf16> to vector<8x8xbf16>
    %10 = vector.extract_strided_slice %2 {offsets = [0, 1], sizes = [8, 128], strides = [1, 1]} : vector<8x166xbf16> to vector<8x128xbf16>
    %cst_9 = arith.constant dense<0.000000e+00> : vector<8x128xf32>
    %11 = tpu.matmul %9, %10, %cst_9 {dimension_numbers = #tpu.dot_dimension_numbers<[1], [0], [0], [1], [0, 0, 1, 1], [], []>} : vector<8x8xbf16>, vector<8x128xbf16>, vector<8x128xf32> -> vector<8x128xf32>
    %12 = arith.addf %7, %11 : vector<8x128xf32>
    %c2 = arith.constant 2 : index
    %c0_10 = arith.constant 0 : index
    %c0_11 = arith.constant 0 : index
    %13 = vector.load %arg4[%c2, %c0_10, %c0_11] : memref<9x8x8xbf16, #tpu.memory_space<vmem>>, vector<1x8x8xbf16>
    %14 = vector.shape_cast %13 : vector<1x8x8xbf16> to vector<8x8xbf16>
    %15 = vector.extract_strided_slice %2 {offsets = [0, 2], sizes = [8, 128], strides = [1, 1]} : vector<8x166xbf16> to vector<8x128xbf16>
    %cst_12 = arith.constant dense<0.000000e+00> : vector<8x128xf32>
    %16 = tpu.matmul %14, %15, %cst_12 {dimension_numbers = #tpu.dot_dimension_numbers<[1], [0], [0], [1], [0, 0, 1, 1], [], []>} : vector<8x8xbf16>, vector<8x128xbf16>, vector<8x128xf32> -> vector<8x128xf32>
    %17 = arith.addf %12, %16 : vector<8x128xf32>
    %c3 = arith.constant 3 : index
    %c0_13 = arith.constant 0 : index
    %c0_14 = arith.constant 0 : index
    %18 = vector.load %arg4[%c3, %c0_13, %c0_14] : memref<9x8x8xbf16, #tpu.memory_space<vmem>>, vector<1x8x8xbf16>
    %19 = vector.shape_cast %18 : vector<1x8x8xbf16> to vector<8x8xbf16>
    %20 = vector.extract_strided_slice %2 {offsets = [0, 18], sizes = [8, 128], strides = [1, 1]} : vector<8x166xbf16> to vector<8x128xbf16>
    %cst_15 = arith.constant dense<0.000000e+00> : vector<8x128xf32>
    %21 = tpu.matmul %19, %20, %cst_15 {dimension_numbers = #tpu.dot_dimension_numbers<[1], [0], [0], [1], [0, 0, 1, 1], [], []>} : vector<8x8xbf16>, vector<8x128xbf16>, vector<8x128xf32> -> vector<8x128xf32>
    %22 = arith.addf %17, %21 : vector<8x128xf32>
    %c4 = arith.constant 4 : index
    %c0_16 = arith.constant 0 : index
    %c0_17 = arith.constant 0 : index
    %23 = vector.load %arg4[%c4, %c0_16, %c0_17] : memref<9x8x8xbf16, #tpu.memory_space<vmem>>, vector<1x8x8xbf16>
    %24 = vector.shape_cast %23 : vector<1x8x8xbf16> to vector<8x8xbf16>
    %25 = vector.extract_strided_slice %2 {offsets = [0, 19], sizes = [8, 128], strides = [1, 1]} : vector<8x166xbf16> to vector<8x128xbf16>
    %cst_18 = arith.constant dense<0.000000e+00> : vector<8x128xf32>
    %26 = tpu.matmul %24, %25, %cst_18 {dimension_numbers = #tpu.dot_dimension_numbers<[1], [0], [0], [1], [0, 0, 1, 1], [], []>} : vector<8x8xbf16>, vector<8x128xbf16>, vector<8x128xf32> -> vector<8x128xf32>
    %27 = arith.addf %22, %26 : vector<8x128xf32>
    %c5 = arith.constant 5 : index
    %c0_19 = arith.constant 0 : index
    %c0_20 = arith.constant 0 : index
    %28 = vector.load %arg4[%c5, %c0_19, %c0_20] : memref<9x8x8xbf16, #tpu.memory_space<vmem>>, vector<1x8x8xbf16>
    %29 = vector.shape_cast %28 : vector<1x8x8xbf16> to vector<8x8xbf16>
    %30 = vector.extract_strided_slice %2 {offsets = [0, 20], sizes = [8, 128], strides = [1, 1]} : vector<8x166xbf16> to vector<8x128xbf16>
    %cst_21 = arith.constant dense<0.000000e+00> : vector<8x128xf32>
    %31 = tpu.matmul %29, %30, %cst_21 {dimension_numbers = #tpu.dot_dimension_numbers<[1], [0], [0], [1], [0, 0, 1, 1], [], []>} : vector<8x8xbf16>, vector<8x128xbf16>, vector<8x128xf32> -> vector<8x128xf32>
    %32 = arith.addf %27, %31 : vector<8x128xf32>
    %c6 = arith.constant 6 : index
    %c0_22 = arith.constant 0 : index
    %c0_23 = arith.constant 0 : index
    %33 = vector.load %arg4[%c6, %c0_22, %c0_23] : memref<9x8x8xbf16, #tpu.memory_space<vmem>>, vector<1x8x8xbf16>
    %34 = vector.shape_cast %33 : vector<1x8x8xbf16> to vector<8x8xbf16>
    %35 = vector.extract_strided_slice %2 {offsets = [0, 36], sizes = [8, 128], strides = [1, 1]} : vector<8x166xbf16> to vector<8x128xbf16>
    %cst_24 = arith.constant dense<0.000000e+00> : vector<8x128xf32>
    %36 = tpu.matmul %34, %35, %cst_24 {dimension_numbers = #tpu.dot_dimension_numbers<[1], [0], [0], [1], [0, 0, 1, 1], [], []>} : vector<8x8xbf16>, vector<8x128xbf16>, vector<8x128xf32> -> vector<8x128xf32>
    %37 = arith.addf %32, %36 : vector<8x128xf32>
    %c7 = arith.constant 7 : index
    %c0_25 = arith.constant 0 : index
    %c0_26 = arith.constant 0 : index
    %38 = vector.load %arg4[%c7, %c0_25, %c0_26] : memref<9x8x8xbf16, #tpu.memory_space<vmem>>, vector<1x8x8xbf16>
    %39 = vector.shape_cast %38 : vector<1x8x8xbf16> to vector<8x8xbf16>
    %40 = vector.extract_strided_slice %2 {offsets = [0, 37], sizes = [8, 128], strides = [1, 1]} : vector<8x166xbf16> to vector<8x128xbf16>
    %cst_27 = arith.constant dense<0.000000e+00> : vector<8x128xf32>
    %41 = tpu.matmul %39, %40, %cst_27 {dimension_numbers = #tpu.dot_dimension_numbers<[1], [0], [0], [1], [0, 0, 1, 1], [], []>} : vector<8x8xbf16>, vector<8x128xbf16>, vector<8x128xf32> -> vector<8x128xf32>
    %42 = arith.addf %37, %41 : vector<8x128xf32>
    %c8 = arith.constant 8 : index
    %c0_28 = arith.constant 0 : index
    %c0_29 = arith.constant 0 : index
    %43 = vector.load %arg4[%c8, %c0_28, %c0_29] : memref<9x8x8xbf16, #tpu.memory_space<vmem>>, vector<1x8x8xbf16>
    %44 = vector.shape_cast %43 : vector<1x8x8xbf16> to vector<8x8xbf16>
    %45 = vector.extract_strided_slice %2 {offsets = [0, 38], sizes = [8, 128], strides = [1, 1]} : vector<8x166xbf16> to vector<8x128xbf16>
    %cst_30 = arith.constant dense<0.000000e+00> : vector<8x128xf32>
    %46 = tpu.matmul %44, %45, %cst_30 {dimension_numbers = #tpu.dot_dimension_numbers<[1], [0], [0], [1], [0, 0, 1, 1], [], []>} : vector<8x8xbf16>, vector<8x128xbf16>, vector<8x128xf32> -> vector<8x128xf32>
    %47 = arith.addf %42, %46 : vector<8x128xf32>
    %c0_31 = arith.constant 0 : index
    %c0_32 = arith.constant 0 : index
    %c0_33 = arith.constant 0 : index
    %c0_34 = arith.constant 0 : index
    %48 = vector.load %arg3[%c0_31, %c0_32, %c0_33, %c0_34] : memref<1x1x8x166xbf16, #tpu.memory_space<vmem>>, vector<1x1x8x166xbf16>
    %49 = vector.shape_cast %48 : vector<1x1x8x166xbf16> to vector<8x166xbf16>
    %c0_35 = arith.constant 0 : index
    %c0_36 = arith.constant 0 : index
    %c0_37 = arith.constant 0 : index
    %50 = vector.load %arg5[%c0_35, %c0_36, %c0_37] : memref<9x8x8xbf16, #tpu.memory_space<vmem>>, vector<1x8x8xbf16>
    %51 = vector.shape_cast %50 : vector<1x8x8xbf16> to vector<8x8xbf16>
    %52 = vector.extract_strided_slice %49 {offsets = [0, 0], sizes = [8, 128], strides = [1, 1]} : vector<8x166xbf16> to vector<8x128xbf16>
    %cst_38 = arith.constant dense<0.000000e+00> : vector<8x128xf32>
    %53 = tpu.matmul %51, %52, %cst_38 {dimension_numbers = #tpu.dot_dimension_numbers<[1], [0], [0], [1], [0, 0, 1, 1], [], []>} : vector<8x8xbf16>, vector<8x128xbf16>, vector<8x128xf32> -> vector<8x128xf32>
    %54 = arith.addf %47, %53 : vector<8x128xf32>
    %c1_39 = arith.constant 1 : index
    %c0_40 = arith.constant 0 : index
    %c0_41 = arith.constant 0 : index
    %55 = vector.load %arg5[%c1_39, %c0_40, %c0_41] : memref<9x8x8xbf16, #tpu.memory_space<vmem>>, vector<1x8x8xbf16>
    %56 = vector.shape_cast %55 : vector<1x8x8xbf16> to vector<8x8xbf16>
    %57 = vector.extract_strided_slice %49 {offsets = [0, 1], sizes = [8, 128], strides = [1, 1]} : vector<8x166xbf16> to vector<8x128xbf16>
    %cst_42 = arith.constant dense<0.000000e+00> : vector<8x128xf32>
    %58 = tpu.matmul %56, %57, %cst_42 {dimension_numbers = #tpu.dot_dimension_numbers<[1], [0], [0], [1], [0, 0, 1, 1], [], []>} : vector<8x8xbf16>, vector<8x128xbf16>, vector<8x128xf32> -> vector<8x128xf32>
    %59 = arith.addf %54, %58 : vector<8x128xf32>
    %c2_43 = arith.constant 2 : index
    %c0_44 = arith.constant 0 : index
    %c0_45 = arith.constant 0 : index
    %60 = vector.load %arg5[%c2_43, %c0_44, %c0_45] : memref<9x8x8xbf16, #tpu.memory_space<vmem>>, vector<1x8x8xbf16>
    %61 = vector.shape_cast %60 : vector<1x8x8xbf16> to vector<8x8xbf16>
    %62 = vector.extract_strided_slice %49 {offsets = [0, 2], sizes = [8, 128], strides = [1, 1]} : vector<8x166xbf16> to vector<8x128xbf16>
    %cst_46 = arith.constant dense<0.000000e+00> : vector<8x128xf32>
    %63 = tpu.matmul %61, %62, %cst_46 {dimension_numbers = #tpu.dot_dimension_numbers<[1], [0], [0], [1], [0, 0, 1, 1], [], []>} : vector<8x8xbf16>, vector<8x128xbf16>, vector<8x128xf32> -> vector<8x128xf32>
    %64 = arith.addf %59, %63 : vector<8x128xf32>
    %c3_47 = arith.constant 3 : index
    %c0_48 = arith.constant 0 : index
    %c0_49 = arith.constant 0 : index
    %65 = vector.load %arg5[%c3_47, %c0_48, %c0_49] : memref<9x8x8xbf16, #tpu.memory_space<vmem>>, vector<1x8x8xbf16>
    %66 = vector.shape_cast %65 : vector<1x8x8xbf16> to vector<8x8xbf16>
    %67 = vector.extract_strided_slice %49 {offsets = [0, 18], sizes = [8, 128], strides = [1, 1]} : vector<8x166xbf16> to vector<8x128xbf16>
    %cst_50 = arith.constant dense<0.000000e+00> : vector<8x128xf32>
    %68 = tpu.matmul %66, %67, %cst_50 {dimension_numbers = #tpu.dot_dimension_numbers<[1], [0], [0], [1], [0, 0, 1, 1], [], []>} : vector<8x8xbf16>, vector<8x128xbf16>, vector<8x128xf32> -> vector<8x128xf32>
    %69 = arith.addf %64, %68 : vector<8x128xf32>
    %c4_51 = arith.constant 4 : index
    %c0_52 = arith.constant 0 : index
    %c0_53 = arith.constant 0 : index
    %70 = vector.load %arg5[%c4_51, %c0_52, %c0_53] : memref<9x8x8xbf16, #tpu.memory_space<vmem>>, vector<1x8x8xbf16>
    %71 = vector.shape_cast %70 : vector<1x8x8xbf16> to vector<8x8xbf16>
    %72 = vector.extract_strided_slice %49 {offsets = [0, 19], sizes = [8, 128], strides = [1, 1]} : vector<8x166xbf16> to vector<8x128xbf16>
    %cst_54 = arith.constant dense<0.000000e+00> : vector<8x128xf32>
    %73 = tpu.matmul %71, %72, %cst_54 {dimension_numbers = #tpu.dot_dimension_numbers<[1], [0], [0], [1], [0, 0, 1, 1], [], []>} : vector<8x8xbf16>, vector<8x128xbf16>, vector<8x128xf32> -> vector<8x128xf32>
    %74 = arith.addf %69, %73 : vector<8x128xf32>
    %c5_55 = arith.constant 5 : index
    %c0_56 = arith.constant 0 : index
    %c0_57 = arith.constant 0 : index
    %75 = vector.load %arg5[%c5_55, %c0_56, %c0_57] : memref<9x8x8xbf16, #tpu.memory_space<vmem>>, vector<1x8x8xbf16>
    %76 = vector.shape_cast %75 : vector<1x8x8xbf16> to vector<8x8xbf16>
    %77 = vector.extract_strided_slice %49 {offsets = [0, 20], sizes = [8, 128], strides = [1, 1]} : vector<8x166xbf16> to vector<8x128xbf16>
    %cst_58 = arith.constant dense<0.000000e+00> : vector<8x128xf32>
    %78 = tpu.matmul %76, %77, %cst_58 {dimension_numbers = #tpu.dot_dimension_numbers<[1], [0], [0], [1], [0, 0, 1, 1], [], []>} : vector<8x8xbf16>, vector<8x128xbf16>, vector<8x128xf32> -> vector<8x128xf32>
    %79 = arith.addf %74, %78 : vector<8x128xf32>
    %c6_59 = arith.constant 6 : index
    %c0_60 = arith.constant 0 : index
    %c0_61 = arith.constant 0 : index
    %80 = vector.load %arg5[%c6_59, %c0_60, %c0_61] : memref<9x8x8xbf16, #tpu.memory_space<vmem>>, vector<1x8x8xbf16>
    %81 = vector.shape_cast %80 : vector<1x8x8xbf16> to vector<8x8xbf16>
    %82 = vector.extract_strided_slice %49 {offsets = [0, 36], sizes = [8, 128], strides = [1, 1]} : vector<8x166xbf16> to vector<8x128xbf16>
    %cst_62 = arith.constant dense<0.000000e+00> : vector<8x128xf32>
    %83 = tpu.matmul %81, %82, %cst_62 {dimension_numbers = #tpu.dot_dimension_numbers<[1], [0], [0], [1], [0, 0, 1, 1], [], []>} : vector<8x8xbf16>, vector<8x128xbf16>, vector<8x128xf32> -> vector<8x128xf32>
    %84 = arith.addf %79, %83 : vector<8x128xf32>
    %c7_63 = arith.constant 7 : index
    %c0_64 = arith.constant 0 : index
    %c0_65 = arith.constant 0 : index
    %85 = vector.load %arg5[%c7_63, %c0_64, %c0_65] : memref<9x8x8xbf16, #tpu.memory_space<vmem>>, vector<1x8x8xbf16>
    %86 = vector.shape_cast %85 : vector<1x8x8xbf16> to vector<8x8xbf16>
    %87 = vector.extract_strided_slice %49 {offsets = [0, 37], sizes = [8, 128], strides = [1, 1]} : vector<8x166xbf16> to vector<8x128xbf16>
    %cst_66 = arith.constant dense<0.000000e+00> : vector<8x128xf32>
    %88 = tpu.matmul %86, %87, %cst_66 {dimension_numbers = #tpu.dot_dimension_numbers<[1], [0], [0], [1], [0, 0, 1, 1], [], []>} : vector<8x8xbf16>, vector<8x128xbf16>, vector<8x128xf32> -> vector<8x128xf32>
    %89 = arith.addf %84, %88 : vector<8x128xf32>
    %c8_67 = arith.constant 8 : index
    %c0_68 = arith.constant 0 : index
    %c0_69 = arith.constant 0 : index
    %90 = vector.load %arg5[%c8_67, %c0_68, %c0_69] : memref<9x8x8xbf16, #tpu.memory_space<vmem>>, vector<1x8x8xbf16>
    %91 = vector.shape_cast %90 : vector<1x8x8xbf16> to vector<8x8xbf16>
    %92 = vector.extract_strided_slice %49 {offsets = [0, 38], sizes = [8, 128], strides = [1, 1]} : vector<8x166xbf16> to vector<8x128xbf16>
    %cst_70 = arith.constant dense<0.000000e+00> : vector<8x128xf32>
    %93 = tpu.matmul %91, %92, %cst_70 {dimension_numbers = #tpu.dot_dimension_numbers<[1], [0], [0], [1], [0, 0, 1, 1], [], []>} : vector<8x8xbf16>, vector<8x128xbf16>, vector<8x128xf32> -> vector<8x128xf32>
    %94 = arith.addf %89, %93 : vector<8x128xf32>
    %c0_71 = arith.constant 0 : index
    %c0_72 = arith.constant 0 : index
    %c0_73 = arith.constant 0 : index
    %95 = vector.load %arg7[%c0_71, %c0_72, %c0_73] : memref<1x8x128xf32, #tpu.memory_space<vmem>>, vector<1x8x128xf32>
    %96 = vector.shape_cast %95 : vector<1x8x128xf32> to vector<8x128xf32>
    %97 = vector.shape_cast %94 : vector<8x128xf32> to vector<1x8x128xf32>
    tpu.vector_store %arg7[%c0_71, %c0_72, %c0_73], %97 {strides = array<i32>} : memref<1x8x128xf32, #tpu.memory_space<vmem>>, vector<1x8x128xf32>,
    %c0_74 = arith.constant 0 : index
    %c0_75 = arith.constant 0 : index
    %98 = vector.load %arg6[%c0_74, %c0_75] : memref<1x128xf32, #tpu.memory_space<vmem>>, vector<1x128xf32>
    %99 = vector.broadcast %98 : vector<1x128xf32> to vector<8x128xf32>
    %100 = arith.mulf %94, %99 : vector<8x128xf32>
    %c0_i32 = arith.constant 0 : i32
    %101 = arith.cmpi eq, %arg1, %c0_i32 : i32
    %102 = arith.extui %101 : i1 to i32
    %c0_i32_76 = arith.constant 0 : i32
    %103 = arith.cmpi ne, %102, %c0_i32_76 : i32
    scf.if %103 {
      %cst_91 = arith.constant 0.000000e+00 : f32
      %121 = vector.broadcast %cst_91 : f32 to vector<8x1xf32>
      %c0_92 = arith.constant 0 : index
      %c0_93 = arith.constant 0 : index
      %c0_94 = arith.constant 0 : index
      %122 = vector.load %arg8[%c0_92, %c0_93, %c0_94] : memref<1x8x1xf32, #tpu.memory_space<vmem>>, vector<1x8x1xf32>
      %123 = vector.shape_cast %122 : vector<1x8x1xf32> to vector<8x1xf32>
      %124 = vector.shape_cast %121 : vector<8x1xf32> to vector<1x8x1xf32>
      tpu.vector_store %arg8[%c0_92, %c0_93, %c0_94], %124 {strides = array<i32>} : memref<1x8x1xf32, #tpu.memory_space<vmem>>, vector<1x8x1xf32>,
      %cst_95 = arith.constant 0.000000e+00 : f32
      %125 = vector.broadcast %cst_95 : f32 to vector<8x1xf32>
      %c0_96 = arith.constant 0 : index
      %c0_97 = arith.constant 0 : index
      %c0_98 = arith.constant 0 : index
      %126 = vector.load %arg9[%c0_96, %c0_97, %c0_98] : memref<1x8x1xf32, #tpu.memory_space<vmem>>, vector<1x8x1xf32>
      %127 = vector.shape_cast %126 : vector<1x8x1xf32> to vector<8x1xf32>
      %128 = vector.shape_cast %125 : vector<8x1xf32> to vector<1x8x1xf32>
      tpu.vector_store %arg9[%c0_96, %c0_97, %c0_98], %128 {strides = array<i32>} : memref<1x8x1xf32, #tpu.memory_space<vmem>>, vector<1x8x1xf32>,
    } else {
    }
    %c0_77 = arith.constant 0 : index
    %c0_78 = arith.constant 0 : index
    %c0_79 = arith.constant 0 : index
    %104 = vector.load %arg8[%c0_77, %c0_78, %c0_79] : memref<1x8x1xf32, #tpu.memory_space<vmem>>, vector<1x8x1xf32>
    %105 = vector.shape_cast %104 : vector<1x8x1xf32> to vector<8x1xf32>
    %cst_80 = arith.constant dense<0.000000e+00> : vector<8xf32>
    %106 = vector.multi_reduction <add>, %100, %cst_80 [1] : vector<8x128xf32> to vector<8xf32>
    %107 = vector.shape_cast %106 : vector<8xf32> to vector<8x1xf32>
    %108 = arith.addf %105, %107 : vector<8x1xf32>
    %c0_81 = arith.constant 0 : index
    %c0_82 = arith.constant 0 : index
    %c0_83 = arith.constant 0 : index
    %109 = vector.load %arg8[%c0_81, %c0_82, %c0_83] : memref<1x8x1xf32, #tpu.memory_space<vmem>>, vector<1x8x1xf32>
    %110 = vector.shape_cast %109 : vector<1x8x1xf32> to vector<8x1xf32>
    %111 = vector.shape_cast %108 : vector<8x1xf32> to vector<1x8x1xf32>
    tpu.vector_store %arg8[%c0_81, %c0_82, %c0_83], %111 {strides = array<i32>} : memref<1x8x1xf32, #tpu.memory_space<vmem>>, vector<1x8x1xf32>,
    %c0_84 = arith.constant 0 : index
    %c0_85 = arith.constant 0 : index
    %c0_86 = arith.constant 0 : index
    %112 = vector.load %arg9[%c0_84, %c0_85, %c0_86] : memref<1x8x1xf32, #tpu.memory_space<vmem>>, vector<1x8x1xf32>
    %113 = vector.shape_cast %112 : vector<1x8x1xf32> to vector<8x1xf32>
    %114 = arith.mulf %100, %94 : vector<8x128xf32>
    %cst_87 = arith.constant dense<0.000000e+00> : vector<8xf32>
    %115 = vector.multi_reduction <add>, %114, %cst_87 [1] : vector<8x128xf32> to vector<8xf32>
    %116 = vector.shape_cast %115 : vector<8xf32> to vector<8x1xf32>
    %117 = arith.addf %113, %116 : vector<8x1xf32>
    %c0_88 = arith.constant 0 : index
    %c0_89 = arith.constant 0 : index
    %c0_90 = arith.constant 0 : index
    %118 = vector.load %arg9[%c0_88, %c0_89, %c0_90] : memref<1x8x1xf32, #tpu.memory_space<vmem>>, vector<1x8x1xf32>
    %119 = vector.shape_cast %118 : vector<1x8x1xf32> to vector<8x1xf32>
    %120 = vector.shape_cast %117 : vector<8x1xf32> to vector<1x8x1xf32>
    tpu.vector_store %arg9[%c0_88, %c0_89, %c0_90], %120 {strides = array<i32>} : memref<1x8x1xf32, #tpu.memory_space<vmem>>, vector<1x8x1xf32>,
    return
  }
  func.func @transform_0(%arg0: i32, %arg1: i32) -> (i32, i32, i32, i32) {
    %c0_i32 = arith.constant 0 : i32
    %c0_i32_0 = arith.constant 0 : i32
    %c0_i32_1 = arith.constant 0 : i32
    return %arg1, %arg0, %c0_i32, %c0_i32_0 : i32, i32, i32, i32
  }
  func.func @transform_1(%arg0: i32, %arg1: i32) -> (i32, i32, i32, i32) {
    %c0_i32 = arith.constant 0 : i32
    %c0_i32_0 = arith.constant 0 : i32
    %c0_i32_1 = arith.constant 0 : i32
    return %arg1, %arg0, %c0_i32, %c0_i32_0 : i32, i32, i32, i32
  }
  func.func @transform_2(%arg0: i32, %arg1: i32) -> (i32, i32, i32) {
    %c0_i32 = arith.constant 0 : i32
    %c0_i32_0 = arith.constant 0 : i32
    %c0_i32_1 = arith.constant 0 : i32
    %c0_i32_2 = arith.constant 0 : i32
    return %c0_i32, %c0_i32_0, %c0_i32_1 : i32, i32, i32
  }
  func.func @transform_3(%arg0: i32, %arg1: i32) -> (i32, i32, i32) {
    %c0_i32 = arith.constant 0 : i32
    %c0_i32_0 = arith.constant 0 : i32
    %c0_i32_1 = arith.constant 0 : i32
    %c0_i32_2 = arith.constant 0 : i32
    return %c0_i32, %c0_i32_0, %c0_i32_1 : i32, i32, i32
  }
  func.func @transform_4(%arg0: i32, %arg1: i32) -> (i32, i32) {
    %c0_i32 = arith.constant 0 : i32
    %c0_i32_0 = arith.constant 0 : i32
    return %c0_i32, %arg0 : i32, i32
  }
  func.func @transform_5(%arg0: i32, %arg1: i32) -> (i32, i32, i32) {
    %c0_i32 = arith.constant 0 : i32
    %c0_i32_0 = arith.constant 0 : i32
    return %arg1, %c0_i32, %arg0 : i32, i32, i32
  }
  func.func @transform_6(%arg0: i32, %arg1: i32) -> (i32, i32, i32) {
    %c0_i32 = arith.constant 0 : i32
    %c0_i32_0 = arith.constant 0 : i32
    %c0_i32_1 = arith.constant 0 : i32
    return %arg0, %c0_i32, %c0_i32_0 : i32, i32, i32
  }
  func.func @transform_7(%arg0: i32, %arg1: i32) -> (i32, i32, i32) {
    %c0_i32 = arith.constant 0 : i32
    %c0_i32_0 = arith.constant 0 : i32
    %c0_i32_1 = arith.constant 0 : i32
    return %arg0, %c0_i32, %c0_i32_0 : i32, i32, i32
  }
}

module attributes {stable_mosaic.version = 11 : i64} {
  func.func @_conv3x3_stats_kernel(%arg0: i32, %arg1: i32, %arg2: memref<1x1x8x166xbf16, #tpu.memory_space<vmem>>, %arg3: memref<9x8x8xbf16, #tpu.memory_space<vmem>>, %arg4: memref<1x128xf32, #tpu.memory_space<vmem>>, %arg5: memref<1x8x128xf32, #tpu.memory_space<vmem>>, %arg6: memref<1x8x1xf32, #tpu.memory_space<vmem>>, %arg7: memref<1x8x1xf32, #tpu.memory_space<vmem>>) attributes {dimension_semantics = [#tpu.dimension_semantics<parallel>, #tpu.dimension_semantics<arbitrary>], iteration_bounds = array<i64: 3, 2>, scalar_prefetch = 0 : i64, scratch_operands = 0 : i64, tpu.core_type = #tpu.core_type<tc>, window_params = [{transform_indices = @transform_0, window_bounds = array<i64: 1, 1, 8, 166>}, {pipeline_mode = #tpu.pipeline_mode<synchronous>, transform_indices = @transform_1, window_bounds = array<i64: 9, 8, 8>}, {transform_indices = @transform_2, window_bounds = array<i64: 1, 128>}, {transform_indices = @transform_3, window_bounds = array<i64: 1, 8, 128>}, {transform_indices = @transform_4, window_bounds = array<i64: 1, 8, 1>}, {transform_indices = @transform_5, window_bounds = array<i64: 1, 8, 1>}]} {
    %cst = arith.constant 0.000000e+00 : f32
    %0 = vector.broadcast %cst : f32 to vector<8x128xf32>
    %c0 = arith.constant 0 : index
    %c0_0 = arith.constant 0 : index
    %c0_1 = arith.constant 0 : index
    %c0_2 = arith.constant 0 : index
    %1 = vector.load %arg2[%c0, %c0_0, %c0_1, %c0_2] : memref<1x1x8x166xbf16, #tpu.memory_space<vmem>>, vector<1x1x8x166xbf16>
    %2 = vector.shape_cast %1 : vector<1x1x8x166xbf16> to vector<8x166xbf16>
    %c0_3 = arith.constant 0 : index
    %c0_4 = arith.constant 0 : index
    %c0_5 = arith.constant 0 : index
    %3 = vector.load %arg3[%c0_3, %c0_4, %c0_5] : memref<9x8x8xbf16, #tpu.memory_space<vmem>>, vector<1x8x8xbf16>
    %4 = vector.shape_cast %3 : vector<1x8x8xbf16> to vector<8x8xbf16>
    %5 = vector.extract_strided_slice %2 {offsets = [0, 0], sizes = [8, 128], strides = [1, 1]} : vector<8x166xbf16> to vector<8x128xbf16>
    %cst_6 = arith.constant dense<0.000000e+00> : vector<8x128xf32>
    %6 = tpu.matmul %4, %5, %cst_6 {dimension_numbers = #tpu.dot_dimension_numbers<[1], [0], [0], [1], [0, 0, 1, 1], [], []>} : vector<8x8xbf16>, vector<8x128xbf16>, vector<8x128xf32> -> vector<8x128xf32>
    %7 = arith.addf %0, %6 : vector<8x128xf32>
    %c1 = arith.constant 1 : index
    %c0_7 = arith.constant 0 : index
    %c0_8 = arith.constant 0 : index
    %8 = vector.load %arg3[%c1, %c0_7, %c0_8] : memref<9x8x8xbf16, #tpu.memory_space<vmem>>, vector<1x8x8xbf16>
    %9 = vector.shape_cast %8 : vector<1x8x8xbf16> to vector<8x8xbf16>
    %10 = vector.extract_strided_slice %2 {offsets = [0, 1], sizes = [8, 128], strides = [1, 1]} : vector<8x166xbf16> to vector<8x128xbf16>
    %cst_9 = arith.constant dense<0.000000e+00> : vector<8x128xf32>
    %11 = tpu.matmul %9, %10, %cst_9 {dimension_numbers = #tpu.dot_dimension_numbers<[1], [0], [0], [1], [0, 0, 1, 1], [], []>} : vector<8x8xbf16>, vector<8x128xbf16>, vector<8x128xf32> -> vector<8x128xf32>
    %12 = arith.addf %7, %11 : vector<8x128xf32>
    %c2 = arith.constant 2 : index
    %c0_10 = arith.constant 0 : index
    %c0_11 = arith.constant 0 : index
    %13 = vector.load %arg3[%c2, %c0_10, %c0_11] : memref<9x8x8xbf16, #tpu.memory_space<vmem>>, vector<1x8x8xbf16>
    %14 = vector.shape_cast %13 : vector<1x8x8xbf16> to vector<8x8xbf16>
    %15 = vector.extract_strided_slice %2 {offsets = [0, 2], sizes = [8, 128], strides = [1, 1]} : vector<8x166xbf16> to vector<8x128xbf16>
    %cst_12 = arith.constant dense<0.000000e+00> : vector<8x128xf32>
    %16 = tpu.matmul %14, %15, %cst_12 {dimension_numbers = #tpu.dot_dimension_numbers<[1], [0], [0], [1], [0, 0, 1, 1], [], []>} : vector<8x8xbf16>, vector<8x128xbf16>, vector<8x128xf32> -> vector<8x128xf32>
    %17 = arith.addf %12, %16 : vector<8x128xf32>
    %c3 = arith.constant 3 : index
    %c0_13 = arith.constant 0 : index
    %c0_14 = arith.constant 0 : index
    %18 = vector.load %arg3[%c3, %c0_13, %c0_14] : memref<9x8x8xbf16, #tpu.memory_space<vmem>>, vector<1x8x8xbf16>
    %19 = vector.shape_cast %18 : vector<1x8x8xbf16> to vector<8x8xbf16>
    %20 = vector.extract_strided_slice %2 {offsets = [0, 18], sizes = [8, 128], strides = [1, 1]} : vector<8x166xbf16> to vector<8x128xbf16>
    %cst_15 = arith.constant dense<0.000000e+00> : vector<8x128xf32>
    %21 = tpu.matmul %19, %20, %cst_15 {dimension_numbers = #tpu.dot_dimension_numbers<[1], [0], [0], [1], [0, 0, 1, 1], [], []>} : vector<8x8xbf16>, vector<8x128xbf16>, vector<8x128xf32> -> vector<8x128xf32>
    %22 = arith.addf %17, %21 : vector<8x128xf32>
    %c4 = arith.constant 4 : index
    %c0_16 = arith.constant 0 : index
    %c0_17 = arith.constant 0 : index
    %23 = vector.load %arg3[%c4, %c0_16, %c0_17] : memref<9x8x8xbf16, #tpu.memory_space<vmem>>, vector<1x8x8xbf16>
    %24 = vector.shape_cast %23 : vector<1x8x8xbf16> to vector<8x8xbf16>
    %25 = vector.extract_strided_slice %2 {offsets = [0, 19], sizes = [8, 128], strides = [1, 1]} : vector<8x166xbf16> to vector<8x128xbf16>
    %cst_18 = arith.constant dense<0.000000e+00> : vector<8x128xf32>
    %26 = tpu.matmul %24, %25, %cst_18 {dimension_numbers = #tpu.dot_dimension_numbers<[1], [0], [0], [1], [0, 0, 1, 1], [], []>} : vector<8x8xbf16>, vector<8x128xbf16>, vector<8x128xf32> -> vector<8x128xf32>
    %27 = arith.addf %22, %26 : vector<8x128xf32>
    %c5 = arith.constant 5 : index
    %c0_19 = arith.constant 0 : index
    %c0_20 = arith.constant 0 : index
    %28 = vector.load %arg3[%c5, %c0_19, %c0_20] : memref<9x8x8xbf16, #tpu.memory_space<vmem>>, vector<1x8x8xbf16>
    %29 = vector.shape_cast %28 : vector<1x8x8xbf16> to vector<8x8xbf16>
    %30 = vector.extract_strided_slice %2 {offsets = [0, 20], sizes = [8, 128], strides = [1, 1]} : vector<8x166xbf16> to vector<8x128xbf16>
    %cst_21 = arith.constant dense<0.000000e+00> : vector<8x128xf32>
    %31 = tpu.matmul %29, %30, %cst_21 {dimension_numbers = #tpu.dot_dimension_numbers<[1], [0], [0], [1], [0, 0, 1, 1], [], []>} : vector<8x8xbf16>, vector<8x128xbf16>, vector<8x128xf32> -> vector<8x128xf32>
    %32 = arith.addf %27, %31 : vector<8x128xf32>
    %c6 = arith.constant 6 : index
    %c0_22 = arith.constant 0 : index
    %c0_23 = arith.constant 0 : index
    %33 = vector.load %arg3[%c6, %c0_22, %c0_23] : memref<9x8x8xbf16, #tpu.memory_space<vmem>>, vector<1x8x8xbf16>
    %34 = vector.shape_cast %33 : vector<1x8x8xbf16> to vector<8x8xbf16>
    %35 = vector.extract_strided_slice %2 {offsets = [0, 36], sizes = [8, 128], strides = [1, 1]} : vector<8x166xbf16> to vector<8x128xbf16>
    %cst_24 = arith.constant dense<0.000000e+00> : vector<8x128xf32>
    %36 = tpu.matmul %34, %35, %cst_24 {dimension_numbers = #tpu.dot_dimension_numbers<[1], [0], [0], [1], [0, 0, 1, 1], [], []>} : vector<8x8xbf16>, vector<8x128xbf16>, vector<8x128xf32> -> vector<8x128xf32>
    %37 = arith.addf %32, %36 : vector<8x128xf32>
    %c7 = arith.constant 7 : index
    %c0_25 = arith.constant 0 : index
    %c0_26 = arith.constant 0 : index
    %38 = vector.load %arg3[%c7, %c0_25, %c0_26] : memref<9x8x8xbf16, #tpu.memory_space<vmem>>, vector<1x8x8xbf16>
    %39 = vector.shape_cast %38 : vector<1x8x8xbf16> to vector<8x8xbf16>
    %40 = vector.extract_strided_slice %2 {offsets = [0, 37], sizes = [8, 128], strides = [1, 1]} : vector<8x166xbf16> to vector<8x128xbf16>
    %cst_27 = arith.constant dense<0.000000e+00> : vector<8x128xf32>
    %41 = tpu.matmul %39, %40, %cst_27 {dimension_numbers = #tpu.dot_dimension_numbers<[1], [0], [0], [1], [0, 0, 1, 1], [], []>} : vector<8x8xbf16>, vector<8x128xbf16>, vector<8x128xf32> -> vector<8x128xf32>
    %42 = arith.addf %37, %41 : vector<8x128xf32>
    %c8 = arith.constant 8 : index
    %c0_28 = arith.constant 0 : index
    %c0_29 = arith.constant 0 : index
    %43 = vector.load %arg3[%c8, %c0_28, %c0_29] : memref<9x8x8xbf16, #tpu.memory_space<vmem>>, vector<1x8x8xbf16>
    %44 = vector.shape_cast %43 : vector<1x8x8xbf16> to vector<8x8xbf16>
    %45 = vector.extract_strided_slice %2 {offsets = [0, 38], sizes = [8, 128], strides = [1, 1]} : vector<8x166xbf16> to vector<8x128xbf16>
    %cst_30 = arith.constant dense<0.000000e+00> : vector<8x128xf32>
    %46 = tpu.matmul %44, %45, %cst_30 {dimension_numbers = #tpu.dot_dimension_numbers<[1], [0], [0], [1], [0, 0, 1, 1], [], []>} : vector<8x8xbf16>, vector<8x128xbf16>, vector<8x128xf32> -> vector<8x128xf32>
    %47 = arith.addf %42, %46 : vector<8x128xf32>
    %c0_31 = arith.constant 0 : index
    %c0_32 = arith.constant 0 : index
    %c0_33 = arith.constant 0 : index
    %48 = vector.load %arg5[%c0_31, %c0_32, %c0_33] : memref<1x8x128xf32, #tpu.memory_space<vmem>>, vector<1x8x128xf32>
    %49 = vector.shape_cast %48 : vector<1x8x128xf32> to vector<8x128xf32>
    %50 = vector.shape_cast %47 : vector<8x128xf32> to vector<1x8x128xf32>
    tpu.vector_store %arg5[%c0_31, %c0_32, %c0_33], %50 {strides = array<i32>} : memref<1x8x128xf32, #tpu.memory_space<vmem>>, vector<1x8x128xf32>,
    %c0_34 = arith.constant 0 : index
    %c0_35 = arith.constant 0 : index
    %51 = vector.load %arg4[%c0_34, %c0_35] : memref<1x128xf32, #tpu.memory_space<vmem>>, vector<1x128xf32>
    %52 = vector.broadcast %51 : vector<1x128xf32> to vector<8x128xf32>
    %53 = arith.mulf %47, %52 : vector<8x128xf32>
    %c0_i32 = arith.constant 0 : i32
    %54 = arith.cmpi eq, %arg1, %c0_i32 : i32
    %55 = arith.extui %54 : i1 to i32
    %c0_i32_36 = arith.constant 0 : i32
    %56 = arith.cmpi ne, %55, %c0_i32_36 : i32
    scf.if %56 {
      %cst_51 = arith.constant 0.000000e+00 : f32
      %74 = vector.broadcast %cst_51 : f32 to vector<8x1xf32>
      %c0_52 = arith.constant 0 : index
      %c0_53 = arith.constant 0 : index
      %c0_54 = arith.constant 0 : index
      %75 = vector.load %arg6[%c0_52, %c0_53, %c0_54] : memref<1x8x1xf32, #tpu.memory_space<vmem>>, vector<1x8x1xf32>
      %76 = vector.shape_cast %75 : vector<1x8x1xf32> to vector<8x1xf32>
      %77 = vector.shape_cast %74 : vector<8x1xf32> to vector<1x8x1xf32>
      tpu.vector_store %arg6[%c0_52, %c0_53, %c0_54], %77 {strides = array<i32>} : memref<1x8x1xf32, #tpu.memory_space<vmem>>, vector<1x8x1xf32>,
      %cst_55 = arith.constant 0.000000e+00 : f32
      %78 = vector.broadcast %cst_55 : f32 to vector<8x1xf32>
      %c0_56 = arith.constant 0 : index
      %c0_57 = arith.constant 0 : index
      %c0_58 = arith.constant 0 : index
      %79 = vector.load %arg7[%c0_56, %c0_57, %c0_58] : memref<1x8x1xf32, #tpu.memory_space<vmem>>, vector<1x8x1xf32>
      %80 = vector.shape_cast %79 : vector<1x8x1xf32> to vector<8x1xf32>
      %81 = vector.shape_cast %78 : vector<8x1xf32> to vector<1x8x1xf32>
      tpu.vector_store %arg7[%c0_56, %c0_57, %c0_58], %81 {strides = array<i32>} : memref<1x8x1xf32, #tpu.memory_space<vmem>>, vector<1x8x1xf32>,
    } else {
    }
    %c0_37 = arith.constant 0 : index
    %c0_38 = arith.constant 0 : index
    %c0_39 = arith.constant 0 : index
    %57 = vector.load %arg6[%c0_37, %c0_38, %c0_39] : memref<1x8x1xf32, #tpu.memory_space<vmem>>, vector<1x8x1xf32>
    %58 = vector.shape_cast %57 : vector<1x8x1xf32> to vector<8x1xf32>
    %cst_40 = arith.constant dense<0.000000e+00> : vector<8xf32>
    %59 = vector.multi_reduction <add>, %53, %cst_40 [1] : vector<8x128xf32> to vector<8xf32>
    %60 = vector.shape_cast %59 : vector<8xf32> to vector<8x1xf32>
    %61 = arith.addf %58, %60 : vector<8x1xf32>
    %c0_41 = arith.constant 0 : index
    %c0_42 = arith.constant 0 : index
    %c0_43 = arith.constant 0 : index
    %62 = vector.load %arg6[%c0_41, %c0_42, %c0_43] : memref<1x8x1xf32, #tpu.memory_space<vmem>>, vector<1x8x1xf32>
    %63 = vector.shape_cast %62 : vector<1x8x1xf32> to vector<8x1xf32>
    %64 = vector.shape_cast %61 : vector<8x1xf32> to vector<1x8x1xf32>
    tpu.vector_store %arg6[%c0_41, %c0_42, %c0_43], %64 {strides = array<i32>} : memref<1x8x1xf32, #tpu.memory_space<vmem>>, vector<1x8x1xf32>,
    %c0_44 = arith.constant 0 : index
    %c0_45 = arith.constant 0 : index
    %c0_46 = arith.constant 0 : index
    %65 = vector.load %arg7[%c0_44, %c0_45, %c0_46] : memref<1x8x1xf32, #tpu.memory_space<vmem>>, vector<1x8x1xf32>
    %66 = vector.shape_cast %65 : vector<1x8x1xf32> to vector<8x1xf32>
    %67 = arith.mulf %53, %47 : vector<8x128xf32>
    %cst_47 = arith.constant dense<0.000000e+00> : vector<8xf32>
    %68 = vector.multi_reduction <add>, %67, %cst_47 [1] : vector<8x128xf32> to vector<8xf32>
    %69 = vector.shape_cast %68 : vector<8xf32> to vector<8x1xf32>
    %70 = arith.addf %66, %69 : vector<8x1xf32>
    %c0_48 = arith.constant 0 : index
    %c0_49 = arith.constant 0 : index
    %c0_50 = arith.constant 0 : index
    %71 = vector.load %arg7[%c0_48, %c0_49, %c0_50] : memref<1x8x1xf32, #tpu.memory_space<vmem>>, vector<1x8x1xf32>
    %72 = vector.shape_cast %71 : vector<1x8x1xf32> to vector<8x1xf32>
    %73 = vector.shape_cast %70 : vector<8x1xf32> to vector<1x8x1xf32>
    tpu.vector_store %arg7[%c0_48, %c0_49, %c0_50], %73 {strides = array<i32>} : memref<1x8x1xf32, #tpu.memory_space<vmem>>, vector<1x8x1xf32>,
    return
  }
  func.func @transform_0(%arg0: i32, %arg1: i32) -> (i32, i32, i32, i32) {
    %c0_i32 = arith.constant 0 : i32
    %c0_i32_0 = arith.constant 0 : i32
    %c0_i32_1 = arith.constant 0 : i32
    return %arg1, %arg0, %c0_i32, %c0_i32_0 : i32, i32, i32, i32
  }
  func.func @transform_1(%arg0: i32, %arg1: i32) -> (i32, i32, i32) {
    %c0_i32 = arith.constant 0 : i32
    %c0_i32_0 = arith.constant 0 : i32
    %c0_i32_1 = arith.constant 0 : i32
    %c0_i32_2 = arith.constant 0 : i32
    return %c0_i32, %c0_i32_0, %c0_i32_1 : i32, i32, i32
  }
  func.func @transform_2(%arg0: i32, %arg1: i32) -> (i32, i32) {
    %c0_i32 = arith.constant 0 : i32
    %c0_i32_0 = arith.constant 0 : i32
    return %c0_i32, %arg0 : i32, i32
  }
  func.func @transform_3(%arg0: i32, %arg1: i32) -> (i32, i32, i32) {
    %c0_i32 = arith.constant 0 : i32
    %c0_i32_0 = arith.constant 0 : i32
    return %arg1, %c0_i32, %arg0 : i32, i32, i32
  }
  func.func @transform_4(%arg0: i32, %arg1: i32) -> (i32, i32, i32) {
    %c0_i32 = arith.constant 0 : i32
    %c0_i32_0 = arith.constant 0 : i32
    %c0_i32_1 = arith.constant 0 : i32
    return %arg0, %c0_i32, %c0_i32_0 : i32, i32, i32
  }
  func.func @transform_5(%arg0: i32, %arg1: i32) -> (i32, i32, i32) {
    %c0_i32 = arith.constant 0 : i32
    %c0_i32_0 = arith.constant 0 : i32
    %c0_i32_1 = arith.constant 0 : i32
    return %arg0, %c0_i32, %c0_i32_0 : i32, i32, i32
  }
}

module attributes {stable_mosaic.version = 11 : i64} {
  func.func @_bn_relu_seg_kernel(%arg0: i32, %arg1: i32, %arg2: memref<1x8x128xf32, #tpu.memory_space<vmem>>, %arg3: memref<8x1xf32, #tpu.memory_space<vmem>>, %arg4: memref<8x1xf32, #tpu.memory_space<vmem>>, %arg5: memref<1x128xf32, #tpu.memory_space<vmem>>, %arg6: memref<8x1xf32, #tpu.memory_space<vmem>>, %arg7: memref<1x1xf32, #tpu.memory_space<vmem>>, %arg8: memref<1x8x128xf32, #tpu.memory_space<vmem>>, %arg9: memref<1x1x128xf32, #tpu.memory_space<vmem>>) attributes {dimension_semantics = [#tpu.dimension_semantics<parallel>, #tpu.dimension_semantics<parallel>], iteration_bounds = array<i64: 3, 2>, scalar_prefetch = 0 : i64, scratch_operands = 0 : i64, tpu.core_type = #tpu.core_type<tc>, window_params = [{transform_indices = @transform_0, window_bounds = array<i64: 1, 8, 128>}, {pipeline_mode = #tpu.pipeline_mode<synchronous>, transform_indices = @transform_1, window_bounds = array<i64: 8, 1>}, {pipeline_mode = #tpu.pipeline_mode<synchronous>, transform_indices = @transform_2, window_bounds = array<i64: 8, 1>}, {transform_indices = @transform_3, window_bounds = array<i64: 1, 128>}, {pipeline_mode = #tpu.pipeline_mode<synchronous>, transform_indices = @transform_4, window_bounds = array<i64: 8, 1>}, {pipeline_mode = #tpu.pipeline_mode<synchronous>, transform_indices = @transform_5, window_bounds = array<i64: 1, 1>}, {transform_indices = @transform_6, window_bounds = array<i64: 1, 8, 128>}, {transform_indices = @transform_7, window_bounds = array<i64: 1, 1, 128>}]} {
    %c0 = arith.constant 0 : index
    %c0_0 = arith.constant 0 : index
    %c0_1 = arith.constant 0 : index
    %0 = vector.load %arg2[%c0, %c0_0, %c0_1] : memref<1x8x128xf32, #tpu.memory_space<vmem>>, vector<1x8x128xf32>
    %1 = vector.shape_cast %0 : vector<1x8x128xf32> to vector<8x128xf32>
    %c0_2 = arith.constant 0 : index
    %c0_3 = arith.constant 0 : index
    %2 = vector.load %arg3[%c0_2, %c0_3] : memref<8x1xf32, #tpu.memory_space<vmem>>, vector<8x1xf32>
    %3 = vector.broadcast %2 : vector<8x1xf32> to vector<8x128xf32>
    %4 = arith.mulf %1, %3 : vector<8x128xf32>
    %c0_4 = arith.constant 0 : index
    %c0_5 = arith.constant 0 : index
    %5 = vector.load %arg4[%c0_4, %c0_5] : memref<8x1xf32, #tpu.memory_space<vmem>>, vector<8x1xf32>
    %6 = vector.broadcast %5 : vector<8x1xf32> to vector<8x128xf32>
    %7 = arith.addf %4, %6 : vector<8x128xf32>
    %cst = arith.constant 0.000000e+00 : f32
    %8 = vector.broadcast %cst : f32 to vector<8x128xf32>
    %9 = arith.maximumf %7, %8 : vector<8x128xf32>
    %c0_6 = arith.constant 0 : index
    %c0_7 = arith.constant 0 : index
    %10 = vector.load %arg5[%c0_6, %c0_7] : memref<1x128xf32, #tpu.memory_space<vmem>>, vector<1x128xf32>
    %11 = vector.broadcast %10 : vector<1x128xf32> to vector<8x128xf32>
    %12 = arith.mulf %9, %11 : vector<8x128xf32>
    %c0_8 = arith.constant 0 : index
    %c0_9 = arith.constant 0 : index
    %c0_10 = arith.constant 0 : index
    %13 = vector.load %arg8[%c0_8, %c0_9, %c0_10] : memref<1x8x128xf32, #tpu.memory_space<vmem>>, vector<1x8x128xf32>
    %14 = vector.shape_cast %13 : vector<1x8x128xf32> to vector<8x128xf32>
    %15 = vector.shape_cast %12 : vector<8x128xf32> to vector<1x8x128xf32>
    tpu.vector_store %arg8[%c0_8, %c0_9, %c0_10], %15 {strides = array<i32>} : memref<1x8x128xf32, #tpu.memory_space<vmem>>, vector<1x8x128xf32>,
    %c0_11 = arith.constant 0 : index
    %c0_12 = arith.constant 0 : index
    %16 = vector.load %arg6[%c0_11, %c0_12] : memref<8x1xf32, #tpu.memory_space<vmem>>, vector<8x1xf32>
    %17 = vector.broadcast %16 : vector<8x1xf32> to vector<8x128xf32>
    %18 = arith.mulf %12, %17 : vector<8x128xf32>
    %cst_13 = arith.constant dense<0.000000e+00> : vector<128xf32>
    %19 = vector.multi_reduction <add>, %18, %cst_13 [0] : vector<8x128xf32> to vector<128xf32>
    %20 = vector.shape_cast %19 : vector<128xf32> to vector<1x128xf32>
    %c0_14 = arith.constant 0 : index
    %c0_15 = arith.constant 0 : index
    %21 = vector.load %arg7[%c0_14, %c0_15] : memref<1x1xf32, #tpu.memory_space<vmem>>, vector<1x1xf32>
    %22 = vector.broadcast %21 : vector<1x1xf32> to vector<1x128xf32>
    %23 = arith.addf %20, %22 : vector<1x128xf32>
    %c0_16 = arith.constant 0 : index
    %c0_17 = arith.constant 0 : index
    %c0_18 = arith.constant 0 : index
    %24 = vector.load %arg9[%c0_16, %c0_17, %c0_18] : memref<1x1x128xf32, #tpu.memory_space<vmem>>, vector<1x1x128xf32>
    %25 = vector.shape_cast %24 : vector<1x1x128xf32> to vector<1x128xf32>
    %26 = vector.shape_cast %23 : vector<1x128xf32> to vector<1x1x128xf32>
    tpu.vector_store %arg9[%c0_16, %c0_17, %c0_18], %26 {strides = array<i32>} : memref<1x1x128xf32, #tpu.memory_space<vmem>>, vector<1x1x128xf32>,
    return
  }
  func.func @transform_0(%arg0: i32, %arg1: i32) -> (i32, i32, i32) {
    %c0_i32 = arith.constant 0 : i32
    %c0_i32_0 = arith.constant 0 : i32
    return %arg1, %c0_i32, %arg0 : i32, i32, i32
  }
  func.func @transform_1(%arg0: i32, %arg1: i32) -> (i32, i32) {
    %c0_i32 = arith.constant 0 : i32
    %c0_i32_0 = arith.constant 0 : i32
    %c0_i32_1 = arith.constant 0 : i32
    return %c0_i32, %c0_i32_0 : i32, i32
  }
  func.func @transform_2(%arg0: i32, %arg1: i32) -> (i32, i32) {
    %c0_i32 = arith.constant 0 : i32
    %c0_i32_0 = arith.constant 0 : i32
    %c0_i32_1 = arith.constant 0 : i32
    return %c0_i32, %c0_i32_0 : i32, i32
  }
  func.func @transform_3(%arg0: i32, %arg1: i32) -> (i32, i32) {
    %c0_i32 = arith.constant 0 : i32
    %c0_i32_0 = arith.constant 0 : i32
    return %c0_i32, %arg0 : i32, i32
  }
  func.func @transform_4(%arg0: i32, %arg1: i32) -> (i32, i32) {
    %c0_i32 = arith.constant 0 : i32
    %c0_i32_0 = arith.constant 0 : i32
    %c0_i32_1 = arith.constant 0 : i32
    return %c0_i32, %c0_i32_0 : i32, i32
  }
  func.func @transform_5(%arg0: i32, %arg1: i32) -> (i32, i32) {
    %c0_i32 = arith.constant 0 : i32
    %c0_i32_0 = arith.constant 0 : i32
    %c0_i32_1 = arith.constant 0 : i32
    return %c0_i32, %c0_i32_0 : i32, i32
  }
  func.func @transform_6(%arg0: i32, %arg1: i32) -> (i32, i32, i32) {
    %c0_i32 = arith.constant 0 : i32
    %c0_i32_0 = arith.constant 0 : i32
    return %arg1, %c0_i32, %arg0 : i32, i32, i32
  }
  func.func @transform_7(%arg0: i32, %arg1: i32) -> (i32, i32, i32) {
    %c0_i32 = arith.constant 0 : i32
    %c0_i32_0 = arith.constant 0 : i32
    return %arg1, %c0_i32, %arg0 : i32, i32, i32
  }
}

</mosaic_0001>

<llo_original>
// kernel: decoder_block_forward.5
$region0: #{decoder_block_forward.5}
  #allocation0 [shape = 'u32[]', space=smem, size = 0x4, offset = 0x4, fixed_abs, tag = 'smem constant byte address 0x4 - core index']
  #allocation1 [shape = 'u32[144,128]{1,0:T(1,128)}', space=vmem, size = 0x12000, scoped, tag = 'internal scratch']
  %s0 = inlined_call_operand.vmem [shape: bf16[2,8,128], index: 0, kind: input, shape index: {}]
  %s1 = inlined_call_operand.vmem [shape: bf16[32,8], index: 1, kind: input, shape index: {}]
  %s2 = inlined_call_operand.vmem [shape: f32[32,1], index: 2, kind: input, shape index: {}]
  %s3 = inlined_call_operand.vmem [shape: bf16[2,32,128], index: 3, kind: output, shape index: {}]
  %s4 = sld [smem:[#allocation0]]
  $region45: #{decoder_block_forward.5} parent=0
    _
  %s6 = ssub.s32 1, %s4
  %s7 = scalar_select 0, %s6, %s4
  loop: start=0, step=1, limit=4
  $region2: #{decoder_block_forward.5} parent=0 // loop_pre_header
    _
  $region3: #{decoder_block_forward.5} parent=0 // loop_header
    %s9 = sphi 0, %s13
    %p10 = scmp.ge.s32.totalorder %s9, 4
    %s16 = sphi 0, %s28
    %s17 = sphi 0, %s24
    %s18 = sphi 0, %s16
    %s19 = sphi 0, %s17
    %s20 = sphi 0, %s18
    %s21 = sphi 0, %s19
    %s33 = sphi 0, %s35
    %s36 = sphi 0, %s33
    %s37 = sphi 0, %s36
    %s53 = sphi 0, %s37
    %s57 = sphi 0, %s57
    %s59 = sphi 0, %s57
    %s60 = sphi 0, %s59
    %s74 = sphi 0, %s60
    %s78 = sphi 0, %s78
    %s80 = sphi 0, %s78
    %s81 = sphi 0, %s80
    %s95 = sphi 0, %s81
    %s103 = sphi 0, %s105
    %s106 = sphi 0, %s103
    %s107 = sphi 0, %s106
    %s123 = sphi 0, %s107
  $region4: #{decoder_block_forward.5} parent=0 // loop_header_branch
    %12 = sbr.rel (%p10) target = $region8
  $region5: #{decoder_block_forward.5} parent=0 // loop_body
    %s14 = ssub.s32 %s9, 1
    %s15 = ssub.s32 %s9, 2
    %s22 = sadd.s32 1, %s17
    %p23 = scmp.ge.s32.totalorder %s22, 2
    %s24 = scalar_select %p23, 0, %s22
    %s25 = sadd.s32 1, %s16
    %s26 = scalar_select %p23, %s25, %s16
    %p27 = scmp.ge.s32.totalorder %s26, 1
    %s28 = scalar_select %p27, 0, %s26
    %s29 = ssub.s32 %s17, %s24
    %s30 = ssub.s32 %s16, %s28
    %s31 = sor.u32 %s29, %s30
    %p32 = scmp.eq.s32.totalorder %s31, 0
    %s34 = sadd.s32 %s33, 1
    %s35 = scalar_select %p32, %s33, %s34
    %p38 = pneg %p32
    %p39 = scmp.eq.s32.totalorder %s9, 1
    %p40 = por %p38, %p39
    %p41 = scmp.ne.s32.totalorder %s33, %s36
    %p42 = scmp.eq.s32.totalorder %s9, 0
    %p43 = por %p41, %p42
    %p44 = scmp.ne.s32.totalorder %s33, %s36
    %p45 = scmp.eq.s32.totalorder %s14, 1
    %p46 = por %p44, %p45
    %p47 = scmp.ne.s32.totalorder %s36, %s37
    %p48 = scmp.eq.s32.totalorder %s14, 0
    %p49 = por %p47, %p48
    %p50 = scmp.ne.s32.totalorder %s36, %s37
    %p51 = scmp.eq.s32.totalorder %s15, 1
    %p52 = por %p50, %p51
    %p54 = scmp.ne.s32.totalorder %s37, %s53
    %p55 = scmp.eq.s32.totalorder %s15, 0
    %p56 = por %p54, %p55
    %s58 = sadd.s32 %s57, 1
    %p61 = scmp.eq.s32.totalorder %s9, 1
    %p62 = scmp.ne.s32.totalorder %s57, %s59
    %p63 = scmp.eq.s32.totalorder %s9, 0
    %p64 = por %p62, %p63
    %p65 = scmp.ne.s32.totalorder %s57, %s59
    %p66 = scmp.eq.s32.totalorder %s14, 1
    %p67 = por %p65, %p66
    %p68 = scmp.ne.s32.totalorder %s59, %s60
    %p69 = scmp.eq.s32.totalorder %s14, 0
    %p70 = por %p68, %p69
    %p71 = scmp.ne.s32.totalorder %s59, %s60
    %p72 = scmp.eq.s32.totalorder %s15, 1
    %p73 = por %p71, %p72
    %p75 = scmp.ne.s32.totalorder %s60, %s74
    %p76 = scmp.eq.s32.totalorder %s15, 0
    %p77 = por %p75, %p76
    %s79 = sadd.s32 %s78, 1
    %p82 = scmp.eq.s32.totalorder %s9, 1
    %p83 = scmp.ne.s32.totalorder %s78, %s80
    %p84 = scmp.eq.s32.totalorder %s9, 0
    %p85 = por %p83, %p84
    %p86 = scmp.ne.s32.totalorder %s78, %s80
    %p87 = scmp.eq.s32.totalorder %s14, 1
    %p88 = por %p86, %p87
    %p89 = scmp.ne.s32.totalorder %s80, %s81
    %p90 = scmp.eq.s32.totalorder %s14, 0
    %p91 = por %p89, %p90
    %p92 = scmp.ne.s32.totalorder %s80, %s81
    %p93 = scmp.eq.s32.totalorder %s15, 1
    %p94 = por %p92, %p93
    %p96 = scmp.ne.s32.totalorder %s81, %s95
    %p97 = scmp.eq.s32.totalorder %s15, 0
    %p98 = por %p96, %p97
    %s99 = ssub.s32 %s17, %s24
    %s100 = ssub.s32 %s16, %s28
    %s101 = sor.u32 %s99, %s100
    %p102 = scmp.eq.s32.totalorder %s101, 0
    %s104 = sadd.s32 %s103, 1
    %s105 = scalar_select %p102, %s103, %s104
    %p108 = pneg %p102
    %p109 = scmp.eq.s32.totalorder %s9, 1
    %p110 = por %p108, %p109
    %p111 = scmp.ne.s32.totalorder %s103, %s106
    %p112 = scmp.eq.s32.totalorder %s9, 0
    %p113 = por %p111, %p112
    %p114 = scmp.ne.s32.totalorder %s103, %s106
    %p115 = scmp.eq.s32.totalorder %s14, 1
    %p116 = por %p114, %p115
    %p117 = scmp.ne.s32.totalorder %s106, %s107
    %p118 = scmp.eq.s32.totalorder %s14, 0
    %p119 = por %p117, %p118
    %p120 = scmp.ne.s32.totalorder %s106, %s107
    %p121 = scmp.eq.s32.totalorder %s15, 1
    %p122 = por %p120, %p121
    %p124 = scmp.ne.s32.totalorder %s107, %s123
    %p125 = scmp.eq.s32.totalorder %s15, 0
    %p126 = por %p124, %p125
    %p127 = scmp.le.s32.totalorder 1, %s9
    %p128 = scmp.lt.s32.totalorder %s9, 3
    %p129 = pnand %p127, %p128
    %p130 = pneg %p129
    // Predicated region
    $region9: #{decoder_block_forward.5} parent=5 // pred_check
      _
    $region10: #{decoder_block_forward.5} parent=5 // pred_check_branch
      %132 = sbr.rel (%p129) target = $region12
    $region11: #{decoder_block_forward.5} parent=5 // pred_region
      %s133 = ssub.s32 %s9, 1
      // Predicated region
      $region13: #{decoder_block_forward.5} parent=11 // pred_check
        %p134 = pneg %p70
      $region14: #{decoder_block_forward.5} parent=11 // pred_check_branch
        %136 = sbr.rel (%p134) target = $region16
      $region15: #{decoder_block_forward.5} parent=11 // pred_region
        _
      $region16: #{decoder_block_forward.5} parent=11 // pred_fallthru
        _
      // Predicated region
      $region17: #{decoder_block_forward.5} parent=11 // pred_check
        %p137 = pneg %p91
      $region18: #{decoder_block_forward.5} parent=11 // pred_check_branch
        %139 = sbr.rel (%p137) target = $region20
      $region19: #{decoder_block_forward.5} parent=11 // pred_region
        _
      $region20: #{decoder_block_forward.5} parent=11 // pred_fallthru
        _
    $region12: #{decoder_block_forward.5} parent=5 // pred_fallthru
      _
    %p140 = scmp.lt.s32.totalorder %s9, 2
    // Predicated region
    $region21: #{decoder_block_forward.5} parent=5 // pred_check
      %p141 = pneg %p140
    $region22: #{decoder_block_forward.5} parent=5 // pred_check_branch
      %143 = sbr.rel (%p141) target = $region24
    $region23: #{decoder_block_forward.5} parent=5 // pred_region
      // Predicated region
      $region25: #{decoder_block_forward.5} parent=23 // pred_check
        %p144 = pneg %p43
      $region26: #{decoder_block_forward.5} parent=23 // pred_check_branch
        %146 = sbr.rel (%p144) target = $region28
      $region27: #{decoder_block_forward.5} parent=23 // pred_region
        %p147 = scmp.lt.s32.totalorder %s17, 1
        %s148 = scalar_select %p147, %s17, 1
        %p149 = scmp.lt.s32.totalorder %s16, 0
        %s150 = scalar_select %p149, %s16, 0
        %s151 = sadd.s32 %s150, %s148
        %s152 = smul.addr %s151, 4
        %s153 = scalar_lea.vmem %s0, %s152
      $region28: #{decoder_block_forward.5} parent=23 // pred_fallthru
        _
    $region24: #{decoder_block_forward.5} parent=5 // pred_fallthru
      _
    %p154 = scmp.le.s32.totalorder 1, %s9
    %p155 = scmp.lt.s32.totalorder %s9, 3
    %p156 = pnand %p154, %p155
    %p157 = pneg %p156
    // Predicated region
    $region29: #{decoder_block_forward.5} parent=5 // pred_check
      _
    $region30: #{decoder_block_forward.5} parent=5 // pred_check_branch
      %159 = sbr.rel (%p156) target = $region32
    $region31: #{decoder_block_forward.5} parent=5 // pred_region
      %s160 = ssub.s32 %s9, 1
      %p161 = scmp.lt.s32.totalorder %s19, 1
      %s162 = scalar_select %p161, %s19, 1
      %p163 = scmp.lt.s32.totalorder %s18, 0
      %s164 = scalar_select %p163, %s18, 0
      %s165 = sadd.s32 %s164, %s162
      %s166 = smul.addr %s165, 4
      %s167 = scalar_lea.vmem %s0, %s166
      %p168 = pneg %p49
      %p169 = pneg %p46
      %p170 = pneg %p70
      %p171 = pneg %p67
      %p172 = pneg %p91
      %p173 = pneg %p88
      %p174 = pneg %p119
      %p175 = pneg %p116
      %p176 = scmp.lt.s32.totalorder %s19, 1
      %s177 = scalar_select %p176, %s19, 1
      %p178 = scmp.lt.s32.totalorder %s18, 0
      %s179 = scalar_select %p178, %s18, 0
      %s180 = smul.addr %s177, 4
      %s181 = sadd.s32 %s179, %s180
      %s182 = smul.addr %s181, 4
      %s183 = scalar_lea.vmem %s3, %s182
      %p184 = scmp.lt.s32.totalorder %s19, 1
      %s185 = scalar_select %p184, %s19, 1
      %p186 = scmp.lt.s32.totalorder %s18, 0
      %s187 = scalar_select %p186, %s18, 0
      %s188 = sadd.s32 %s187, %s185
      %s189 = smul.addr %s188, 4
      %s190 = scalar_lea.vmem %s0, %s189
      %p191 = scmp.lt.s32.totalorder %s19, 1
      %s192 = scalar_select %p191, %s19, 1
      %p193 = scmp.lt.s32.totalorder %s18, 0
      %s194 = scalar_select %p193, %s18, 0
      %s195 = smul.addr %s192, 4
      %s196 = sadd.s32 %s194, %s195
      %s197 = smul.addr %s196, 4
      %s198 = scalar_lea.vmem %s3, %s197
      %v200 = vld [vmem:[%s1] sm:$0xf]
      %v201 = vld [vmem:[%s1 + $0x4] sm:$0xf]
      %v202 = vld [vmem:[%s1 + $0x8] sm:$0xf]
      %v203 = vld [vmem:[%s1 + $0xc] sm:$0xf]
      %v204 = vld [vmem:[%s190] sm:$0xf]
      %v205 = vld [vmem:[%s2] sm:$0xff]
      %v206 = vld [vmem:[%s2 + $0x8] sm:$0xff]
      %v207 = vld [vmem:[%s2 + $0x10] sm:$0xff]
      %v208 = vld [vmem:[%s2 + $0x18] sm:$0xff]
      %210 = vset.pattern.permute.xlu0 0
      %211 = vperm.xlu0 %210, %v205
      %v212 = vpop.permute.xlu0 %211
      %215 = vset.pattern.permute.xlu0 0
      %216 = vperm.xlu0 %215, %v206
      %v217 = vpop.permute.xlu0 %216
      %220 = vset.pattern.permute.xlu0 0
      %221 = vperm.xlu0 %220, %v207
      %v222 = vpop.permute.xlu0 %221
      %225 = vset.pattern.permute.xlu0 0
      %226 = vperm.xlu0 %225, %v208
      %v227 = vpop.permute.xlu0 %226
      %v233 = vunpack.c.l.b16 %v200
      %v234 = vunpack.c.l.b16 %v201
      %v235 = vunpack.c.l.b16 %v202
      %v236 = vunpack.c.l.b16 %v203
      %v237 = vpack.c.b16 %v234, %v233
      %v238 = vpack.c.b16 %v236, %v235
      %vm239 = vcmask 64512
      %v241 = vsel %vm239, %v237, 0
      %v244 = vsel %vm239, %v238, 0
      %vm246 = vcmask 1043456
      %v248 = vsel %vm246, %v204, 0
      %250 = vmatprep.subr.bf16.mxu0 0
      %251 = vmatpush1.bf16.msra.mxu0 %v248
      %252 = vmatprep.subr.bf16.mxu0 0
      %253 = vmatpush1.bf16.msra.mxu0 0
      %254 = vmatprep.subr.bf16.mxu0 0
      %255 = vmatpush1.bf16.msra.mxu0 0
      %256 = vmatprep.subr.bf16.mxu0 0
      %257 = vmatpush1.bf16.msra.mxu0 0
      %258 = vmatprep.subr.bf16.mxu0 0
      %259 = vmatpush1.bf16.msra.mxu0 0
      %260 = vmatprep.subr.bf16.mxu0 0
      %261 = vmatpush1.bf16.msra.mxu0 0
      %262 = vmatprep.subr.bf16.mxu0 0
      %263 = vmatpush1.bf16.msra.mxu0 0
      %264 = vmatprep.subr.bf16.mxu0 0
      %265 = vmatpush1.bf16.msra.mxu0 0
      %266 = vmatprep.subr.bf16.mxu0 0
      %267 = vmatpush1.bf16.msra.mxu0 0
      %268 = vmatprep.subr.bf16.mxu0 0
      %269 = vmatpush1.bf16.msra.mxu0 0
      %270 = vmatprep.subr.bf16.mxu0 0
      %271 = vmatpush1.bf16.msra.mxu0 0
      %272 = vmatprep.subr.bf16.mxu0 0
      %273 = vmatpush1.bf16.msra.mxu0 0
      %274 = vmatprep.subr.bf16.mxu0 0
      %275 = vmatpush1.bf16.msra.mxu0 0
      %276 = vmatprep.subr.bf16.mxu0 0
      %277 = vmatpush1.bf16.msra.mxu0 0
      %278 = vmatprep.subr.bf16.mxu0 0
      %279 = vmatpush1.bf16.msra.mxu0 0
      %280 = vmatprep.subr.bf16.mxu0 0
      %281 = vmatpush1.bf16.msra.mxu0 0
      %282 = vmatprep.mubr.bf16.mxu0 0
      %283 = vmatmul.mubr.bf16.gmra.mrb[0].mxu0 %v241
      %v284 = vpop.f32.mrb[0].mxu0
      %v285 = vadd.f32 %v212, %v284
      %v286 = vpop.f32.mrb[0].mxu0
      %v287 = vpop.f32.mrb[0].mxu0
      %v288 = vadd.f32 %v217, %v287
      %v289 = vpop.f32.mrb[0].mxu0
      %290 = vmatprep.mubr.bf16.mxu0 0
      %291 = vmatmul.mubr.bf16.gmra.mrb[0].mxu0 %v244
      %v292 = vpop.f32.mrb[0].mxu0
      %v293 = vadd.f32 %v222, %v292
      %v294 = vpop.f32.mrb[0].mxu0
      %v295 = vpop.f32.mrb[0].mxu0
      %v296 = vadd.f32 %v227, %v295
      %v297 = vpop.f32.mrb[0].mxu0
      %298 = vdwg.mxu0
      %v299 = vpack.c.bf16 %v288, %v285
      %v300 = vpack.c.bf16 %v296, %v293
      %v303 = vunpack.c.l.b16 %v299
      %v304 = vunpack.c.h.b16 %v299
      %v305 = vunpack.c.l.b16 %v300
      %v306 = vunpack.c.h.b16 %v300
      %v307 = vpack.c.b16 %v303, %v303
      %v308 = vpack.c.b16 %v304, %v304
      %v309 = vpack.c.b16 %v305, %v305
      %v310 = vpack.c.b16 %v306, %v306
      %315 = vst [vmem:[%s198] sm:$0xf] %v307
      %316 = vst [vmem:[%s198 + $0x4] sm:$0xf] %v308
      %317 = vst [vmem:[%s198 + $0x8] sm:$0xf] %v309
      %318 = vst [vmem:[%s198 + $0xc] sm:$0xf] %v310
      %p319 = scmp.lt.s32.totalorder %s19, 1
      %s320 = scalar_select %p319, %s19, 1
      %p321 = scmp.lt.s32.totalorder %s18, 0
      %s322 = scalar_select %p321, %s18, 0
      %s323 = smul.addr %s320, 4
      %s324 = sadd.s32 %s322, %s323
      %s325 = smul.addr %s324, 4
      %s326 = scalar_lea.vmem %s3, %s325
      // Predicated region
      $region33: #{decoder_block_forward.5} parent=31 // pred_check
        %p327 = pneg %p116
      $region34: #{decoder_block_forward.5} parent=31 // pred_check_branch
        %329 = sbr.rel (%p327) target = $region36
      $region35: #{decoder_block_forward.5} parent=31 // pred_region
        _
      $region36: #{decoder_block_forward.5} parent=31 // pred_fallthru
        _
    $region32: #{decoder_block_forward.5} parent=5 // pred_fallthru
      _
    %p330 = scmp.le.s32.totalorder 2, %s9
    // Predicated region
    $region37: #{decoder_block_forward.5} parent=5 // pred_check
      %p331 = pneg %p330
    $region38: #{decoder_block_forward.5} parent=5 // pred_check_branch
      %333 = sbr.rel (%p331) target = $region40
    $region39: #{decoder_block_forward.5} parent=5 // pred_region
      %s334 = ssub.s32 %s9, 2
      // Predicated region
      $region41: #{decoder_block_forward.5} parent=39 // pred_check
        %p335 = pneg %p122
      $region42: #{decoder_block_forward.5} parent=39 // pred_check_branch
        %337 = sbr.rel (%p335) target = $region44
      $region43: #{decoder_block_forward.5} parent=39 // pred_region
        %p338 = scmp.lt.s32.totalorder %s21, 1
        %s339 = scalar_select %p338, %s21, 1
        %p340 = scmp.lt.s32.totalorder %s20, 0
        %s341 = scalar_select %p340, %s20, 0
        %s342 = smul.addr %s339, 4
        %s343 = sadd.s32 %s341, %s342
        %s344 = smul.addr %s343, 4
        %s345 = scalar_lea.vmem %s3, %s344
      $region44: #{decoder_block_forward.5} parent=39 // pred_fallthru
        _
    $region40: #{decoder_block_forward.5} parent=5 // pred_fallthru
      _
  $region6: #{decoder_block_forward.5} parent=0 // loop_footer
    %s13 = sadd.s32 1, %s9
  $region7: #{decoder_block_forward.5} parent=0 // loop_footer_branch
    %8 = sbr.rel target = $region3
  $region8: #{decoder_block_forward.5} parent=0 // loop_exit
    _

// kernel: decoder_block_forward.7
$region0: #{decoder_block_forward.7}
  #allocation0 [shape = 'u32[]', space=smem, size = 0x4, offset = 0x4, fixed_abs, tag = 'smem constant byte address 0x4 - core index']
  #allocation1 [shape = 'u32[144,128]{1,0:T(1,128)}', space=vmem, size = 0x12000, scoped, tag = 'internal scratch']
  %s0 = inlined_call_operand.vmem [shape: f32[2,8,384], index: 0, kind: input, shape index: {}]
  %s1 = inlined_call_operand.vmem [shape: f32[8,1], index: 1, kind: input, shape index: {}]
  %s2 = inlined_call_operand.vmem [shape: f32[8,1], index: 2, kind: input, shape index: {}]
  %s3 = inlined_call_operand.vmem [shape: f32[1,384], index: 3, kind: input, shape index: {}]
  %s4 = inlined_call_operand.vmem [shape: bf16[2,8,384], index: 4, kind: output, shape index: {}]
  %s5 = sld [smem:[#allocation0]]
  $region49: #{decoder_block_forward.7} parent=0
    _
  %s7 = ssub.s32 1, %s5
  %s8 = scalar_select 0, %s7, %s5
  loop: start=0, step=1, limit=8
  $region2: #{decoder_block_forward.7} parent=0 // loop_pre_header
    _
  $region3: #{decoder_block_forward.7} parent=0 // loop_header
    %s10 = sphi 0, %s14
    %p11 = scmp.ge.s32.totalorder %s10, 8
    %s17 = sphi 0, %s29
    %s18 = sphi 0, %s25
    %s19 = sphi 0, %s17
    %s20 = sphi 0, %s18
    %s21 = sphi 0, %s19
    %s22 = sphi 0, %s20
    %s34 = sphi 0, %s36
    %s37 = sphi 0, %s34
    %s38 = sphi 0, %s37
    %s54 = sphi 0, %s38
    %s58 = sphi 0, %s58
    %s60 = sphi 0, %s58
    %s61 = sphi 0, %s60
    %s75 = sphi 0, %s61
    %s79 = sphi 0, %s79
    %s81 = sphi 0, %s79
    %s82 = sphi 0, %s81
    %s96 = sphi 0, %s82
    %s102 = sphi 0, %s104
    %s105 = sphi 0, %s102
    %s106 = sphi 0, %s105
    %s122 = sphi 0, %s106
    %s130 = sphi 0, %s132
    %s133 = sphi 0, %s130
    %s134 = sphi 0, %s133
    %s150 = sphi 0, %s134
  $region4: #{decoder_block_forward.7} parent=0 // loop_header_branch
    %13 = sbr.rel (%p11) target = $region8
  $region5: #{decoder_block_forward.7} parent=0 // loop_body
    %s15 = ssub.s32 %s10, 1
    %s16 = ssub.s32 %s10, 2
    %s23 = sadd.s32 1, %s18
    %p24 = scmp.ge.s32.totalorder %s23, 2
    %s25 = scalar_select %p24, 0, %s23
    %s26 = sadd.s32 1, %s17
    %s27 = scalar_select %p24, %s26, %s17
    %p28 = scmp.ge.s32.totalorder %s27, 3
    %s29 = scalar_select %p28, 0, %s27
    %s30 = ssub.s32 %s18, %s25
    %s31 = ssub.s32 %s17, %s29
    %s32 = sor.u32 %s30, %s31
    %p33 = scmp.eq.s32.totalorder %s32, 0
    %s35 = sadd.s32 %s34, 1
    %s36 = scalar_select %p33, %s34, %s35
    %p39 = pneg %p33
    %p40 = scmp.eq.s32.totalorder %s10, 5
    %p41 = por %p39, %p40
    %p42 = scmp.ne.s32.totalorder %s34, %s37
    %p43 = scmp.eq.s32.totalorder %s10, 0
    %p44 = por %p42, %p43
    %p45 = scmp.ne.s32.totalorder %s34, %s37
    %p46 = scmp.eq.s32.totalorder %s15, 5
    %p47 = por %p45, %p46
    %p48 = scmp.ne.s32.totalorder %s37, %s38
    %p49 = scmp.eq.s32.totalorder %s15, 0
    %p50 = por %p48, %p49
    %p51 = scmp.ne.s32.totalorder %s37, %s38
    %p52 = scmp.eq.s32.totalorder %s16, 5
    %p53 = por %p51, %p52
    %p55 = scmp.ne.s32.totalorder %s38, %s54
    %p56 = scmp.eq.s32.totalorder %s16, 0
    %p57 = por %p55, %p56
    %s59 = sadd.s32 %s58, 1
    %p62 = scmp.eq.s32.totalorder %s10, 5
    %p63 = scmp.ne.s32.totalorder %s58, %s60
    %p64 = scmp.eq.s32.totalorder %s10, 0
    %p65 = por %p63, %p64
    %p66 = scmp.ne.s32.totalorder %s58, %s60
    %p67 = scmp.eq.s32.totalorder %s15, 5
    %p68 = por %p66, %p67
    %p69 = scmp.ne.s32.totalorder %s60, %s61
    %p70 = scmp.eq.s32.totalorder %s15, 0
    %p71 = por %p69, %p70
    %p72 = scmp.ne.s32.totalorder %s60, %s61
    %p73 = scmp.eq.s32.totalorder %s16, 5
    %p74 = por %p72, %p73
    %p76 = scmp.ne.s32.totalorder %s61, %s75
    %p77 = scmp.eq.s32.totalorder %s16, 0
    %p78 = por %p76, %p77
    %s80 = sadd.s32 %s79, 1
    %p83 = scmp.eq.s32.totalorder %s10, 5
    %p84 = scmp.ne.s32.totalorder %s79, %s81
    %p85 = scmp.eq.s32.totalorder %s10, 0
    %p86 = por %p84, %p85
    %p87 = scmp.ne.s32.totalorder %s79, %s81
    %p88 = scmp.eq.s32.totalorder %s15, 5
    %p89 = por %p87, %p88
    %p90 = scmp.ne.s32.totalorder %s81, %s82
    %p91 = scmp.eq.s32.totalorder %s15, 0
    %p92 = por %p90, %p91
    %p93 = scmp.ne.s32.totalorder %s81, %s82
    %p94 = scmp.eq.s32.totalorder %s16, 5
    %p95 = por %p93, %p94
    %p97 = scmp.ne.s32.totalorder %s82, %s96
    %p98 = scmp.eq.s32.totalorder %s16, 0
    %p99 = por %p97, %p98
    %s100 = ssub.s32 %s17, %s29
    %p101 = scmp.eq.s32.totalorder %s100, 0
    %s103 = sadd.s32 %s102, 1
    %s104 = scalar_select %p101, %s102, %s103
    %p107 = pneg %p101
    %p108 = scmp.eq.s32.totalorder %s10, 5
    %p109 = por %p107, %p108
    %p110 = scmp.ne.s32.totalorder %s102, %s105
    %p111 = scmp.eq.s32.totalorder %s10, 0
    %p112 = por %p110, %p111
    %p113 = scmp.ne.s32.totalorder %s102, %s105
    %p114 = scmp.eq.s32.totalorder %s15, 5
    %p115 = por %p113, %p114
    %p116 = scmp.ne.s32.totalorder %s105, %s106
    %p117 = scmp.eq.s32.totalorder %s15, 0
    %p118 = por %p116, %p117
    %p119 = scmp.ne.s32.totalorder %s105, %s106
    %p120 = scmp.eq.s32.totalorder %s16, 5
    %p121 = por %p119, %p120
    %p123 = scmp.ne.s32.totalorder %s106, %s122
    %p124 = scmp.eq.s32.totalorder %s16, 0
    %p125 = por %p123, %p124
    %s126 = ssub.s32 %s18, %s25
    %s127 = ssub.s32 %s17, %s29
    %s128 = sor.u32 %s126, %s127
    %p129 = scmp.eq.s32.totalorder %s128, 0
    %s131 = sadd.s32 %s130, 1
    %s132 = scalar_select %p129, %s130, %s131
    %p135 = pneg %p129
    %p136 = scmp.eq.s32.totalorder %s10, 5
    %p137 = por %p135, %p136
    %p138 = scmp.ne.s32.totalorder %s130, %s133
    %p139 = scmp.eq.s32.totalorder %s10, 0
    %p140 = por %p138, %p139
    %p141 = scmp.ne.s32.totalorder %s130, %s133
    %p142 = scmp.eq.s32.totalorder %s15, 5
    %p143 = por %p141, %p142
    %p144 = scmp.ne.s32.totalorder %s133, %s134
    %p145 = scmp.eq.s32.totalorder %s15, 0
    %p146 = por %p144, %p145
    %p147 = scmp.ne.s32.totalorder %s133, %s134
    %p148 = scmp.eq.s32.totalorder %s16, 5
    %p149 = por %p147, %p148
    %p151 = scmp.ne.s32.totalorder %s134, %s150
    %p152 = scmp.eq.s32.totalorder %s16, 0
    %p153 = por %p151, %p152
    %p154 = scmp.le.s32.totalorder 1, %s10
    %p155 = scmp.lt.s32.totalorder %s10, 7
    %p156 = pnand %p154, %p155
    %p157 = pneg %p156
    // Predicated region
    $region9: #{decoder_block_forward.7} parent=5 // pred_check
      _
    $region10: #{decoder_block_forward.7} parent=5 // pred_check_branch
      %159 = sbr.rel (%p156) target = $region12
    $region11: #{decoder_block_forward.7} parent=5 // pred_region
      %s160 = ssub.s32 %s10, 1
      // Predicated region
      $region13: #{decoder_block_forward.7} parent=11 // pred_check
        %p161 = pneg %p71
      $region14: #{decoder_block_forward.7} parent=11 // pred_check_branch
        %163 = sbr.rel (%p161) target = $region16
      $region15: #{decoder_block_forward.7} parent=11 // pred_region
        _
      $region16: #{decoder_block_forward.7} parent=11 // pred_fallthru
        _
      // Predicated region
      $region17: #{decoder_block_forward.7} parent=11 // pred_check
        %p164 = pneg %p92
      $region18: #{decoder_block_forward.7} parent=11 // pred_check_branch
        %166 = sbr.rel (%p164) target = $region20
      $region19: #{decoder_block_forward.7} parent=11 // pred_region
        _
      $region20: #{decoder_block_forward.7} parent=11 // pred_fallthru
        _
    $region12: #{decoder_block_forward.7} parent=5 // pred_fallthru
      _
    %p167 = scmp.lt.s32.totalorder %s10, 6
    // Predicated region
    $region21: #{decoder_block_forward.7} parent=5 // pred_check
      %p168 = pneg %p167
    $region22: #{decoder_block_forward.7} parent=5 // pred_check_branch
      %170 = sbr.rel (%p168) target = $region24
    $region23: #{decoder_block_forward.7} parent=5 // pred_region
      // Predicated region
      $region25: #{decoder_block_forward.7} parent=23 // pred_check
        %p171 = pneg %p44
      $region26: #{decoder_block_forward.7} parent=23 // pred_check_branch
        %173 = sbr.rel (%p171) target = $region28
      $region27: #{decoder_block_forward.7} parent=23 // pred_region
        %p174 = scmp.lt.s32.totalorder %s18, 1
        %s175 = scalar_select %p174, %s18, 1
        %p176 = scmp.lt.s32.totalorder %s17, 2
        %s177 = scalar_select %p176, %s17, 2
        %s178 = smul.addr %s175, 3
        %s179 = sadd.s32 %s177, %s178
        %s180 = smul.addr %s179, 8
        %s181 = scalar_lea.vmem %s0, %s180
      $region28: #{decoder_block_forward.7} parent=23 // pred_fallthru
        _
      // Predicated region
      $region29: #{decoder_block_forward.7} parent=23 // pred_check
        %p182 = pneg %p112
      $region30: #{decoder_block_forward.7} parent=23 // pred_check_branch
        %184 = sbr.rel (%p182) target = $region32
      $region31: #{decoder_block_forward.7} parent=23 // pred_region
        %p185 = scmp.lt.s32.totalorder %s17, 2
        %s186 = scalar_select %p185, %s17, 2
        %s187 = scalar_lea.vmem %s3, %s186
      $region32: #{decoder_block_forward.7} parent=23 // pred_fallthru
        _
    $region24: #{decoder_block_forward.7} parent=5 // pred_fallthru
      _
    %p188 = scmp.le.s32.totalorder 1, %s10
    %p189 = scmp.lt.s32.totalorder %s10, 7
    %p190 = pnand %p188, %p189
    %p191 = pneg %p190
    // Predicated region
    $region33: #{decoder_block_forward.7} parent=5 // pred_check
      _
    $region34: #{decoder_block_forward.7} parent=5 // pred_check_branch
      %193 = sbr.rel (%p190) target = $region36
    $region35: #{decoder_block_forward.7} parent=5 // pred_region
      %s194 = ssub.s32 %s10, 1
      %p195 = scmp.lt.s32.totalorder %s20, 1
      %s196 = scalar_select %p195, %s20, 1
      %p197 = scmp.lt.s32.totalorder %s19, 2
      %s198 = scalar_select %p197, %s19, 2
      %s199 = smul.addr %s196, 3
      %s200 = sadd.s32 %s198, %s199
      %s201 = smul.addr %s200, 8
      %s202 = scalar_lea.vmem %s0, %s201
      %p203 = pneg %p50
      %p204 = pneg %p47
      %p205 = pneg %p71
      %p206 = pneg %p68
      %p207 = pneg %p92
      %p208 = pneg %p89
      %p209 = scmp.lt.s32.totalorder %s19, 2
      %s210 = scalar_select %p209, %s19, 2
      %s211 = scalar_lea.vmem %s3, %s210
      %p212 = pneg %p118
      %p213 = pneg %p115
      %p214 = pneg %p146
      %p215 = pneg %p143
      %p216 = scmp.lt.s32.totalorder %s20, 1
      %s217 = scalar_select %p216, %s20, 1
      %p218 = scmp.lt.s32.totalorder %s19, 2
      %s219 = scalar_select %p218, %s19, 2
      %s220 = smul.addr %s217, 3
      %s221 = sadd.s32 %s219, %s220
      %s222 = smul.addr %s221, 4
      %s223 = scalar_lea.vmem %s4, %s222
      %p224 = scmp.lt.s32.totalorder %s20, 1
      %s225 = scalar_select %p224, %s20, 1
      %p226 = scmp.lt.s32.totalorder %s19, 2
      %s227 = scalar_select %p226, %s19, 2
      %s228 = smul.addr %s225, 3
      %s229 = sadd.s32 %s227, %s228
      %s230 = smul.addr %s229, 8
      %s231 = scalar_lea.vmem %s0, %s230
      %p232 = scmp.lt.s32.totalorder %s19, 2
      %s233 = scalar_select %p232, %s19, 2
      %s234 = scalar_lea.vmem %s3, %s233
      %p235 = scmp.lt.s32.totalorder %s20, 1
      %s236 = scalar_select %p235, %s20, 1
      %p237 = scmp.lt.s32.totalorder %s19, 2
      %s238 = scalar_select %p237, %s19, 2
      %s239 = smul.addr %s236, 3
      %s240 = sadd.s32 %s238, %s239
      %s241 = smul.addr %s240, 4
      %s242 = scalar_lea.vmem %s4, %s241
      %v243 = vld [vmem:[%s231] sm:$0xff]
      %v244 = vld [vmem:[%s1] sm:$0xff]
      %246 = vset.pattern.permute.xlu0 0
      %247 = vperm.xlu0 %246, %v244
      %v248 = vpop.permute.xlu0 %247
      %v250 = vmul.f32 %v243, %v248
      %v251 = vld [vmem:[%s2] sm:$0xff]
      %253 = vset.pattern.permute.xlu0 0
      %254 = vperm.xlu0 %253, %v251
      %v255 = vpop.permute.xlu0 %254
      %v257 = vadd.f32 %v250, %v255
      %v258 = vmax.f32 %v257, 0.0
      %v259 = vld [vmem:[%s234] sm:$0x1]
      %v261 = vlaneseq
      %v262 = vshrl.u32 %v261, 7
      %v263 = vsub.s32 0, %v262
      %v264 = vrot.slane %v259, %v263
      %v266 = vmul.f32 %v258, %v264
      %v267 = vpack.c.bf16 %v266, %v266
      %268 = vst [vmem:[%s242] sm:$0xf] %v267
      %p269 = scmp.lt.s32.totalorder %s20, 1
      %s270 = scalar_select %p269, %s20, 1
      %p271 = scmp.lt.s32.totalorder %s19, 2
      %s272 = scalar_select %p271, %s19, 2
      %s273 = smul.addr %s270, 3
      %s274 = sadd.s32 %s272, %s273
      %s275 = smul.addr %s274, 4
      %s276 = scalar_lea.vmem %s4, %s275
      // Predicated region
      $region37: #{decoder_block_forward.7} parent=35 // pred_check
        %p277 = pneg %p143
      $region38: #{decoder_block_forward.7} parent=35 // pred_check_branch
        %279 = sbr.rel (%p277) target = $region40
      $region39: #{decoder_block_forward.7} parent=35 // pred_region
        _
      $region40: #{decoder_block_forward.7} parent=35 // pred_fallthru
        _
    $region36: #{decoder_block_forward.7} parent=5 // pred_fallthru
      _
    %p280 = scmp.le.s32.totalorder 2, %s10
    // Predicated region
    $region41: #{decoder_block_forward.7} parent=5 // pred_check
      %p281 = pneg %p280
    $region42: #{decoder_block_forward.7} parent=5 // pred_check_branch
      %283 = sbr.rel (%p281) target = $region44
    $region43: #{decoder_block_forward.7} parent=5 // pred_region
      %s284 = ssub.s32 %s10, 2
      // Predicated region
      $region45: #{decoder_block_forward.7} parent=43 // pred_check
        %p285 = pneg %p149
      $region46: #{decoder_block_forward.7} parent=43 // pred_check_branch
        %287 = sbr.rel (%p285) target = $region48
      $region47: #{decoder_block_forward.7} parent=43 // pred_region
        %p288 = scmp.lt.s32.totalorder %s22, 1
        %s289 = scalar_select %p288, %s22, 1
        %p290 = scmp.lt.s32.totalorder %s21, 2
        %s291 = scalar_select %p290, %s21, 2
        %s292 = smul.addr %s289, 3
        %s293 = sadd.s32 %s291, %s292
        %s294 = smul.addr %s293, 4
        %s295 = scalar_lea.vmem %s4, %s294
      $region48: #{decoder_block_forward.7} parent=43 // pred_fallthru
        _
    $region44: #{decoder_block_forward.7} parent=5 // pred_fallthru
      _
  $region6: #{decoder_block_forward.7} parent=0 // loop_footer
    %s14 = sadd.s32 1, %s10
  $region7: #{decoder_block_forward.7} parent=0 // loop_footer_branch
    %9 = sbr.rel target = $region3
  $region8: #{decoder_block_forward.7} parent=0 // loop_exit
    _

// kernel: decoder_block_forward.8
$region0: #{decoder_block_forward.8}
  #allocation0 [shape = 'u32[]', space=smem, size = 0x4, offset = 0x4, fixed_abs, tag = 'smem constant byte address 0x4 - core index']
  #allocation1 [shape = 'u32[144,128]{1,0:T(1,128)}', space=vmem, size = 0x12000, scoped, tag = 'internal scratch']
  %s0 = inlined_call_operand.vmem [shape: bf16[2,3,8,166], index: 0, kind: input, shape index: {}]
  %s1 = inlined_call_operand.vmem [shape: bf16[9,8,8], index: 1, kind: input, shape index: {}]
  %s2 = inlined_call_operand.vmem [shape: f32[1,384], index: 2, kind: input, shape index: {}]
  %s3 = inlined_call_operand.vmem [shape: f32[2,8,384], index: 3, kind: output, shape index: {0}]
  %s4 = inlined_call_operand.vmem [shape: f32[3,8,1], index: 4, kind: output, shape index: {1}]
  %s5 = inlined_call_operand.vmem [shape: f32[3,8,1], index: 5, kind: output, shape index: {2}]
  %6 = xla_tuple %s3, %s4, %s5
  %s7 = sld [smem:[#allocation0]]
  $region65: #{decoder_block_forward.8} parent=0
    _
  %s9 = ssub.s32 1, %s7
  %s10 = scalar_select 0, %s9, %s7
  loop: start=0, step=1, limit=8
  $region2: #{decoder_block_forward.8} parent=0 // loop_pre_header
    _
  $region3: #{decoder_block_forward.8} parent=0 // loop_header
    %s12 = sphi 0, %s16
    %p13 = scmp.ge.s32.totalorder %s12, 8
    %s19 = sphi 0, %s31
    %s20 = sphi 0, %s27
    %s21 = sphi 0, %s19
    %s22 = sphi 0, %s20
    %s23 = sphi 0, %s21
    %s24 = sphi 0, %s22
    %s36 = sphi 0, %s38
    %s39 = sphi 0, %s36
    %s40 = sphi 0, %s39
    %s56 = sphi 0, %s40
    %s60 = sphi 0, %s60
    %s62 = sphi 0, %s60
    %s63 = sphi 0, %s62
    %s77 = sphi 0, %s63
    %s83 = sphi 0, %s85
    %s86 = sphi 0, %s83
    %s87 = sphi 0, %s86
    %s103 = sphi 0, %s87
    %s111 = sphi 0, %s113
    %s114 = sphi 0, %s111
    %s115 = sphi 0, %s114
    %s131 = sphi 0, %s115
    %s137 = sphi 0, %s139
    %s140 = sphi 0, %s137
    %s141 = sphi 0, %s140
    %s157 = sphi 0, %s141
    %s163 = sphi 0, %s165
    %s166 = sphi 0, %s163
    %s167 = sphi 0, %s166
    %s183 = sphi 0, %s167
  $region4: #{decoder_block_forward.8} parent=0 // loop_header_branch
    %15 = sbr.rel (%p13) target = $region8
  $region5: #{decoder_block_forward.8} parent=0 // loop_body
    %s17 = ssub.s32 %s12, 1
    %s18 = ssub.s32 %s12, 2
    %s25 = sadd.s32 1, %s20
    %p26 = scmp.ge.s32.totalorder %s25, 2
    %s27 = scalar_select %p26, 0, %s25
    %s28 = sadd.s32 1, %s19
    %s29 = scalar_select %p26, %s28, %s19
    %p30 = scmp.ge.s32.totalorder %s29, 3
    %s31 = scalar_select %p30, 0, %s29
    %s32 = ssub.s32 %s20, %s27
    %s33 = ssub.s32 %s19, %s31
    %s34 = sor.u32 %s32, %s33
    %p35 = scmp.eq.s32.totalorder %s34, 0
    %s37 = sadd.s32 %s36, 1
    %s38 = scalar_select %p35, %s36, %s37
    %p41 = pneg %p35
    %p42 = scmp.eq.s32.totalorder %s12, 5
    %p43 = por %p41, %p42
    %p44 = scmp.ne.s32.totalorder %s36, %s39
    %p45 = scmp.eq.s32.totalorder %s12, 0
    %p46 = por %p44, %p45
    %p47 = scmp.ne.s32.totalorder %s36, %s39
    %p48 = scmp.eq.s32.totalorder %s17, 5
    %p49 = por %p47, %p48
    %p50 = scmp.ne.s32.totalorder %s39, %s40
    %p51 = scmp.eq.s32.totalorder %s17, 0
    %p52 = por %p50, %p51
    %p53 = scmp.ne.s32.totalorder %s39, %s40
    %p54 = scmp.eq.s32.totalorder %s18, 5
    %p55 = por %p53, %p54
    %p57 = scmp.ne.s32.totalorder %s40, %s56
    %p58 = scmp.eq.s32.totalorder %s18, 0
    %p59 = por %p57, %p58
    %s61 = sadd.s32 %s60, 1
    %p64 = scmp.eq.s32.totalorder %s12, 5
    %p65 = scmp.ne.s32.totalorder %s60, %s62
    %p66 = scmp.eq.s32.totalorder %s12, 0
    %p67 = por %p65, %p66
    %p68 = scmp.ne.s32.totalorder %s60, %s62
    %p69 = scmp.eq.s32.totalorder %s17, 5
    %p70 = por %p68, %p69
    %p71 = scmp.ne.s32.totalorder %s62, %s63
    %p72 = scmp.eq.s32.totalorder %s17, 0
    %p73 = por %p71, %p72
    %p74 = scmp.ne.s32.totalorder %s62, %s63
    %p75 = scmp.eq.s32.totalorder %s18, 5
    %p76 = por %p74, %p75
    %p78 = scmp.ne.s32.totalorder %s63, %s77
    %p79 = scmp.eq.s32.totalorder %s18, 0
    %p80 = por %p78, %p79
    %s81 = ssub.s32 %s19, %s31
    %p82 = scmp.eq.s32.totalorder %s81, 0
    %s84 = sadd.s32 %s83, 1
    %s85 = scalar_select %p82, %s83, %s84
    %p88 = pneg %p82
    %p89 = scmp.eq.s32.totalorder %s12, 5
    %p90 = por %p88, %p89
    %p91 = scmp.ne.s32.totalorder %s83, %s86
    %p92 = scmp.eq.s32.totalorder %s12, 0
    %p93 = por %p91, %p92
    %p94 = scmp.ne.s32.totalorder %s83, %s86
    %p95 = scmp.eq.s32.totalorder %s17, 5
    %p96 = por %p94, %p95
    %p97 = scmp.ne.s32.totalorder %s86, %s87
    %p98 = scmp.eq.s32.totalorder %s17, 0
    %p99 = por %p97, %p98
    %p100 = scmp.ne.s32.totalorder %s86, %s87
    %p101 = scmp.eq.s32.totalorder %s18, 5
    %p102 = por %p100, %p101
    %p104 = scmp.ne.s32.totalorder %s87, %s103
    %p105 = scmp.eq.s32.totalorder %s18, 0
    %p106 = por %p104, %p105
    %s107 = ssub.s32 %s20, %s27
    %s108 = ssub.s32 %s19, %s31
    %s109 = sor.u32 %s107, %s108
    %p110 = scmp.eq.s32.totalorder %s109, 0
    %s112 = sadd.s32 %s111, 1
    %s113 = scalar_select %p110, %s111, %s112
    %p116 = pneg %p110
    %p117 = scmp.eq.s32.totalorder %s12, 5
    %p118 = por %p116, %p117
    %p119 = scmp.ne.s32.totalorder %s111, %s114
    %p120 = scmp.eq.s32.totalorder %s12, 0
    %p121 = por %p119, %p120
    %p122 = scmp.ne.s32.totalorder %s111, %s114
    %p123 = scmp.eq.s32.totalorder %s17, 5
    %p124 = por %p122, %p123
    %p125 = scmp.ne.s32.totalorder %s114, %s115
    %p126 = scmp.eq.s32.totalorder %s17, 0
    %p127 = por %p125, %p126
    %p128 = scmp.ne.s32.totalorder %s114, %s115
    %p129 = scmp.eq.s32.totalorder %s18, 5
    %p130 = por %p128, %p129
    %p132 = scmp.ne.s32.totalorder %s115, %s131
    %p133 = scmp.eq.s32.totalorder %s18, 0
    %p134 = por %p132, %p133
    %s135 = ssub.s32 %s19, %s31
    %p136 = scmp.eq.s32.totalorder %s135, 0
    %s138 = sadd.s32 %s137, 1
    %s139 = scalar_select %p136, %s137, %s138
    %p142 = pneg %p136
    %p143 = scmp.eq.s32.totalorder %s12, 5
    %p144 = por %p142, %p143
    %p145 = scmp.ne.s32.totalorder %s137, %s140
    %p146 = scmp.eq.s32.totalorder %s12, 0
    %p147 = por %p145, %p146
    %p148 = scmp.ne.s32.totalorder %s137, %s140
    %p149 = scmp.eq.s32.totalorder %s17, 5
    %p150 = por %p148, %p149
    %p151 = scmp.ne.s32.totalorder %s140, %s141
    %p152 = scmp.eq.s32.totalorder %s17, 0
    %p153 = por %p151, %p152
    %p154 = scmp.ne.s32.totalorder %s140, %s141
    %p155 = scmp.eq.s32.totalorder %s18, 5
    %p156 = por %p154, %p155
    %p158 = scmp.ne.s32.totalorder %s141, %s157
    %p159 = scmp.eq.s32.totalorder %s18, 0
    %p160 = por %p158, %p159
    %s161 = ssub.s32 %s19, %s31
    %p162 = scmp.eq.s32.totalorder %s161, 0
    %s164 = sadd.s32 %s163, 1
    %s165 = scalar_select %p162, %s163, %s164
    %p168 = pneg %p162
    %p169 = scmp.eq.s32.totalorder %s12, 5
    %p170 = por %p168, %p169
    %p171 = scmp.ne.s32.totalorder %s163, %s166
    %p172 = scmp.eq.s32.totalorder %s12, 0
    %p173 = por %p171, %p172
    %p174 = scmp.ne.s32.totalorder %s163, %s166
    %p175 = scmp.eq.s32.totalorder %s17, 5
    %p176 = por %p174, %p175
    %p177 = scmp.ne.s32.totalorder %s166, %s167
    %p178 = scmp.eq.s32.totalorder %s17, 0
    %p179 = por %p177, %p178
    %p180 = scmp.ne.s32.totalorder %s166, %s167
    %p181 = scmp.eq.s32.totalorder %s18, 5
    %p182 = por %p180, %p181
    %p184 = scmp.ne.s32.totalorder %s167, %s183
    %p185 = scmp.eq.s32.totalorder %s18, 0
    %p186 = por %p184, %p185
    %p187 = scmp.le.s32.totalorder 1, %s12
    %p188 = scmp.lt.s32.totalorder %s12, 7
    %p189 = pnand %p187, %p188
    %p190 = pneg %p189
    // Predicated region
    $region9: #{decoder_block_forward.8} parent=5 // pred_check
      _
    $region10: #{decoder_block_forward.8} parent=5 // pred_check_branch
      %192 = sbr.rel (%p189) target = $region12
    $region11: #{decoder_block_forward.8} parent=5 // pred_region
      %s193 = ssub.s32 %s12, 1
      // Predicated region
      $region13: #{decoder_block_forward.8} parent=11 // pred_check
        %p194 = pneg %p73
      $region14: #{decoder_block_forward.8} parent=11 // pred_check_branch
        %196 = sbr.rel (%p194) target = $region16
      $region15: #{decoder_block_forward.8} parent=11 // pred_region
        _
      $region16: #{decoder_block_forward.8} parent=11 // pred_fallthru
        _
    $region12: #{decoder_block_forward.8} parent=5 // pred_fallthru
      _
    %p197 = scmp.lt.s32.totalorder %s12, 6
    // Predicated region
    $region17: #{decoder_block_forward.8} parent=5 // pred_check
      %p198 = pneg %p197
    $region18: #{decoder_block_forward.8} parent=5 // pred_check_branch
      %200 = sbr.rel (%p198) target = $region20
    $region19: #{decoder_block_forward.8} parent=5 // pred_region
      // Predicated region
      $region21: #{decoder_block_forward.8} parent=19 // pred_check
        %p201 = pneg %p46
      $region22: #{decoder_block_forward.8} parent=19 // pred_check_branch
        %203 = sbr.rel (%p201) target = $region24
      $region23: #{decoder_block_forward.8} parent=19 // pred_region
        %p204 = scmp.lt.s32.totalorder %s20, 1
        %s205 = scalar_select %p204, %s20, 1
        %p206 = scmp.lt.s32.totalorder %s19, 2
        %s207 = scalar_select %p206, %s19, 2
        %s208 = smul.addr %s207, 2
        %s209 = smul.addr %s205, 6
        %s210 = sadd.s32 %s208, %s209
        %s211 = smul.addr %s210, 4
        %s212 = scalar_lea.vmem %s0, %s211
      $region24: #{decoder_block_forward.8} parent=19 // pred_fallthru
        _
      // Predicated region
      $region25: #{decoder_block_forward.8} parent=19 // pred_check
        %p213 = pneg %p93
      $region26: #{decoder_block_forward.8} parent=19 // pred_check_branch
        %215 = sbr.rel (%p213) target = $region28
      $region27: #{decoder_block_forward.8} parent=19 // pred_region
        %p216 = scmp.lt.s32.totalorder %s19, 2
        %s217 = scalar_select %p216, %s19, 2
        %s218 = scalar_lea.vmem %s2, %s217
      $region28: #{decoder_block_forward.8} parent=19 // pred_fallthru
        _
    $region20: #{decoder_block_forward.8} parent=5 // pred_fallthru
      _
    %p219 = scmp.le.s32.totalorder 1, %s12
    %p220 = scmp.lt.s32.totalorder %s12, 7
    %p221 = pnand %p219, %p220
    %p222 = pneg %p221
    // Predicated region
    $region29: #{decoder_block_forward.8} parent=5 // pred_check
      _
    $region30: #{decoder_block_forward.8} parent=5 // pred_check_branch
      %224 = sbr.rel (%p221) target = $region32
    $region31: #{decoder_block_forward.8} parent=5 // pred_region
      %s225 = ssub.s32 %s12, 1
      %p226 = scmp.lt.s32.totalorder %s22, 1
      %s227 = scalar_select %p226, %s22, 1
      %p228 = scmp.lt.s32.totalorder %s21, 2
      %s229 = scalar_select %p228, %s21, 2
      %s230 = smul.addr %s229, 2
      %s231 = smul.addr %s227, 6
      %s232 = sadd.s32 %s230, %s231
      %s233 = smul.addr %s232, 4
      %s234 = scalar_lea.vmem %s0, %s233
      %p235 = pneg %p52
      %p236 = pneg %p49
      %p237 = pneg %p73
      %p238 = pneg %p70
      %p239 = scmp.lt.s32.totalorder %s21, 2
      %s240 = scalar_select %p239, %s21, 2
      %s241 = scalar_lea.vmem %s2, %s240
      %p242 = pneg %p99
      %p243 = pneg %p96
      %p244 = pneg %p127
      %p245 = pneg %p124
      %p246 = scmp.lt.s32.totalorder %s22, 1
      %s247 = scalar_select %p246, %s22, 1
      %p248 = scmp.lt.s32.totalorder %s21, 2
      %s249 = scalar_select %p248, %s21, 2
      %s250 = smul.addr %s247, 3
      %s251 = sadd.s32 %s249, %s250
      %s252 = smul.addr %s251, 8
      %s253 = scalar_lea.vmem %s3, %s252
      %p254 = pneg %p153
      %p255 = pneg %p150
      %p256 = scmp.lt.s32.totalorder %s21, 2
      %s257 = scalar_select %p256, %s21, 2
      %s258 = smul.addr %s257, 8
      %s259 = scalar_lea.vmem %s4, %s258
      %p260 = pneg %p179
      %p261 = pneg %p176
      %p262 = scmp.lt.s32.totalorder %s21, 2
      %s263 = scalar_select %p262, %s21, 2
      %s264 = smul.addr %s263, 8
      %s265 = scalar_lea.vmem %s5, %s264
      %p266 = scmp.lt.s32.totalorder %s22, 1
      %s267 = scalar_select %p266, %s22, 1
      %p268 = scmp.lt.s32.totalorder %s21, 2
      %s269 = scalar_select %p268, %s21, 2
      %s270 = smul.addr %s269, 2
      %s271 = smul.addr %s267, 6
      %s272 = sadd.s32 %s270, %s271
      %s273 = smul.addr %s272, 4
      %s274 = scalar_lea.vmem %s0, %s273
      %p275 = scmp.lt.s32.totalorder %s21, 2
      %s276 = scalar_select %p275, %s21, 2
      %s277 = scalar_lea.vmem %s2, %s276
      %p278 = scmp.lt.s32.totalorder %s22, 1
      %s279 = scalar_select %p278, %s22, 1
      %p280 = scmp.lt.s32.totalorder %s21, 2
      %s281 = scalar_select %p280, %s21, 2
      %s282 = smul.addr %s279, 3
      %s283 = sadd.s32 %s281, %s282
      %s284 = smul.addr %s283, 8
      %s285 = scalar_lea.vmem %s3, %s284
      %p286 = scmp.lt.s32.totalorder %s21, 2
      %s287 = scalar_select %p286, %s21, 2
      %s288 = smul.addr %s287, 8
      %s289 = scalar_lea.vmem %s4, %s288
      %p290 = scmp.lt.s32.totalorder %s21, 2
      %s291 = scalar_select %p290, %s21, 2
      %s292 = smul.addr %s291, 8
      %s293 = scalar_lea.vmem %s5, %s292
      %v295 = vld [vmem:[%s274] sm:$0xff]
      %v296 = vld [vmem:[%s1] sm:$0xf]
      %s297 = scalar_lea.vmem %s1, 4
      %v298 = vld [vmem:[%s297] sm:$0xf]
      %v300 = vunpack.c.l.b16 %v295
      %v301 = vunpack.c.h.b16 %v295
      %v302 = vpack.c.b16 %v300, %v300
      %v303 = vpack.c.b16 %v301, %v301
      %304 = vrot.lane.b32.xlu0 %v302, 127
      %v305 = vpop.permute.xlu0 %304
      %306 = vrot.lane.b32.xlu0 %v303, 127
      %v307 = vpop.permute.xlu0 %306
      %vm308 = vcmask 1039360
      %v309 = vsel %vm308, %v305, %v307
      %vm310 = vcmask 64512
      %v312 = vsel %vm310, %v298, 0
      %vm314 = vcmask 1043456
      %v316 = vsel %vm314, %v309, 0
      %318 = vmatprep.subr.bf16.mxu0 0
      %319 = vmatpush1.bf16.msra.mxu0 %v316
      %320 = vmatprep.subr.bf16.mxu0 0
      %321 = vmatpush1.bf16.msra.mxu0 0
      %322 = vmatprep.subr.bf16.mxu0 0
      %323 = vmatpush1.bf16.msra.mxu0 0
      %324 = vmatprep.subr.bf16.mxu0 0
      %325 = vmatpush1.bf16.msra.mxu0 0
      %326 = vmatprep.subr.bf16.mxu0 0
      %327 = vmatpush1.bf16.msra.mxu0 0
      %328 = vmatprep.subr.bf16.mxu0 0
      %329 = vmatpush1.bf16.msra.mxu0 0
      %330 = vmatprep.subr.bf16.mxu0 0
      %331 = vmatpush1.bf16.msra.mxu0 0
      %332 = vmatprep.subr.bf16.mxu0 0
      %333 = vmatpush1.bf16.msra.mxu0 0
      %334 = vmatprep.subr.bf16.mxu0 0
      %335 = vmatpush1.bf16.msra.mxu0 0
      %336 = vmatprep.subr.bf16.mxu0 0
      %337 = vmatpush1.bf16.msra.mxu0 0
      %338 = vmatprep.subr.bf16.mxu0 0
      %339 = vmatpush1.bf16.msra.mxu0 0
      %340 = vmatprep.subr.bf16.mxu0 0
      %341 = vmatpush1.bf16.msra.mxu0 0
      %342 = vmatprep.subr.bf16.mxu0 0
      %343 = vmatpush1.bf16.msra.mxu0 0
      %344 = vmatprep.subr.bf16.mxu0 0
      %345 = vmatpush1.bf16.msra.mxu0 0
      %346 = vmatprep.subr.bf16.mxu0 0
      %347 = vmatpush1.bf16.msra.mxu0 0
      %348 = vmatprep.subr.bf16.mxu0 0
      %349 = vmatpush1.bf16.msra.mxu0 0
      %350 = vmatprep.mubr.bf16.mxu0 0
      %351 = vmatmul.mubr.bf16.gmra.mrb[0].mxu0 %v312
      %v352 = vpop.f32.mrb[0].mxu0
      %v353 = vadd.f32 0.0, %v352
      %v354 = vpop.f32.mrb[0].mxu0
      %v355 = vpop.f32.mrb[0].mxu0
      %v356 = vpop.f32.mrb[0].mxu0
      %357 = vdwg.mxu0
      %v359 = vsel %vm310, %v296, 0
      %v362 = vsel %vm314, %v295, 0
      %364 = vmatprep.subr.bf16.mxu0 0
      %365 = vmatpush1.bf16.msra.mxu0 %v362
      %366 = vmatprep.subr.bf16.mxu0 0
      %367 = vmatpush1.bf16.msra.mxu0 0
      %368 = vmatprep.subr.bf16.mxu0 0
      %369 = vmatpush1.bf16.msra.mxu0 0
      %370 = vmatprep.subr.bf16.mxu0 0
      %371 = vmatpush1.bf16.msra.mxu0 0
      %372 = vmatprep.subr.bf16.mxu0 0
      %373 = vmatpush1.bf16.msra.mxu0 0
      %374 = vmatprep.subr.bf16.mxu0 0
      %375 = vmatpush1.bf16.msra.mxu0 0
      %376 = vmatprep.subr.bf16.mxu0 0
      %377 = vmatpush1.bf16.msra.mxu0 0
      %378 = vmatprep.subr.bf16.mxu0 0
      %379 = vmatpush1.bf16.msra.mxu0 0
      %380 = vmatprep.subr.bf16.mxu0 0
      %381 = vmatpush1.bf16.msra.mxu0 0
      %382 = vmatprep.subr.bf16.mxu0 0
      %383 = vmatpush1.bf16.msra.mxu0 0
      %384 = vmatprep.subr.bf16.mxu0 0
      %385 = vmatpush1.bf16.msra.mxu0 0
      %386 = vmatprep.subr.bf16.mxu0 0
      %387 = vmatpush1.bf16.msra.mxu0 0
      %388 = vmatprep.subr.bf16.mxu0 0
      %389 = vmatpush1.bf16.msra.mxu0 0
      %390 = vmatprep.subr.bf16.mxu0 0
      %391 = vmatpush1.bf16.msra.mxu0 0
      %392 = vmatprep.subr.bf16.mxu0 0
      %393 = vmatpush1.bf16.msra.mxu0 0
      %394 = vmatprep.subr.bf16.mxu0 0
      %395 = vmatpush1.bf16.msra.mxu0 0
      %396 = vmatprep.mubr.bf16.mxu0 0
      %397 = vmatmul.mubr.bf16.gmra.mrb[0].mxu0 %v359
      %v398 = vpop.f32.mrb[0].mxu0
      %v399 = vadd.f32 %v353, %v398
      %v400 = vpop.f32.mrb[0].mxu0
      %v401 = vpop.f32.mrb[0].mxu0
      %v402 = vpop.f32.mrb[0].mxu0
      %403 = vdwg.mxu0
      %s404 = scalar_lea.vmem %s1, 8
      %v405 = vld [vmem:[%s404] sm:$0xf]
      %406 = vrot.lane.b32.xlu0 %v302, 126
      %v407 = vpop.permute.xlu0 %406
      %408 = vrot.lane.b32.xlu0 %v303, 126
      %v409 = vpop.permute.xlu0 %408
      %vm410 = vcmask 1031168
      %v411 = vsel %vm410, %v407, %v409
      %v413 = vsel %vm310, %v405, 0
      %v416 = vsel %vm314, %v411, 0
      %418 = vmatprep.subr.bf16.mxu0 0
      %419 = vmatpush1.bf16.msra.mxu0 %v416
      %420 = vmatprep.subr.bf16.mxu0 0
      %421 = vmatpush1.bf16.msra.mxu0 0
      %422 = vmatprep.subr.bf16.mxu0 0
      %423 = vmatpush1.bf16.msra.mxu0 0
      %424 = vmatprep.subr.bf16.mxu0 0
      %425 = vmatpush1.bf16.msra.mxu0 0
      %426 = vmatprep.subr.bf16.mxu0 0
      %427 = vmatpush1.bf16.msra.mxu0 0
      %428 = vmatprep.subr.bf16.mxu0 0
      %429 = vmatpush1.bf16.msra.mxu0 0
      %430 = vmatprep.subr.bf16.mxu0 0
      %431 = vmatpush1.bf16.msra.mxu0 0
      %432 = vmatprep.subr.bf16.mxu0 0
      %433 = vmatpush1.bf16.msra.mxu0 0
      %434 = vmatprep.subr.bf16.mxu0 0
      %435 = vmatpush1.bf16.msra.mxu0 0
      %436 = vmatprep.subr.bf16.mxu0 0
      %437 = vmatpush1.bf16.msra.mxu0 0
      %438 = vmatprep.subr.bf16.mxu0 0
      %439 = vmatpush1.bf16.msra.mxu0 0
      %440 = vmatprep.subr.bf16.mxu0 0
      %441 = vmatpush1.bf16.msra.mxu0 0
      %442 = vmatprep.subr.bf16.mxu0 0
      %443 = vmatpush1.bf16.msra.mxu0 0
      %444 = vmatprep.subr.bf16.mxu0 0
      %445 = vmatpush1.bf16.msra.mxu0 0
      %446 = vmatprep.subr.bf16.mxu0 0
      %447 = vmatpush1.bf16.msra.mxu0 0
      %448 = vmatprep.subr.bf16.mxu0 0
      %449 = vmatpush1.bf16.msra.mxu0 0
      %450 = vmatprep.mubr.bf16.mxu0 0
      %451 = vmatmul.mubr.bf16.gmra.mrb[0].mxu0 %v413
      %v452 = vpop.f32.mrb[0].mxu0
      %v453 = vadd.f32 0.0, %v452
      %v454 = vpop.f32.mrb[0].mxu0
      %v455 = vpop.f32.mrb[0].mxu0
      %v456 = vpop.f32.mrb[0].mxu0
      %457 = vdwg.mxu0
      %v458 = vadd.f32 %v399, %v453
      %s459 = scalar_lea.vmem %s1, 12
      %v460 = vld [vmem:[%s459] sm:$0xf]
      %461 = vrot.lane.b32.xlu0 %v302, 110
      %v462 = vpop.permute.xlu0 %461
      %463 = vrot.lane.b32.xlu0 %v303, 110
      %v464 = vpop.permute.xlu0 %463
      %vm465 = vcmask 900096
      %v466 = vsel %vm465, %v462, %v464
      %v468 = vsel %vm310, %v460, 0
      %v471 = vsel %vm314, %v466, 0
      %473 = vmatprep.subr.bf16.mxu0 0
      %474 = vmatpush1.bf16.msra.mxu0 %v471
      %475 = vmatprep.subr.bf16.mxu0 0
      %476 = vmatpush1.bf16.msra.mxu0 0
      %477 = vmatprep.subr.bf16.mxu0 0
      %478 = vmatpush1.bf16.msra.mxu0 0
      %479 = vmatprep.subr.bf16.mxu0 0
      %480 = vmatpush1.bf16.msra.mxu0 0
      %481 = vmatprep.subr.bf16.mxu0 0
      %482 = vmatpush1.bf16.msra.mxu0 0
      %483 = vmatprep.subr.bf16.mxu0 0
      %484 = vmatpush1.bf16.msra.mxu0 0
      %485 = vmatprep.subr.bf16.mxu0 0
      %486 = vmatpush1.bf16.msra.mxu0 0
      %487 = vmatprep.subr.bf16.mxu0 0
      %488 = vmatpush1.bf16.msra.mxu0 0
      %489 = vmatprep.subr.bf16.mxu0 0
      %490 = vmatpush1.bf16.msra.mxu0 0
      %491 = vmatprep.subr.bf16.mxu0 0
      %492 = vmatpush1.bf16.msra.mxu0 0
      %493 = vmatprep.subr.bf16.mxu0 0
      %494 = vmatpush1.bf16.msra.mxu0 0
      %495 = vmatprep.subr.bf16.mxu0 0
      %496 = vmatpush1.bf16.msra.mxu0 0
      %497 = vmatprep.subr.bf16.mxu0 0
      %498 = vmatpush1.bf16.msra.mxu0 0
      %499 = vmatprep.subr.bf16.mxu0 0
      %500 = vmatpush1.bf16.msra.mxu0 0
      %501 = vmatprep.subr.bf16.mxu0 0
      %502 = vmatpush1.bf16.msra.mxu0 0
      %503 = vmatprep.subr.bf16.mxu0 0
      %504 = vmatpush1.bf16.msra.mxu0 0
      %505 = vmatprep.mubr.bf16.mxu0 0
      %506 = vmatmul.mubr.bf16.gmra.mrb[0].mxu0 %v468
      %v507 = vpop.f32.mrb[0].mxu0
      %v508 = vadd.f32 0.0, %v507
      %v509 = vpop.f32.mrb[0].mxu0
      %v510 = vpop.f32.mrb[0].mxu0
      %v511 = vpop.f32.mrb[0].mxu0
      %512 = vdwg.mxu0
      %v513 = vadd.f32 %v458, %v508
      %s514 = scalar_lea.vmem %s1, 16
      %v515 = vld [vmem:[%s514] sm:$0xf]
      %516 = vrot.lane.b32.xlu0 %v302, 109
      %v517 = vpop.permute.xlu0 %516
      %518 = vrot.lane.b32.xlu0 %v303, 109
      %v519 = vpop.permute.xlu0 %518
      %vm520 = vcmask 891904
      %v521 = vsel %vm520, %v517, %v519
      %v523 = vsel %vm310, %v515, 0
      %v526 = vsel %vm314, %v521, 0
      %528 = vmatprep.subr.bf16.mxu0 0
      %529 = vmatpush1.bf16.msra.mxu0 %v526
      %530 = vmatprep.subr.bf16.mxu0 0
      %531 = vmatpush1.bf16.msra.mxu0 0
      %532 = vmatprep.subr.bf16.mxu0 0
      %533 = vmatpush1.bf16.msra.mxu0 0
      %534 = vmatprep.subr.bf16.mxu0 0
      %535 = vmatpush1.bf16.msra.mxu0 0
      %536 = vmatprep.subr.bf16.mxu0 0
      %537 = vmatpush1.bf16.msra.mxu0 0
      %538 = vmatprep.subr.bf16.mxu0 0
      %539 = vmatpush1.bf16.msra.mxu0 0
      %540 = vmatprep.subr.bf16.mxu0 0
      %541 = vmatpush1.bf16.msra.mxu0 0
      %542 = vmatprep.subr.bf16.mxu0 0
      %543 = vmatpush1.bf16.msra.mxu0 0
      %544 = vmatprep.subr.bf16.mxu0 0
      %545 = vmatpush1.bf16.msra.mxu0 0
      %546 = vmatprep.subr.bf16.mxu0 0
      %547 = vmatpush1.bf16.msra.mxu0 0
      %548 = vmatprep.subr.bf16.mxu0 0
      %549 = vmatpush1.bf16.msra.mxu0 0
      %550 = vmatprep.subr.bf16.mxu0 0
      %551 = vmatpush1.bf16.msra.mxu0 0
      %552 = vmatprep.subr.bf16.mxu0 0
      %553 = vmatpush1.bf16.msra.mxu0 0
      %554 = vmatprep.subr.bf16.mxu0 0
      %555 = vmatpush1.bf16.msra.mxu0 0
      %556 = vmatprep.subr.bf16.mxu0 0
      %557 = vmatpush1.bf16.msra.mxu0 0
      %558 = vmatprep.subr.bf16.mxu0 0
      %559 = vmatpush1.bf16.msra.mxu0 0
      %560 = vmatprep.mubr.bf16.mxu0 0
      %561 = vmatmul.mubr.bf16.gmra.mrb[0].mxu0 %v523
      %v562 = vpop.f32.mrb[0].mxu0
      %v563 = vadd.f32 0.0, %v562
      %v564 = vpop.f32.mrb[0].mxu0
      %v565 = vpop.f32.mrb[0].mxu0
      %v566 = vpop.f32.mrb[0].mxu0
      %567 = vdwg.mxu0
      %v568 = vadd.f32 %v513, %v563
      %s569 = scalar_lea.vmem %s1, 20
      %v570 = vld [vmem:[%s569] sm:$0xf]
      %571 = vrot.lane.b32.xlu0 %v302, 108
      %v572 = vpop.permute.xlu0 %571
      %573 = vrot.lane.b32.xlu0 %v303, 108
      %v574 = vpop.permute.xlu0 %573
      %vm575 = vcmask 883712
      %v576 = vsel %vm575, %v572, %v574
      %v578 = vsel %vm310, %v570, 0
      %v581 = vsel %vm314, %v576, 0
      %583 = vmatprep.subr.bf16.mxu0 0
      %584 = vmatpush1.bf16.msra.mxu0 %v581
      %585 = vmatprep.subr.bf16.mxu0 0
      %586 = vmatpush1.bf16.msra.mxu0 0
      %587 = vmatprep.subr.bf16.mxu0 0
      %588 = vmatpush1.bf16.msra.mxu0 0
      %589 = vmatprep.subr.bf16.mxu0 0
      %590 = vmatpush1.bf16.msra.mxu0 0
      %591 = vmatprep.subr.bf16.mxu0 0
      %592 = vmatpush1.bf16.msra.mxu0 0
      %593 = vmatprep.subr.bf16.mxu0 0
      %594 = vmatpush1.bf16.msra.mxu0 0
      %595 = vmatprep.subr.bf16.mxu0 0
      %596 = vmatpush1.bf16.msra.mxu0 0
      %597 = vmatprep.subr.bf16.mxu0 0
      %598 = vmatpush1.bf16.msra.mxu0 0
      %599 = vmatprep.subr.bf16.mxu0 0
      %600 = vmatpush1.bf16.msra.mxu0 0
      %601 = vmatprep.subr.bf16.mxu0 0
      %602 = vmatpush1.bf16.msra.mxu0 0
      %603 = vmatprep.subr.bf16.mxu0 0
      %604 = vmatpush1.bf16.msra.mxu0 0
      %605 = vmatprep.subr.bf16.mxu0 0
      %606 = vmatpush1.bf16.msra.mxu0 0
      %607 = vmatprep.subr.bf16.mxu0 0
      %608 = vmatpush1.bf16.msra.mxu0 0
      %609 = vmatprep.subr.bf16.mxu0 0
      %610 = vmatpush1.bf16.msra.mxu0 0
      %611 = vmatprep.subr.bf16.mxu0 0
      %612 = vmatpush1.bf16.msra.mxu0 0
      %613 = vmatprep.subr.bf16.mxu0 0
      %614 = vmatpush1.bf16.msra.mxu0 0
      %615 = vmatprep.mubr.bf16.mxu0 0
      %616 = vmatmul.mubr.bf16.gmra.mrb[0].mxu0 %v578
      %v617 = vpop.f32.mrb[0].mxu0
      %v618 = vadd.f32 0.0, %v617
      %v619 = vpop.f32.mrb[0].mxu0
      %v620 = vpop.f32.mrb[0].mxu0
      %v621 = vpop.f32.mrb[0].mxu0
      %622 = vdwg.mxu0
      %v623 = vadd.f32 %v568, %v618
      %s624 = scalar_lea.vmem %s1, 24
      %v625 = vld [vmem:[%s624] sm:$0xf]
      %626 = vrot.lane.b32.xlu0 %v302, 92
      %v627 = vpop.permute.xlu0 %626
      %628 = vrot.lane.b32.xlu0 %v303, 92
      %v629 = vpop.permute.xlu0 %628
      %vm630 = vcmask 752640
      %v631 = vsel %vm630, %v627, %v629
      %v633 = vsel %vm310, %v625, 0
      %v636 = vsel %vm314, %v631, 0
      %638 = vmatprep.subr.bf16.mxu0 0
      %639 = vmatpush1.bf16.msra.mxu0 %v636
      %640 = vmatprep.subr.bf16.mxu0 0
      %641 = vmatpush1.bf16.msra.mxu0 0
      %642 = vmatprep.subr.bf16.mxu0 0
      %643 = vmatpush1.bf16.msra.mxu0 0
      %644 = vmatprep.subr.bf16.mxu0 0
      %645 = vmatpush1.bf16.msra.mxu0 0
      %646 = vmatprep.subr.bf16.mxu0 0
      %647 = vmatpush1.bf16.msra.mxu0 0
      %648 = vmatprep.subr.bf16.mxu0 0
      %649 = vmatpush1.bf16.msra.mxu0 0
      %650 = vmatprep.subr.bf16.mxu0 0
      %651 = vmatpush1.bf16.msra.mxu0 0
      %652 = vmatprep.subr.bf16.mxu0 0
      %653 = vmatpush1.bf16.msra.mxu0 0
      %654 = vmatprep.subr.bf16.mxu0 0
      %655 = vmatpush1.bf16.msra.mxu0 0
      %656 = vmatprep.subr.bf16.mxu0 0
      %657 = vmatpush1.bf16.msra.mxu0 0
      %658 = vmatprep.subr.bf16.mxu0 0
      %659 = vmatpush1.bf16.msra.mxu0 0
      %660 = vmatprep.subr.bf16.mxu0 0
      %661 = vmatpush1.bf16.msra.mxu0 0
      %662 = vmatprep.subr.bf16.mxu0 0
      %663 = vmatpush1.bf16.msra.mxu0 0
      %664 = vmatprep.subr.bf16.mxu0 0
      %665 = vmatpush1.bf16.msra.mxu0 0
      %666 = vmatprep.subr.bf16.mxu0 0
      %667 = vmatpush1.bf16.msra.mxu0 0
      %668 = vmatprep.subr.bf16.mxu0 0
      %669 = vmatpush1.bf16.msra.mxu0 0
      %670 = vmatprep.mubr.bf16.mxu0 0
      %671 = vmatmul.mubr.bf16.gmra.mrb[0].mxu0 %v633
      %v672 = vpop.f32.mrb[0].mxu0
      %v673 = vadd.f32 0.0, %v672
      %v674 = vpop.f32.mrb[0].mxu0
      %v675 = vpop.f32.mrb[0].mxu0
      %v676 = vpop.f32.mrb[0].mxu0
      %677 = vdwg.mxu0
      %v678 = vadd.f32 %v623, %v673
      %s679 = scalar_lea.vmem %s1, 28
      %v680 = vld [vmem:[%s679] sm:$0xf]
      %681 = vrot.lane.b32.xlu0 %v302, 91
      %v682 = vpop.permute.xlu0 %681
      %683 = vrot.lane.b32.xlu0 %v303, 91
      %v684 = vpop.permute.xlu0 %683
      %vm685 = vcmask 744448
      %v686 = vsel %vm685, %v682, %v684
      %v688 = vsel %vm310, %v680, 0
      %v691 = vsel %vm314, %v686, 0
      %693 = vmatprep.subr.bf16.mxu0 0
      %694 = vmatpush1.bf16.msra.mxu0 %v691
      %695 = vmatprep.subr.bf16.mxu0 0
      %696 = vmatpush1.bf16.msra.mxu0 0
      %697 = vmatprep.subr.bf16.mxu0 0
      %698 = vmatpush1.bf16.msra.mxu0 0
      %699 = vmatprep.subr.bf16.mxu0 0
      %700 = vmatpush1.bf16.msra.mxu0 0
      %701 = vmatprep.subr.bf16.mxu0 0
      %702 = vmatpush1.bf16.msra.mxu0 0
      %703 = vmatprep.subr.bf16.mxu0 0
      %704 = vmatpush1.bf16.msra.mxu0 0
      %705 = vmatprep.subr.bf16.mxu0 0
      %706 = vmatpush1.bf16.msra.mxu0 0
      %707 = vmatprep.subr.bf16.mxu0 0
      %708 = vmatpush1.bf16.msra.mxu0 0
      %709 = vmatprep.subr.bf16.mxu0 0
      %710 = vmatpush1.bf16.msra.mxu0 0
      %711 = vmatprep.subr.bf16.mxu0 0
      %712 = vmatpush1.bf16.msra.mxu0 0
      %713 = vmatprep.subr.bf16.mxu0 0
      %714 = vmatpush1.bf16.msra.mxu0 0
      %715 = vmatprep.subr.bf16.mxu0 0
      %716 = vmatpush1.bf16.msra.mxu0 0
      %717 = vmatprep.subr.bf16.mxu0 0
      %718 = vmatpush1.bf16.msra.mxu0 0
      %719 = vmatprep.subr.bf16.mxu0 0
      %720 = vmatpush1.bf16.msra.mxu0 0
      %721 = vmatprep.subr.bf16.mxu0 0
      %722 = vmatpush1.bf16.msra.mxu0 0
      %723 = vmatprep.subr.bf16.mxu0 0
      %724 = vmatpush1.bf16.msra.mxu0 0
      %725 = vmatprep.mubr.bf16.mxu0 0
      %726 = vmatmul.mubr.bf16.gmra.mrb[0].mxu0 %v688
      %v727 = vpop.f32.mrb[0].mxu0
      %v728 = vadd.f32 0.0, %v727
      %v729 = vpop.f32.mrb[0].mxu0
      %v730 = vpop.f32.mrb[0].mxu0
      %v731 = vpop.f32.mrb[0].mxu0
      %732 = vdwg.mxu0
      %v733 = vadd.f32 %v678, %v728
      %s734 = scalar_lea.vmem %s1, 32
      %v735 = vld [vmem:[%s734] sm:$0xf]
      %736 = vrot.lane.b32.xlu0 %v302, 90
      %v737 = vpop.permute.xlu0 %736
      %738 = vrot.lane.b32.xlu0 %v303, 90
      %v739 = vpop.permute.xlu0 %738
      %vm740 = vcmask 736256
      %v741 = vsel %vm740, %v737, %v739
      %v743 = vsel %vm310, %v735, 0
      %v746 = vsel %vm314, %v741, 0
      %748 = vmatprep.subr.bf16.mxu0 0
      %749 = vmatpush1.bf16.msra.mxu0 %v746
      %750 = vmatprep.subr.bf16.mxu0 0
      %751 = vmatpush1.bf16.msra.mxu0 0
      %752 = vmatprep.subr.bf16.mxu0 0
      %753 = vmatpush1.bf16.msra.mxu0 0
      %754 = vmatprep.subr.bf16.mxu0 0
      %755 = vmatpush1.bf16.msra.mxu0 0
      %756 = vmatprep.subr.bf16.mxu0 0
      %757 = vmatpush1.bf16.msra.mxu0 0
      %758 = vmatprep.subr.bf16.mxu0 0
      %759 = vmatpush1.bf16.msra.mxu0 0
      %760 = vmatprep.subr.bf16.mxu0 0
      %761 = vmatpush1.bf16.msra.mxu0 0
      %762 = vmatprep.subr.bf16.mxu0 0
      %763 = vmatpush1.bf16.msra.mxu0 0
      %764 = vmatprep.subr.bf16.mxu0 0
      %765 = vmatpush1.bf16.msra.mxu0 0
      %766 = vmatprep.subr.bf16.mxu0 0
      %767 = vmatpush1.bf16.msra.mxu0 0
      %768 = vmatprep.subr.bf16.mxu0 0
      %769 = vmatpush1.bf16.msra.mxu0 0
      %770 = vmatprep.subr.bf16.mxu0 0
      %771 = vmatpush1.bf16.msra.mxu0 0
      %772 = vmatprep.subr.bf16.mxu0 0
      %773 = vmatpush1.bf16.msra.mxu0 0
      %774 = vmatprep.subr.bf16.mxu0 0
      %775 = vmatpush1.bf16.msra.mxu0 0
      %776 = vmatprep.subr.bf16.mxu0 0
      %777 = vmatpush1.bf16.msra.mxu0 0
      %778 = vmatprep.subr.bf16.mxu0 0
      %779 = vmatpush1.bf16.msra.mxu0 0
      %780 = vmatprep.mubr.bf16.mxu0 0
      %781 = vmatmul.mubr.bf16.gmra.mrb[0].mxu0 %v743
      %v782 = vpop.f32.mrb[0].mxu0
      %v783 = vadd.f32 0.0, %v782
      %v784 = vpop.f32.mrb[0].mxu0
      %v785 = vpop.f32.mrb[0].mxu0
      %v786 = vpop.f32.mrb[0].mxu0
      %787 = vdwg.mxu0
      %v788 = vadd.f32 %v733, %v783
      %789 = vst [vmem:[%s285] sm:$0xff] %v788
      %v790 = vld [vmem:[%s277] sm:$0x1]
      %v792 = vlaneseq
      %v793 = vshrl.u32 %v792, 7
      %v794 = vsub.s32 0, %v793
      %v795 = vrot.slane %v790, %v794
      %v797 = vmul.f32 %v788, %v795
      %p798 = scmp.eq.s32.totalorder %s22, 0
      // Predicated region
      $region33: #{decoder_block_forward.8} parent=31 // pred_check
        %p799 = pneg %p798
      $region34: #{decoder_block_forward.8} parent=31 // pred_check_branch
        %801 = sbr.rel (%p799) target = $region36
      $region35: #{decoder_block_forward.8} parent=31 // pred_region
        %vm802 = vcmask 7168
        %803 = vst.msk [vmem:[%s289] sm:$0xff] %vm802, 0.0
        %804 = vst.msk [vmem:[%s293] sm:$0xff] %vm802, 0.0
      $region36: #{decoder_block_forward.8} parent=31 // pred_fallthru
        _
      %v805 = vld [vmem:[%s289] sm:$0xff]
      %806 = vadd.xlane.f32.xlu0 %v797
      %v807 = vpop.xlane.xlu0 %806
      %v808 = vadd.f32 %v805, %v807
      %vm809 = vcmask 7168
      %810 = vst.msk [vmem:[%s289] sm:$0xff] %vm809, %v808
      %v811 = vld [vmem:[%s293] sm:$0xff]
      %v812 = vmul.f32 %v797, %v788
      %813 = vadd.xlane.f32.xlu0 %v812
      %v814 = vpop.xlane.xlu0 %813
      %v815 = vadd.f32 %v811, %v814
      %816 = vst.msk [vmem:[%s293] sm:$0xff] %vm809, %v815
      %p817 = scmp.lt.s32.totalorder %s22, 1
      %s818 = scalar_select %p817, %s22, 1
      %p819 = scmp.lt.s32.totalorder %s21, 2
      %s820 = scalar_select %p819, %s21, 2
      %s821 = smul.addr %s818, 3
      %s822 = sadd.s32 %s820, %s821
      %s823 = smul.addr %s822, 8
      %s824 = scalar_lea.vmem %s3, %s823
      %p825 = scmp.lt.s32.totalorder %s21, 2
      %s826 = scalar_select %p825, %s21, 2
      %s827 = smul.addr %s826, 8
      %s828 = scalar_lea.vmem %s4, %s827
      %p829 = scmp.lt.s32.totalorder %s21, 2
      %s830 = scalar_select %p829, %s21, 2
      %s831 = smul.addr %s830, 8
      %s832 = scalar_lea.vmem %s5, %s831
      // Predicated region
      $region37: #{decoder_block_forward.8} parent=31 // pred_check
        %p833 = pneg %p124
      $region38: #{decoder_block_forward.8} parent=31 // pred_check_branch
        %835 = sbr.rel (%p833) target = $region40
      $region39: #{decoder_block_forward.8} parent=31 // pred_region
        _
      $region40: #{decoder_block_forward.8} parent=31 // pred_fallthru
        _
      // Predicated region
      $region41: #{decoder_block_forward.8} parent=31 // pred_check
        %p836 = pneg %p150
      $region42: #{decoder_block_forward.8} parent=31 // pred_check_branch
        %838 = sbr.rel (%p836) target = $region44
      $region43: #{decoder_block_forward.8} parent=31 // pred_region
        _
      $region44: #{decoder_block_forward.8} parent=31 // pred_fallthru
        _
      // Predicated region
      $region45: #{decoder_block_forward.8} parent=31 // pred_check
        %p839 = pneg %p176
      $region46: #{decoder_block_forward.8} parent=31 // pred_check_branch
        %841 = sbr.rel (%p839) target = $region48
      $region47: #{decoder_block_forward.8} parent=31 // pred_region
        _
      $region48: #{decoder_block_forward.8} parent=31 // pred_fallthru
        _
    $region32: #{decoder_block_forward.8} parent=5 // pred_fallthru
      _
    %p842 = scmp.le.s32.totalorder 2, %s12
    // Predicated region
    $region49: #{decoder_block_forward.8} parent=5 // pred_check
      %p843 = pneg %p842
    $region50: #{decoder_block_forward.8} parent=5 // pred_check_branch
      %845 = sbr.rel (%p843) target = $region52
    $region51: #{decoder_block_forward.8} parent=5 // pred_region
      %s846 = ssub.s32 %s12, 2
      // Predicated region
      $region53: #{decoder_block_forward.8} parent=51 // pred_check
        %p847 = pneg %p130
      $region54: #{decoder_block_forward.8} parent=51 // pred_check_branch
        %849 = sbr.rel (%p847) target = $region56
      $region55: #{decoder_block_forward.8} parent=51 // pred_region
        %p850 = scmp.lt.s32.totalorder %s24, 1
        %s851 = scalar_select %p850, %s24, 1
        %p852 = scmp.lt.s32.totalorder %s23, 2
        %s853 = scalar_select %p852, %s23, 2
        %s854 = smul.addr %s851, 3
        %s855 = sadd.s32 %s853, %s854
        %s856 = smul.addr %s855, 8
        %s857 = scalar_lea.vmem %s3, %s856
      $region56: #{decoder_block_forward.8} parent=51 // pred_fallthru
        _
      // Predicated region
      $region57: #{decoder_block_forward.8} parent=51 // pred_check
        %p858 = pneg %p156
      $region58: #{decoder_block_forward.8} parent=51 // pred_check_branch
        %860 = sbr.rel (%p858) target = $region60
      $region59: #{decoder_block_forward.8} parent=51 // pred_region
        %p861 = scmp.lt.s32.totalorder %s23, 2
        %s862 = scalar_select %p861, %s23, 2
        %s863 = smul.addr %s862, 8
        %s864 = scalar_lea.vmem %s4, %s863
      $region60: #{decoder_block_forward.8} parent=51 // pred_fallthru
        _
      // Predicated region
      $region61: #{decoder_block_forward.8} parent=51 // pred_check
        %p865 = pneg %p182
      $region62: #{decoder_block_forward.8} parent=51 // pred_check_branch
        %867 = sbr.rel (%p865) target = $region64
      $region63: #{decoder_block_forward.8} parent=51 // pred_region
        %p868 = scmp.lt.s32.totalorder %s23, 2
        %s869 = scalar_select %p868, %s23, 2
        %s870 = smul.addr %s869, 8
        %s871 = scalar_lea.vmem %s5, %s870
      $region64: #{decoder_block_forward.8} parent=51 // pred_fallthru
        _
    $region52: #{decoder_block_forward.8} parent=5 // pred_fallthru
      _
  $region6: #{decoder_block_forward.8} parent=0 // loop_footer
    %s16 = sadd.s32 1, %s12
  $region7: #{decoder_block_forward.8} parent=0 // loop_footer_branch
    %11 = sbr.rel target = $region3
  $region8: #{decoder_block_forward.8} parent=0 // loop_exit
    _

// kernel: decoder_block_forward.9
$region0: #{decoder_block_forward.9}
  #allocation0 [shape = 'u32[]', space=smem, size = 0x4, offset = 0x4, fixed_abs, tag = 'smem constant byte address 0x4 - core index']
  #allocation1 [shape = 'u32[144,128]{1,0:T(1,128)}', space=vmem, size = 0x12000, scoped, tag = 'internal scratch']
  #allocation2 [shape = 'f32[1,1]{1,0:T(1,128)S(1)}', space=vmem, size = 0x200, scoped, tag = 'scoped memory for decoder_block_forward.9']
  %s0 = inlined_call_operand.vmem [shape: f32[2,8,384], index: 0, kind: input, shape index: {}]
  %s1 = inlined_call_operand.vmem [shape: f32[8,1], index: 1, kind: input, shape index: {}]
  %s2 = inlined_call_operand.vmem [shape: f32[8,1], index: 2, kind: input, shape index: {}]
  %s3 = inlined_call_operand.vmem [shape: f32[1,384], index: 3, kind: input, shape index: {}]
  %s4 = inlined_call_operand.vmem [shape: f32[8,1], index: 4, kind: input, shape index: {}]
  %s5 = inlined_call_operand.<no memory space> [shape: f32[1,1], index: 5, kind: input, shape index: {}]
  %s6 = inlined_call_operand.vmem [shape: f32[2,8,384], index: 6, kind: output, shape index: {0}]
  %s7 = inlined_call_operand.vmem [shape: f32[2,1,384], index: 7, kind: output, shape index: {1}]
  %8 = xla_tuple %s6, %s7
  %s9 = sld [smem:[#allocation0]]
  $region65: #{decoder_block_forward.9} parent=0
    _
  %s11 = ssub.s32 1, %s9
  %s12 = scalar_select 0, %s11, %s9
  %v13 = vstv %s5
  %14 = vst [vmem:[#allocation2] sm:$0x1] %v13
  loop: start=0, step=1, limit=8
  $region2: #{decoder_block_forward.9} parent=0 // loop_pre_header
    _
  $region3: #{decoder_block_forward.9} parent=0 // loop_header
    %s16 = sphi 0, %s20
    %p17 = scmp.ge.s32.totalorder %s16, 8
    %s23 = sphi 0, %s35
    %s24 = sphi 0, %s31
    %s25 = sphi 0, %s23
    %s26 = sphi 0, %s24
    %s27 = sphi 0, %s25
    %s28 = sphi 0, %s26
    %s40 = sphi 0, %s42
    %s43 = sphi 0, %s40
    %s44 = sphi 0, %s43
    %s60 = sphi 0, %s44
    %s64 = sphi 0, %s64
    %s66 = sphi 0, %s64
    %s67 = sphi 0, %s66
    %s81 = sphi 0, %s67
    %s85 = sphi 0, %s85
    %s87 = sphi 0, %s85
    %s88 = sphi 0, %s87
    %s102 = sphi 0, %s88
    %s108 = sphi 0, %s110
    %s111 = sphi 0, %s108
    %s112 = sphi 0, %s111
    %s128 = sphi 0, %s112
    %s132 = sphi 0, %s132
    %s134 = sphi 0, %s132
    %s135 = sphi 0, %s134
    %s149 = sphi 0, %s135
    %s153 = sphi 0, %s153
    %s155 = sphi 0, %s153
    %s156 = sphi 0, %s155
    %s170 = sphi 0, %s156
    %s178 = sphi 0, %s180
    %s181 = sphi 0, %s178
    %s182 = sphi 0, %s181
    %s198 = sphi 0, %s182
    %s206 = sphi 0, %s208
    %s209 = sphi 0, %s206
    %s210 = sphi 0, %s209
    %s226 = sphi 0, %s210
  $region4: #{decoder_block_forward.9} parent=0 // loop_header_branch
    %19 = sbr.rel (%p17) target = $region8
  $region5: #{decoder_block_forward.9} parent=0 // loop_body
    %s21 = ssub.s32 %s16, 1
    %s22 = ssub.s32 %s16, 2
    %s29 = sadd.s32 1, %s24
    %p30 = scmp.ge.s32.totalorder %s29, 2
    %s31 = scalar_select %p30, 0, %s29
    %s32 = sadd.s32 1, %s23
    %s33 = scalar_select %p30, %s32, %s23
    %p34 = scmp.ge.s32.totalorder %s33, 3
    %s35 = scalar_select %p34, 0, %s33
    %s36 = ssub.s32 %s24, %s31
    %s37 = ssub.s32 %s23, %s35
    %s38 = sor.u32 %s36, %s37
    %p39 = scmp.eq.s32.totalorder %s38, 0
    %s41 = sadd.s32 %s40, 1
    %s42 = scalar_select %p39, %s40, %s41
    %p45 = pneg %p39
    %p46 = scmp.eq.s32.totalorder %s16, 5
    %p47 = por %p45, %p46
    %p48 = scmp.ne.s32.totalorder %s40, %s43
    %p49 = scmp.eq.s32.totalorder %s16, 0
    %p50 = por %p48, %p49
    %p51 = scmp.ne.s32.totalorder %s40, %s43
    %p52 = scmp.eq.s32.totalorder %s21, 5
    %p53 = por %p51, %p52
    %p54 = scmp.ne.s32.totalorder %s43, %s44
    %p55 = scmp.eq.s32.totalorder %s21, 0
    %p56 = por %p54, %p55
    %p57 = scmp.ne.s32.totalorder %s43, %s44
    %p58 = scmp.eq.s32.totalorder %s22, 5
    %p59 = por %p57, %p58
    %p61 = scmp.ne.s32.totalorder %s44, %s60
    %p62 = scmp.eq.s32.totalorder %s22, 0
    %p63 = por %p61, %p62
    %s65 = sadd.s32 %s64, 1
    %p68 = scmp.eq.s32.totalorder %s16, 5
    %p69 = scmp.ne.s32.totalorder %s64, %s66
    %p70 = scmp.eq.s32.totalorder %s16, 0
    %p71 = por %p69, %p70
    %p72 = scmp.ne.s32.totalorder %s64, %s66
    %p73 = scmp.eq.s32.totalorder %s21, 5
    %p74 = por %p72, %p73
    %p75 = scmp.ne.s32.totalorder %s66, %s67
    %p76 = scmp.eq.s32.totalorder %s21, 0
    %p77 = por %p75, %p76
    %p78 = scmp.ne.s32.totalorder %s66, %s67
    %p79 = scmp.eq.s32.totalorder %s22, 5
    %p80 = por %p78, %p79
    %p82 = scmp.ne.s32.totalorder %s67, %s81
    %p83 = scmp.eq.s32.totalorder %s22, 0
    %p84 = por %p82, %p83
    %s86 = sadd.s32 %s85, 1
    %p89 = scmp.eq.s32.totalorder %s16, 5
    %p90 = scmp.ne.s32.totalorder %s85, %s87
    %p91 = scmp.eq.s32.totalorder %s16, 0
    %p92 = por %p90, %p91
    %p93 = scmp.ne.s32.totalorder %s85, %s87
    %p94 = scmp.eq.s32.totalorder %s21, 5
    %p95 = por %p93, %p94
    %p96 = scmp.ne.s32.totalorder %s87, %s88
    %p97 = scmp.eq.s32.totalorder %s21, 0
    %p98 = por %p96, %p97
    %p99 = scmp.ne.s32.totalorder %s87, %s88
    %p100 = scmp.eq.s32.totalorder %s22, 5
    %p101 = por %p99, %p100
    %p103 = scmp.ne.s32.totalorder %s88, %s102
    %p104 = scmp.eq.s32.totalorder %s22, 0
    %p105 = por %p103, %p104
    %s106 = ssub.s32 %s23, %s35
    %p107 = scmp.eq.s32.totalorder %s106, 0
    %s109 = sadd.s32 %s108, 1
    %s110 = scalar_select %p107, %s108, %s109
    %p113 = pneg %p107
    %p114 = scmp.eq.s32.totalorder %s16, 5
    %p115 = por %p113, %p114
    %p116 = scmp.ne.s32.totalorder %s108, %s111
    %p117 = scmp.eq.s32.totalorder %s16, 0
    %p118 = por %p116, %p117
    %p119 = scmp.ne.s32.totalorder %s108, %s111
    %p120 = scmp.eq.s32.totalorder %s21, 5
    %p121 = por %p119, %p120
    %p122 = scmp.ne.s32.totalorder %s111, %s112
    %p123 = scmp.eq.s32.totalorder %s21, 0
    %p124 = por %p122, %p123
    %p125 = scmp.ne.s32.totalorder %s111, %s112
    %p126 = scmp.eq.s32.totalorder %s22, 5
    %p127 = por %p125, %p126
    %p129 = scmp.ne.s32.totalorder %s112, %s128
    %p130 = scmp.eq.s32.totalorder %s22, 0
    %p131 = por %p129, %p130
    %s133 = sadd.s32 %s132, 1
    %p136 = scmp.eq.s32.totalorder %s16, 5
    %p137 = scmp.ne.s32.totalorder %s132, %s134
    %p138 = scmp.eq.s32.totalorder %s16, 0
    %p139 = por %p137, %p138
    %p140 = scmp.ne.s32.totalorder %s132, %s134
    %p141 = scmp.eq.s32.totalorder %s21, 5
    %p142 = por %p140, %p141
    %p143 = scmp.ne.s32.totalorder %s134, %s135
    %p144 = scmp.eq.s32.totalorder %s21, 0
    %p145 = por %p143, %p144
    %p146 = scmp.ne.s32.totalorder %s134, %s135
    %p147 = scmp.eq.s32.totalorder %s22, 5
    %p148 = por %p146, %p147
    %p150 = scmp.ne.s32.totalorder %s135, %s149
    %p151 = scmp.eq.s32.totalorder %s22, 0
    %p152 = por %p150, %p151
    %s154 = sadd.s32 %s153, 1
    %p157 = scmp.eq.s32.totalorder %s16, 5
    %p158 = scmp.ne.s32.totalorder %s153, %s155
    %p159 = scmp.eq.s32.totalorder %s16, 0
    %p160 = por %p158, %p159
    %p161 = scmp.ne.s32.totalorder %s153, %s155
    %p162 = scmp.eq.s32.totalorder %s21, 5
    %p163 = por %p161, %p162
    %p164 = scmp.ne.s32.totalorder %s155, %s156
    %p165 = scmp.eq.s32.totalorder %s21, 0
    %p166 = por %p164, %p165
    %p167 = scmp.ne.s32.totalorder %s155, %s156
    %p168 = scmp.eq.s32.totalorder %s22, 5
    %p169 = por %p167, %p168
    %p171 = scmp.ne.s32.totalorder %s156, %s170
    %p172 = scmp.eq.s32.totalorder %s22, 0
    %p173 = por %p171, %p172
    %s174 = ssub.s32 %s24, %s31
    %s175 = ssub.s32 %s23, %s35
    %s176 = sor.u32 %s174, %s175
    %p177 = scmp.eq.s32.totalorder %s176, 0
    %s179 = sadd.s32 %s178, 1
    %s180 = scalar_select %p177, %s178, %s179
    %p183 = pneg %p177
    %p184 = scmp.eq.s32.totalorder %s16, 5
    %p185 = por %p183, %p184
    %p186 = scmp.ne.s32.totalorder %s178, %s181
    %p187 = scmp.eq.s32.totalorder %s16, 0
    %p188 = por %p186, %p187
    %p189 = scmp.ne.s32.totalorder %s178, %s181
    %p190 = scmp.eq.s32.totalorder %s21, 5
    %p191 = por %p189, %p190
    %p192 = scmp.ne.s32.totalorder %s181, %s182
    %p193 = scmp.eq.s32.totalorder %s21, 0
    %p194 = por %p192, %p193
    %p195 = scmp.ne.s32.totalorder %s181, %s182
    %p196 = scmp.eq.s32.totalorder %s22, 5
    %p197 = por %p195, %p196
    %p199 = scmp.ne.s32.totalorder %s182, %s198
    %p200 = scmp.eq.s32.totalorder %s22, 0
    %p201 = por %p199, %p200
    %s202 = ssub.s32 %s24, %s31
    %s203 = ssub.s32 %s23, %s35
    %s204 = sor.u32 %s202, %s203
    %p205 = scmp.eq.s32.totalorder %s204, 0
    %s207 = sadd.s32 %s206, 1
    %s208 = scalar_select %p205, %s206, %s207
    %p211 = pneg %p205
    %p212 = scmp.eq.s32.totalorder %s16, 5
    %p213 = por %p211, %p212
    %p214 = scmp.ne.s32.totalorder %s206, %s209
    %p215 = scmp.eq.s32.totalorder %s16, 0
    %p216 = por %p214, %p215
    %p217 = scmp.ne.s32.totalorder %s206, %s209
    %p218 = scmp.eq.s32.totalorder %s21, 5
    %p219 = por %p217, %p218
    %p220 = scmp.ne.s32.totalorder %s209, %s210
    %p221 = scmp.eq.s32.totalorder %s21, 0
    %p222 = por %p220, %p221
    %p223 = scmp.ne.s32.totalorder %s209, %s210
    %p224 = scmp.eq.s32.totalorder %s22, 5
    %p225 = por %p223, %p224
    %p227 = scmp.ne.s32.totalorder %s210, %s226
    %p228 = scmp.eq.s32.totalorder %s22, 0
    %p229 = por %p227, %p228
    %p230 = scmp.le.s32.totalorder 1, %s16
    %p231 = scmp.lt.s32.totalorder %s16, 7
    %p232 = pnand %p230, %p231
    %p233 = pneg %p232
    // Predicated region
    $region9: #{decoder_block_forward.9} parent=5 // pred_check
      _
    $region10: #{decoder_block_forward.9} parent=5 // pred_check_branch
      %235 = sbr.rel (%p232) target = $region12
    $region11: #{decoder_block_forward.9} parent=5 // pred_region
      %s236 = ssub.s32 %s16, 1
      // Predicated region
      $region13: #{decoder_block_forward.9} parent=11 // pred_check
        %p237 = pneg %p77
      $region14: #{decoder_block_forward.9} parent=11 // pred_check_branch
        %239 = sbr.rel (%p237) target = $region16
      $region15: #{decoder_block_forward.9} parent=11 // pred_region
        _
      $region16: #{decoder_block_forward.9} parent=11 // pred_fallthru
        _
      // Predicated region
      $region17: #{decoder_block_forward.9} parent=11 // pred_check
        %p240 = pneg %p98
      $region18: #{decoder_block_forward.9} parent=11 // pred_check_branch
        %242 = sbr.rel (%p240) target = $region20
      $region19: #{decoder_block_forward.9} parent=11 // pred_region
        _
      $region20: #{decoder_block_forward.9} parent=11 // pred_fallthru
        _
      // Predicated region
      $region21: #{decoder_block_forward.9} parent=11 // pred_check
        %p243 = pneg %p145
      $region22: #{decoder_block_forward.9} parent=11 // pred_check_branch
        %245 = sbr.rel (%p243) target = $region24
      $region23: #{decoder_block_forward.9} parent=11 // pred_region
        _
      $region24: #{decoder_block_forward.9} parent=11 // pred_fallthru
        _
      // Predicated region
      $region25: #{decoder_block_forward.9} parent=11 // pred_check
        %p246 = pneg %p166
      $region26: #{decoder_block_forward.9} parent=11 // pred_check_branch
        %248 = sbr.rel (%p246) target = $region28
      $region27: #{decoder_block_forward.9} parent=11 // pred_region
        _
      $region28: #{decoder_block_forward.9} parent=11 // pred_fallthru
        _
    $region12: #{decoder_block_forward.9} parent=5 // pred_fallthru
      _
    %p249 = scmp.lt.s32.totalorder %s16, 6
    // Predicated region
    $region29: #{decoder_block_forward.9} parent=5 // pred_check
      %p250 = pneg %p249
    $region30: #{decoder_block_forward.9} parent=5 // pred_check_branch
      %252 = sbr.rel (%p250) target = $region32
    $region31: #{decoder_block_forward.9} parent=5 // pred_region
      // Predicated region
      $region33: #{decoder_block_forward.9} parent=31 // pred_check
        %p253 = pneg %p50
      $region34: #{decoder_block_forward.9} parent=31 // pred_check_branch
        %255 = sbr.rel (%p253) target = $region36
      $region35: #{decoder_block_forward.9} parent=31 // pred_region
        %p256 = scmp.lt.s32.totalorder %s24, 1
        %s257 = scalar_select %p256, %s24, 1
        %p258 = scmp.lt.s32.totalorder %s23, 2
        %s259 = scalar_select %p258, %s23, 2
        %s260 = smul.addr %s257, 3
        %s261 = sadd.s32 %s259, %s260
        %s262 = smul.addr %s261, 8
        %s263 = scalar_lea.vmem %s0, %s262
      $region36: #{decoder_block_forward.9} parent=31 // pred_fallthru
        _
      // Predicated region
      $region37: #{decoder_block_forward.9} parent=31 // pred_check
        %p264 = pneg %p118
      $region38: #{decoder_block_forward.9} parent=31 // pred_check_branch
        %266 = sbr.rel (%p264) target = $region40
      $region39: #{decoder_block_forward.9} parent=31 // pred_region
        %p267 = scmp.lt.s32.totalorder %s23, 2
        %s268 = scalar_select %p267, %s23, 2
        %s269 = scalar_lea.vmem %s3, %s268
      $region40: #{decoder_block_forward.9} parent=31 // pred_fallthru
        _
    $region32: #{decoder_block_forward.9} parent=5 // pred_fallthru
      _
    %p270 = scmp.le.s32.totalorder 1, %s16
    %p271 = scmp.lt.s32.totalorder %s16, 7
    %p272 = pnand %p270, %p271
    %p273 = pneg %p272
    // Predicated region
    $region41: #{decoder_block_forward.9} parent=5 // pred_check
      _
    $region42: #{decoder_block_forward.9} parent=5 // pred_check_branch
      %275 = sbr.rel (%p272) target = $region44
    $region43: #{decoder_block_forward.9} parent=5 // pred_region
      %s276 = ssub.s32 %s16, 1
      %p277 = scmp.lt.s32.totalorder %s26, 1
      %s278 = scalar_select %p277, %s26, 1
      %p279 = scmp.lt.s32.totalorder %s25, 2
      %s280 = scalar_select %p279, %s25, 2
      %s281 = smul.addr %s278, 3
      %s282 = sadd.s32 %s280, %s281
      %s283 = smul.addr %s282, 8
      %s284 = scalar_lea.vmem %s0, %s283
      %p285 = pneg %p56
      %p286 = pneg %p53
      %p287 = pneg %p77
      %p288 = pneg %p74
      %p289 = pneg %p98
      %p290 = pneg %p95
      %p291 = scmp.lt.s32.totalorder %s25, 2
      %s292 = scalar_select %p291, %s25, 2
      %s293 = scalar_lea.vmem %s3, %s292
      %p294 = pneg %p124
      %p295 = pneg %p121
      %p296 = pneg %p145
      %p297 = pneg %p142
      %p298 = pneg %p166
      %p299 = pneg %p163
      %p300 = pneg %p194
      %p301 = pneg %p191
      %p302 = scmp.lt.s32.totalorder %s26, 1
      %s303 = scalar_select %p302, %s26, 1
      %p304 = scmp.lt.s32.totalorder %s25, 2
      %s305 = scalar_select %p304, %s25, 2
      %s306 = smul.addr %s303, 3
      %s307 = sadd.s32 %s305, %s306
      %s308 = smul.addr %s307, 8
      %s309 = scalar_lea.vmem %s6, %s308
      %p310 = pneg %p222
      %p311 = pneg %p219
      %p312 = scmp.lt.s32.totalorder %s26, 1
      %s313 = scalar_select %p312, %s26, 1
      %p314 = scmp.lt.s32.totalorder %s25, 2
      %s315 = scalar_select %p314, %s25, 2
      %s316 = smul.addr %s313, 3
      %s317 = sadd.s32 %s315, %s316
      %s318 = scalar_lea.vmem %s7, %s317
      %p319 = scmp.lt.s32.totalorder %s26, 1
      %s320 = scalar_select %p319, %s26, 1
      %p321 = scmp.lt.s32.totalorder %s25, 2
      %s322 = scalar_select %p321, %s25, 2
      %s323 = smul.addr %s320, 3
      %s324 = sadd.s32 %s322, %s323
      %s325 = smul.addr %s324, 8
      %s326 = scalar_lea.vmem %s0, %s325
      %p327 = scmp.lt.s32.totalorder %s25, 2
      %s328 = scalar_select %p327, %s25, 2
      %s329 = scalar_lea.vmem %s3, %s328
      %p330 = scmp.lt.s32.totalorder %s26, 1
      %s331 = scalar_select %p330, %s26, 1
      %p332 = scmp.lt.s32.totalorder %s25, 2
      %s333 = scalar_select %p332, %s25, 2
      %s334 = smul.addr %s331, 3
      %s335 = sadd.s32 %s333, %s334
      %s336 = smul.addr %s335, 8
      %s337 = scalar_lea.vmem %s6, %s336
      %p338 = scmp.lt.s32.totalorder %s26, 1
      %s339 = scalar_select %p338, %s26, 1
      %p340 = scmp.lt.s32.totalorder %s25, 2
      %s341 = scalar_select %p340, %s25, 2
      %s342 = smul.addr %s339, 3
      %s343 = sadd.s32 %s341, %s342
      %s344 = scalar_lea.vmem %s7, %s343
      %v345 = vld [vmem:[%s326] sm:$0xff]
      %v346 = vld [vmem:[%s1] sm:$0xff]
      %348 = vset.pattern.permute.xlu0 0
      %349 = vperm.xlu0 %348, %v346
      %v350 = vpop.permute.xlu0 %349
      %v352 = vmul.f32 %v345, %v350
      %v353 = vld [vmem:[%s2] sm:$0xff]
      %355 = vset.pattern.permute.xlu0 0
      %356 = vperm.xlu0 %355, %v353
      %v357 = vpop.permute.xlu0 %356
      %v359 = vadd.f32 %v352, %v357
      %v360 = vmax.f32 %v359, 0.0
      %v361 = vld [vmem:[%s329] sm:$0x1]
      %v363 = vlaneseq
      %v364 = vshrl.u32 %v363, 7
      %v365 = vsub.s32 0, %v364
      %v366 = vrot.slane %v361, %v365
      %v368 = vmul.f32 %v360, %v366
      %369 = vst [vmem:[%s337] sm:$0xff] %v368
      %v370 = vld [vmem:[%s4] sm:$0xff]
      %372 = vset.pattern.permute.xlu0 0
      %373 = vperm.xlu0 %372, %v370
      %v374 = vpop.permute.xlu0 %373
      %v376 = vmul.f32 %v368, %v374
      %v377 = vrot.slane %v376, 4
      %v378 = vadd.f32 %v376, %v377
      %v379 = vrot.slane %v378, 2
      %v380 = vadd.f32 %v378, %v379
      %v381 = vrot.slane %v380, 1
      %v382 = vadd.f32 %v380, %v381
      %v383 = vld [vmem:[#allocation2] sm:$0x1]
      %385 = vset.pattern.permute.xlu0 0
      %386 = vperm.xlu0 %385, %v383
      %v387 = vpop.permute.xlu0 %386
      %v389 = vlaneseq
      %v390 = vshrl.u32 %v389, 7
      %v391 = vsub.s32 0, %v390
      %v392 = vrot.slane %v387, %v391
      %v393 = vadd.f32 %v382, %v392
      %394 = vst [vmem:[%s344] sm:$0x1] %v393
      %p395 = scmp.lt.s32.totalorder %s26, 1
      %s396 = scalar_select %p395, %s26, 1
      %p397 = scmp.lt.s32.totalorder %s25, 2
      %s398 = scalar_select %p397, %s25, 2
      %s399 = smul.addr %s396, 3
      %s400 = sadd.s32 %s398, %s399
      %s401 = smul.addr %s400, 8
      %s402 = scalar_lea.vmem %s6, %s401
      %p403 = scmp.lt.s32.totalorder %s26, 1
      %s404 = scalar_select %p403, %s26, 1
      %p405 = scmp.lt.s32.totalorder %s25, 2
      %s406 = scalar_select %p405, %s25, 2
      %s407 = smul.addr %s404, 3
      %s408 = sadd.s32 %s406, %s407
      %s409 = scalar_lea.vmem %s7, %s408
      // Predicated region
      $region45: #{decoder_block_forward.9} parent=43 // pred_check
        %p410 = pneg %p191
      $region46: #{decoder_block_forward.9} parent=43 // pred_check_branch
        %412 = sbr.rel (%p410) target = $region48
      $region47: #{decoder_block_forward.9} parent=43 // pred_region
        _
      $region48: #{decoder_block_forward.9} parent=43 // pred_fallthru
        _
      // Predicated region
      $region49: #{decoder_block_forward.9} parent=43 // pred_check
        %p413 = pneg %p219
      $region50: #{decoder_block_forward.9} parent=43 // pred_check_branch
        %415 = sbr.rel (%p413) target = $region52
      $region51: #{decoder_block_forward.9} parent=43 // pred_region
        _
      $region52: #{decoder_block_forward.9} parent=43 // pred_fallthru
        _
    $region44: #{decoder_block_forward.9} parent=5 // pred_fallthru
      _
    %p416 = scmp.le.s32.totalorder 2, %s16
    // Predicated region
    $region53: #{decoder_block_forward.9} parent=5 // pred_check
      %p417 = pneg %p416
    $region54: #{decoder_block_forward.9} parent=5 // pred_check_branch
      %419 = sbr.rel (%p417) target = $region56
    $region55: #{decoder_block_forward.9} parent=5 // pred_region
      %s420 = ssub.s32 %s16, 2
      // Predicated region
      $region57: #{decoder_block_forward.9} parent=55 // pred_check
        %p421 = pneg %p197
      $region58: #{decoder_block_forward.9} parent=55 // pred_check_branch
        %423 = sbr.rel (%p421) target = $region60
      $region59: #{decoder_block_forward.9} parent=55 // pred_region
        %p424 = scmp.lt.s32.totalorder %s28, 1
        %s425 = scalar_select %p424, %s28, 1
        %p426 = scmp.lt.s32.totalorder %s27, 2
        %s427 = scalar_select %p426, %s27, 2
        %s428 = smul.addr %s425, 3
        %s429 = sadd.s32 %s427, %s428
        %s430 = smul.addr %s429, 8
        %s431 = scalar_lea.vmem %s6, %s430
      $region60: #{decoder_block_forward.9} parent=55 // pred_fallthru
        _
      // Predicated region
      $region61: #{decoder_block_forward.9} parent=55 // pred_check
        %p432 = pneg %p225
      $region62: #{decoder_block_forward.9} parent=55 // pred_check_branch
        %434 = sbr.rel (%p432) target = $region64
      $region63: #{decoder_block_forward.9} parent=55 // pred_region
        %p435 = scmp.lt.s32.totalorder %s28, 1
        %s436 = scalar_select %p435, %s28, 1
        %p437 = scmp.lt.s32.totalorder %s27, 2
        %s438 = scalar_select %p437, %s27, 2
        %s439 = smul.addr %s436, 3
        %s440 = sadd.s32 %s438, %s439
        %s441 = scalar_lea.vmem %s7, %s440
      $region64: #{decoder_block_forward.9} parent=55 // pred_fallthru
        _
    $region56: #{decoder_block_forward.9} parent=5 // pred_fallthru
      _
  $region6: #{decoder_block_forward.9} parent=0 // loop_footer
    %s20 = sadd.s32 1, %s16
  $region7: #{decoder_block_forward.9} parent=0 // loop_footer_branch
    %15 = sbr.rel target = $region3
  $region8: #{decoder_block_forward.9} parent=0 // loop_exit
    _

// kernel: decoder_block_forward.6
$region0: #{decoder_block_forward.6}
  #allocation0 [shape = 'u32[]', space=smem, size = 0x4, offset = 0x4, fixed_abs, tag = 'smem constant byte address 0x4 - core index']
  #allocation1 [shape = 'u32[144,128]{1,0:T(1,128)}', space=vmem, size = 0x12000, scoped, tag = 'internal scratch']
  %s0 = inlined_call_operand.vmem [shape: bf16[2,3,8,166], index: 0, kind: input, shape index: {}]
  %s1 = inlined_call_operand.vmem [shape: bf16[2,3,8,166], index: 1, kind: input, shape index: {}]
  %s2 = inlined_call_operand.vmem [shape: bf16[9,8,8], index: 2, kind: input, shape index: {}]
  %s3 = inlined_call_operand.vmem [shape: bf16[9,8,8], index: 3, kind: input, shape index: {}]
  %s4 = inlined_call_operand.vmem [shape: f32[1,384], index: 4, kind: input, shape index: {}]
  %s5 = inlined_call_operand.vmem [shape: f32[2,8,384], index: 5, kind: output, shape index: {0}]
  %s6 = inlined_call_operand.vmem [shape: f32[3,8,1], index: 6, kind: output, shape index: {1}]
  %s7 = inlined_call_operand.vmem [shape: f32[3,8,1], index: 7, kind: output, shape index: {2}]
  %8 = xla_tuple %s5, %s6, %s7
  %s9 = sld [smem:[#allocation0]]
  $region73: #{decoder_block_forward.6} parent=0
    _
  %s11 = ssub.s32 1, %s9
  %s12 = scalar_select 0, %s11, %s9
  loop: start=0, step=1, limit=8
  $region2: #{decoder_block_forward.6} parent=0 // loop_pre_header
    _
  $region3: #{decoder_block_forward.6} parent=0 // loop_header
    %s14 = sphi 0, %s18
    %p15 = scmp.ge.s32.totalorder %s14, 8
    %s21 = sphi 0, %s33
    %s22 = sphi 0, %s29
    %s23 = sphi 0, %s21
    %s24 = sphi 0, %s22
    %s25 = sphi 0, %s23
    %s26 = sphi 0, %s24
    %s38 = sphi 0, %s40
    %s41 = sphi 0, %s38
    %s42 = sphi 0, %s41
    %s58 = sphi 0, %s42
    %s66 = sphi 0, %s68
    %s69 = sphi 0, %s66
    %s70 = sphi 0, %s69
    %s86 = sphi 0, %s70
    %s90 = sphi 0, %s90
    %s92 = sphi 0, %s90
    %s93 = sphi 0, %s92
    %s107 = sphi 0, %s93
    %s111 = sphi 0, %s111
    %s113 = sphi 0, %s111
    %s114 = sphi 0, %s113
    %s128 = sphi 0, %s114
    %s134 = sphi 0, %s136
    %s137 = sphi 0, %s134
    %s138 = sphi 0, %s137
    %s154 = sphi 0, %s138
    %s162 = sphi 0, %s164
    %s165 = sphi 0, %s162
    %s166 = sphi 0, %s165
    %s182 = sphi 0, %s166
    %s188 = sphi 0, %s190
    %s191 = sphi 0, %s188
    %s192 = sphi 0, %s191
    %s208 = sphi 0, %s192
    %s214 = sphi 0, %s216
    %s217 = sphi 0, %s214
    %s218 = sphi 0, %s217
    %s234 = sphi 0, %s218
  $region4: #{decoder_block_forward.6} parent=0 // loop_header_branch
    %17 = sbr.rel (%p15) target = $region8
  $region5: #{decoder_block_forward.6} parent=0 // loop_body
    %s19 = ssub.s32 %s14, 1
    %s20 = ssub.s32 %s14, 2
    %s27 = sadd.s32 1, %s22
    %p28 = scmp.ge.s32.totalorder %s27, 2
    %s29 = scalar_select %p28, 0, %s27
    %s30 = sadd.s32 1, %s21
    %s31 = scalar_select %p28, %s30, %s21
    %p32 = scmp.ge.s32.totalorder %s31, 3
    %s33 = scalar_select %p32, 0, %s31
    %s34 = ssub.s32 %s22, %s29
    %s35 = ssub.s32 %s21, %s33
    %s36 = sor.u32 %s34, %s35
    %p37 = scmp.eq.s32.totalorder %s36, 0
    %s39 = sadd.s32 %s38, 1
    %s40 = scalar_select %p37, %s38, %s39
    %p43 = pneg %p37
    %p44 = scmp.eq.s32.totalorder %s14, 5
    %p45 = por %p43, %p44
    %p46 = scmp.ne.s32.totalorder %s38, %s41
    %p47 = scmp.eq.s32.totalorder %s14, 0
    %p48 = por %p46, %p47
    %p49 = scmp.ne.s32.totalorder %s38, %s41
    %p50 = scmp.eq.s32.totalorder %s19, 5
    %p51 = por %p49, %p50
    %p52 = scmp.ne.s32.totalorder %s41, %s42
    %p53 = scmp.eq.s32.totalorder %s19, 0
    %p54 = por %p52, %p53
    %p55 = scmp.ne.s32.totalorder %s41, %s42
    %p56 = scmp.eq.s32.totalorder %s20, 5
    %p57 = por %p55, %p56
    %p59 = scmp.ne.s32.totalorder %s42, %s58
    %p60 = scmp.eq.s32.totalorder %s20, 0
    %p61 = por %p59, %p60
    %s62 = ssub.s32 %s22, %s29
    %s63 = ssub.s32 %s21, %s33
    %s64 = sor.u32 %s62, %s63
    %p65 = scmp.eq.s32.totalorder %s64, 0
    %s67 = sadd.s32 %s66, 1
    %s68 = scalar_select %p65, %s66, %s67
    %p71 = pneg %p65
    %p72 = scmp.eq.s32.totalorder %s14, 5
    %p73 = por %p71, %p72
    %p74 = scmp.ne.s32.totalorder %s66, %s69
    %p75 = scmp.eq.s32.totalorder %s14, 0
    %p76 = por %p74, %p75
    %p77 = scmp.ne.s32.totalorder %s66, %s69
    %p78 = scmp.eq.s32.totalorder %s19, 5
    %p79 = por %p77, %p78
    %p80 = scmp.ne.s32.totalorder %s69, %s70
    %p81 = scmp.eq.s32.totalorder %s19, 0
    %p82 = por %p80, %p81
    %p83 = scmp.ne.s32.totalorder %s69, %s70
    %p84 = scmp.eq.s32.totalorder %s20, 5
    %p85 = por %p83, %p84
    %p87 = scmp.ne.s32.totalorder %s70, %s86
    %p88 = scmp.eq.s32.totalorder %s20, 0
    %p89 = por %p87, %p88
    %s91 = sadd.s32 %s90, 1
    %p94 = scmp.eq.s32.totalorder %s14, 5
    %p95 = scmp.ne.s32.totalorder %s90, %s92
    %p96 = scmp.eq.s32.totalorder %s14, 0
    %p97 = por %p95, %p96
    %p98 = scmp.ne.s32.totalorder %s90, %s92
    %p99 = scmp.eq.s32.totalorder %s19, 5
    %p100 = por %p98, %p99
    %p101 = scmp.ne.s32.totalorder %s92, %s93
    %p102 = scmp.eq.s32.totalorder %s19, 0
    %p103 = por %p101, %p102
    %p104 = scmp.ne.s32.totalorder %s92, %s93
    %p105 = scmp.eq.s32.totalorder %s20, 5
    %p106 = por %p104, %p105
    %p108 = scmp.ne.s32.totalorder %s93, %s107
    %p109 = scmp.eq.s32.totalorder %s20, 0
    %p110 = por %p108, %p109
    %s112 = sadd.s32 %s111, 1
    %p115 = scmp.eq.s32.totalorder %s14, 5
    %p116 = scmp.ne.s32.totalorder %s111, %s113
    %p117 = scmp.eq.s32.totalorder %s14, 0
    %p118 = por %p116, %p117
    %p119 = scmp.ne.s32.totalorder %s111, %s113
    %p120 = scmp.eq.s32.totalorder %s19, 5
    %p121 = por %p119, %p120
    %p122 = scmp.ne.s32.totalorder %s113, %s114
    %p123 = scmp.eq.s32.totalorder %s19, 0
    %p124 = por %p122, %p123
    %p125 = scmp.ne.s32.totalorder %s113, %s114
    %p126 = scmp.eq.s32.totalorder %s20, 5
    %p127 = por %p125, %p126
    %p129 = scmp.ne.s32.totalorder %s114, %s128
    %p130 = scmp.eq.s32.totalorder %s20, 0
    %p131 = por %p129, %p130
    %s132 = ssub.s32 %s21, %s33
    %p133 = scmp.eq.s32.totalorder %s132, 0
    %s135 = sadd.s32 %s134, 1
    %s136 = scalar_select %p133, %s134, %s135
    %p139 = pneg %p133
    %p140 = scmp.eq.s32.totalorder %s14, 5
    %p141 = por %p139, %p140
    %p142 = scmp.ne.s32.totalorder %s134, %s137
    %p143 = scmp.eq.s32.totalorder %s14, 0
    %p144 = por %p142, %p143
    %p145 = scmp.ne.s32.totalorder %s134, %s137
    %p146 = scmp.eq.s32.totalorder %s19, 5
    %p147 = por %p145, %p146
    %p148 = scmp.ne.s32.totalorder %s137, %s138
    %p149 = scmp.eq.s32.totalorder %s19, 0
    %p150 = por %p148, %p149
    %p151 = scmp.ne.s32.totalorder %s137, %s138
    %p152 = scmp.eq.s32.totalorder %s20, 5
    %p153 = por %p151, %p152
    %p155 = scmp.ne.s32.totalorder %s138, %s154
    %p156 = scmp.eq.s32.totalorder %s20, 0
    %p157 = por %p155, %p156
    %s158 = ssub.s32 %s22, %s29
    %s159 = ssub.s32 %s21, %s33
    %s160 = sor.u32 %s158, %s159
    %p161 = scmp.eq.s32.totalorder %s160, 0
    %s163 = sadd.s32 %s162, 1
    %s164 = scalar_select %p161, %s162, %s163
    %p167 = pneg %p161
    %p168 = scmp.eq.s32.totalorder %s14, 5
    %p169 = por %p167, %p168
    %p170 = scmp.ne.s32.totalorder %s162, %s165
    %p171 = scmp.eq.s32.totalorder %s14, 0
    %p172 = por %p170, %p171
    %p173 = scmp.ne.s32.totalorder %s162, %s165
    %p174 = scmp.eq.s32.totalorder %s19, 5
    %p175 = por %p173, %p174
    %p176 = scmp.ne.s32.totalorder %s165, %s166
    %p177 = scmp.eq.s32.totalorder %s19, 0
    %p178 = por %p176, %p177
    %p179 = scmp.ne.s32.totalorder %s165, %s166
    %p180 = scmp.eq.s32.totalorder %s20, 5
    %p181 = por %p179, %p180
    %p183 = scmp.ne.s32.totalorder %s166, %s182
    %p184 = scmp.eq.s32.totalorder %s20, 0
    %p185 = por %p183, %p184
    %s186 = ssub.s32 %s21, %s33
    %p187 = scmp.eq.s32.totalorder %s186, 0
    %s189 = sadd.s32 %s188, 1
    %s190 = scalar_select %p187, %s188, %s189
    %p193 = pneg %p187
    %p194 = scmp.eq.s32.totalorder %s14, 5
    %p195 = por %p193, %p194
    %p196 = scmp.ne.s32.totalorder %s188, %s191
    %p197 = scmp.eq.s32.totalorder %s14, 0
    %p198 = por %p196, %p197
    %p199 = scmp.ne.s32.totalorder %s188, %s191
    %p200 = scmp.eq.s32.totalorder %s19, 5
    %p201 = por %p199, %p200
    %p202 = scmp.ne.s32.totalorder %s191, %s192
    %p203 = scmp.eq.s32.totalorder %s19, 0
    %p204 = por %p202, %p203
    %p205 = scmp.ne.s32.totalorder %s191, %s192
    %p206 = scmp.eq.s32.totalorder %s20, 5
    %p207 = por %p205, %p206
    %p209 = scmp.ne.s32.totalorder %s192, %s208
    %p210 = scmp.eq.s32.totalorder %s20, 0
    %p211 = por %p209, %p210
    %s212 = ssub.s32 %s21, %s33
    %p213 = scmp.eq.s32.totalorder %s212, 0
    %s215 = sadd.s32 %s214, 1
    %s216 = scalar_select %p213, %s214, %s215
    %p219 = pneg %p213
    %p220 = scmp.eq.s32.totalorder %s14, 5
    %p221 = por %p219, %p220
    %p222 = scmp.ne.s32.totalorder %s214, %s217
    %p223 = scmp.eq.s32.totalorder %s14, 0
    %p224 = por %p222, %p223
    %p225 = scmp.ne.s32.totalorder %s214, %s217
    %p226 = scmp.eq.s32.totalorder %s19, 5
    %p227 = por %p225, %p226
    %p228 = scmp.ne.s32.totalorder %s217, %s218
    %p229 = scmp.eq.s32.totalorder %s19, 0
    %p230 = por %p228, %p229
    %p231 = scmp.ne.s32.totalorder %s217, %s218
    %p232 = scmp.eq.s32.totalorder %s20, 5
    %p233 = por %p231, %p232
    %p235 = scmp.ne.s32.totalorder %s218, %s234
    %p236 = scmp.eq.s32.totalorder %s20, 0
    %p237 = por %p235, %p236
    %p238 = scmp.le.s32.totalorder 1, %s14
    %p239 = scmp.lt.s32.totalorder %s14, 7
    %p240 = pnand %p238, %p239
    %p241 = pneg %p240
    // Predicated region
    $region9: #{decoder_block_forward.6} parent=5 // pred_check
      _
    $region10: #{decoder_block_forward.6} parent=5 // pred_check_branch
      %243 = sbr.rel (%p240) target = $region12
    $region11: #{decoder_block_forward.6} parent=5 // pred_region
      %s244 = ssub.s32 %s14, 1
      // Predicated region
      $region13: #{decoder_block_forward.6} parent=11 // pred_check
        %p245 = pneg %p103
      $region14: #{decoder_block_forward.6} parent=11 // pred_check_branch
        %247 = sbr.rel (%p245) target = $region16
      $region15: #{decoder_block_forward.6} parent=11 // pred_region
        _
      $region16: #{decoder_block_forward.6} parent=11 // pred_fallthru
        _
      // Predicated region
      $region17: #{decoder_block_forward.6} parent=11 // pred_check
        %p248 = pneg %p124
      $region18: #{decoder_block_forward.6} parent=11 // pred_check_branch
        %250 = sbr.rel (%p248) target = $region20
      $region19: #{decoder_block_forward.6} parent=11 // pred_region
        _
      $region20: #{decoder_block_forward.6} parent=11 // pred_fallthru
        _
    $region12: #{decoder_block_forward.6} parent=5 // pred_fallthru
      _
    %p251 = scmp.lt.s32.totalorder %s14, 6
    // Predicated region
    $region21: #{decoder_block_forward.6} parent=5 // pred_check
      %p252 = pneg %p251
    $region22: #{decoder_block_forward.6} parent=5 // pred_check_branch
      %254 = sbr.rel (%p252) target = $region24
    $region23: #{decoder_block_forward.6} parent=5 // pred_region
      // Predicated region
      $region25: #{decoder_block_forward.6} parent=23 // pred_check
        %p255 = pneg %p48
      $region26: #{decoder_block_forward.6} parent=23 // pred_check_branch
        %257 = sbr.rel (%p255) target = $region28
      $region27: #{decoder_block_forward.6} parent=23 // pred_region
        %p258 = scmp.lt.s32.totalorder %s22, 1
        %s259 = scalar_select %p258, %s22, 1
        %p260 = scmp.lt.s32.totalorder %s21, 2
        %s261 = scalar_select %p260, %s21, 2
        %s262 = smul.addr %s261, 2
        %s263 = smul.addr %s259, 6
        %s264 = sadd.s32 %s262, %s263
        %s265 = smul.addr %s264, 4
        %s266 = scalar_lea.vmem %s0, %s265
      $region28: #{decoder_block_forward.6} parent=23 // pred_fallthru
        _
      // Predicated region
      $region29: #{decoder_block_forward.6} parent=23 // pred_check
        %p267 = pneg %p76
      $region30: #{decoder_block_forward.6} parent=23 // pred_check_branch
        %269 = sbr.rel (%p267) target = $region32
      $region31: #{decoder_block_forward.6} parent=23 // pred_region
        %p270 = scmp.lt.s32.totalorder %s22, 1
        %s271 = scalar_select %p270, %s22, 1
        %p272 = scmp.lt.s32.totalorder %s21, 2
        %s273 = scalar_select %p272, %s21, 2
        %s274 = smul.addr %s273, 2
        %s275 = smul.addr %s271, 6
        %s276 = sadd.s32 %s274, %s275
        %s277 = smul.addr %s276, 4
        %s278 = scalar_lea.vmem %s1, %s277
      $region32: #{decoder_block_forward.6} parent=23 // pred_fallthru
        _
      // Predicated region
      $region33: #{decoder_block_forward.6} parent=23 // pred_check
        %p279 = pneg %p144
      $region34: #{decoder_block_forward.6} parent=23 // pred_check_branch
        %281 = sbr.rel (%p279) target = $region36
      $region35: #{decoder_block_forward.6} parent=23 // pred_region
        %p282 = scmp.lt.s32.totalorder %s21, 2
        %s283 = scalar_select %p282, %s21, 2
        %s284 = scalar_lea.vmem %s4, %s283
      $region36: #{decoder_block_forward.6} parent=23 // pred_fallthru
        _
    $region24: #{decoder_block_forward.6} parent=5 // pred_fallthru
      _
    %p285 = scmp.le.s32.totalorder 1, %s14
    %p286 = scmp.lt.s32.totalorder %s14, 7
    %p287 = pnand %p285, %p286
    %p288 = pneg %p287
    // Predicated region
    $region37: #{decoder_block_forward.6} parent=5 // pred_check
      _
    $region38: #{decoder_block_forward.6} parent=5 // pred_check_branch
      %290 = sbr.rel (%p287) target = $region40
    $region39: #{decoder_block_forward.6} parent=5 // pred_region
      %s291 = ssub.s32 %s14, 1
      %p292 = scmp.lt.s32.totalorder %s24, 1
      %s293 = scalar_select %p292, %s24, 1
      %p294 = scmp.lt.s32.totalorder %s23, 2
      %s295 = scalar_select %p294, %s23, 2
      %s296 = smul.addr %s295, 2
      %s297 = smul.addr %s293, 6
      %s298 = sadd.s32 %s296, %s297
      %s299 = smul.addr %s298, 4
      %s300 = scalar_lea.vmem %s0, %s299
      %p301 = pneg %p54
      %p302 = pneg %p51
      %p303 = scmp.lt.s32.totalorder %s24, 1
      %s304 = scalar_select %p303, %s24, 1
      %p305 = scmp.lt.s32.totalorder %s23, 2
      %s306 = scalar_select %p305, %s23, 2
      %s307 = smul.addr %s306, 2
      %s308 = smul.addr %s304, 6
      %s309 = sadd.s32 %s307, %s308
      %s310 = smul.addr %s309, 4
      %s311 = scalar_lea.vmem %s1, %s310
      %p312 = pneg %p82
      %p313 = pneg %p79
      %p314 = pneg %p103
      %p315 = pneg %p100
      %p316 = pneg %p124
      %p317 = pneg %p121
      %p318 = scmp.lt.s32.totalorder %s23, 2
      %s319 = scalar_select %p318, %s23, 2
      %s320 = scalar_lea.vmem %s4, %s319
      %p321 = pneg %p150
      %p322 = pneg %p147
      %p323 = pneg %p178
      %p324 = pneg %p175
      %p325 = scmp.lt.s32.totalorder %s24, 1
      %s326 = scalar_select %p325, %s24, 1
      %p327 = scmp.lt.s32.totalorder %s23, 2
      %s328 = scalar_select %p327, %s23, 2
      %s329 = smul.addr %s326, 3
      %s330 = sadd.s32 %s328, %s329
      %s331 = smul.addr %s330, 8
      %s332 = scalar_lea.vmem %s5, %s331
      %p333 = pneg %p204
      %p334 = pneg %p201
      %p335 = scmp.lt.s32.totalorder %s23, 2
      %s336 = scalar_select %p335, %s23, 2
      %s337 = smul.addr %s336, 8
      %s338 = scalar_lea.vmem %s6, %s337
      %p339 = pneg %p230
      %p340 = pneg %p227
      %p341 = scmp.lt.s32.totalorder %s23, 2
      %s342 = scalar_select %p341, %s23, 2
      %s343 = smul.addr %s342, 8
      %s344 = scalar_lea.vmem %s7, %s343
      %p345 = scmp.lt.s32.totalorder %s24, 1
      %s346 = scalar_select %p345, %s24, 1
      %p347 = scmp.lt.s32.totalorder %s23, 2
      %s348 = scalar_select %p347, %s23, 2
      %s349 = smul.addr %s348, 2
      %s350 = smul.addr %s346, 6
      %s351 = sadd.s32 %s349, %s350
      %s352 = smul.addr %s351, 4
      %s353 = scalar_lea.vmem %s0, %s352
      %p354 = scmp.lt.s32.totalorder %s24, 1
      %s355 = scalar_select %p354, %s24, 1
      %p356 = scmp.lt.s32.totalorder %s23, 2
      %s357 = scalar_select %p356, %s23, 2
      %s358 = smul.addr %s357, 2
      %s359 = smul.addr %s355, 6
      %s360 = sadd.s32 %s358, %s359
      %s361 = smul.addr %s360, 4
      %s362 = scalar_lea.vmem %s1, %s361
      %p363 = scmp.lt.s32.totalorder %s23, 2
      %s364 = scalar_select %p363, %s23, 2
      %s365 = scalar_lea.vmem %s4, %s364
      %p366 = scmp.lt.s32.totalorder %s24, 1
      %s367 = scalar_select %p366, %s24, 1
      %p368 = scmp.lt.s32.totalorder %s23, 2
      %s369 = scalar_select %p368, %s23, 2
      %s370 = smul.addr %s367, 3
      %s371 = sadd.s32 %s369, %s370
      %s372 = smul.addr %s371, 8
      %s373 = scalar_lea.vmem %s5, %s372
      %p374 = scmp.lt.s32.totalorder %s23, 2
      %s375 = scalar_select %p374, %s23, 2
      %s376 = smul.addr %s375, 8
      %s377 = scalar_lea.vmem %s6, %s376
      %p378 = scmp.lt.s32.totalorder %s23, 2
      %s379 = scalar_select %p378, %s23, 2
      %s380 = smul.addr %s379, 8
      %s381 = scalar_lea.vmem %s7, %s380
      %v383 = vld [vmem:[%s353] sm:$0xff]
      %v384 = vld [vmem:[%s2] sm:$0xf]
      %s385 = scalar_lea.vmem %s2, 4
      %v386 = vld [vmem:[%s385] sm:$0xf]
      %v388 = vunpack.c.l.b16 %v383
      %v389 = vunpack.c.h.b16 %v383
      %v390 = vpack.c.b16 %v388, %v388
      %v391 = vpack.c.b16 %v389, %v389
      %392 = vrot.lane.b32.xlu0 %v390, 127
      %v393 = vpop.permute.xlu0 %392
      %394 = vrot.lane.b32.xlu0 %v391, 127
      %v395 = vpop.permute.xlu0 %394
      %vm396 = vcmask 1039360
      %v397 = vsel %vm396, %v393, %v395
      %vm398 = vcmask 64512
      %v400 = vsel %vm398, %v386, 0
      %vm402 = vcmask 1043456
      %v404 = vsel %vm402, %v397, 0
      %406 = vmatprep.subr.bf16.mxu0 0
      %407 = vmatpush1.bf16.msra.mxu0 %v404
      %408 = vmatprep.subr.bf16.mxu0 0
      %409 = vmatpush1.bf16.msra.mxu0 0
      %410 = vmatprep.subr.bf16.mxu0 0
      %411 = vmatpush1.bf16.msra.mxu0 0
      %412 = vmatprep.subr.bf16.mxu0 0
      %413 = vmatpush1.bf16.msra.mxu0 0
      %414 = vmatprep.subr.bf16.mxu0 0
      %415 = vmatpush1.bf16.msra.mxu0 0
      %416 = vmatprep.subr.bf16.mxu0 0
      %417 = vmatpush1.bf16.msra.mxu0 0
      %418 = vmatprep.subr.bf16.mxu0 0
      %419 = vmatpush1.bf16.msra.mxu0 0
      %420 = vmatprep.subr.bf16.mxu0 0
      %421 = vmatpush1.bf16.msra.mxu0 0
      %422 = vmatprep.subr.bf16.mxu0 0
      %423 = vmatpush1.bf16.msra.mxu0 0
      %424 = vmatprep.subr.bf16.mxu0 0
      %425 = vmatpush1.bf16.msra.mxu0 0
      %426 = vmatprep.subr.bf16.mxu0 0
      %427 = vmatpush1.bf16.msra.mxu0 0
      %428 = vmatprep.subr.bf16.mxu0 0
      %429 = vmatpush1.bf16.msra.mxu0 0
      %430 = vmatprep.subr.bf16.mxu0 0
      %431 = vmatpush1.bf16.msra.mxu0 0
      %432 = vmatprep.subr.bf16.mxu0 0
      %433 = vmatpush1.bf16.msra.mxu0 0
      %434 = vmatprep.subr.bf16.mxu0 0
      %435 = vmatpush1.bf16.msra.mxu0 0
      %436 = vmatprep.subr.bf16.mxu0 0
      %437 = vmatpush1.bf16.msra.mxu0 0
      %438 = vmatprep.mubr.bf16.mxu0 0
      %439 = vmatmul.mubr.bf16.gmra.mrb[0].mxu0 %v400
      %v440 = vpop.f32.mrb[0].mxu0
      %v441 = vadd.f32 0.0, %v440
      %v442 = vpop.f32.mrb[0].mxu0
      %v443 = vpop.f32.mrb[0].mxu0
      %v444 = vpop.f32.mrb[0].mxu0
      %445 = vdwg.mxu0
      %v447 = vsel %vm398, %v384, 0
      %v450 = vsel %vm402, %v383, 0
      %452 = vmatprep.subr.bf16.mxu0 0
      %453 = vmatpush1.bf16.msra.mxu0 %v450
      %454 = vmatprep.subr.bf16.mxu0 0
      %455 = vmatpush1.bf16.msra.mxu0 0
      %456 = vmatprep.subr.bf16.mxu0 0
      %457 = vmatpush1.bf16.msra.mxu0 0
      %458 = vmatprep.subr.bf16.mxu0 0
      %459 = vmatpush1.bf16.msra.mxu0 0
      %460 = vmatprep.subr.bf16.mxu0 0
      %461 = vmatpush1.bf16.msra.mxu0 0
      %462 = vmatprep.subr.bf16.mxu0 0
      %463 = vmatpush1.bf16.msra.mxu0 0
      %464 = vmatprep.subr.bf16.mxu0 0
      %465 = vmatpush1.bf16.msra.mxu0 0
      %466 = vmatprep.subr.bf16.mxu0 0
      %467 = vmatpush1.bf16.msra.mxu0 0
      %468 = vmatprep.subr.bf16.mxu0 0
      %469 = vmatpush1.bf16.msra.mxu0 0
      %470 = vmatprep.subr.bf16.mxu0 0
      %471 = vmatpush1.bf16.msra.mxu0 0
      %472 = vmatprep.subr.bf16.mxu0 0
      %473 = vmatpush1.bf16.msra.mxu0 0
      %474 = vmatprep.subr.bf16.mxu0 0
      %475 = vmatpush1.bf16.msra.mxu0 0
      %476 = vmatprep.subr.bf16.mxu0 0
      %477 = vmatpush1.bf16.msra.mxu0 0
      %478 = vmatprep.subr.bf16.mxu0 0
      %479 = vmatpush1.bf16.msra.mxu0 0
      %480 = vmatprep.subr.bf16.mxu0 0
      %481 = vmatpush1.bf16.msra.mxu0 0
      %482 = vmatprep.subr.bf16.mxu0 0
      %483 = vmatpush1.bf16.msra.mxu0 0
      %484 = vmatprep.mubr.bf16.mxu0 0
      %485 = vmatmul.mubr.bf16.gmra.mrb[0].mxu0 %v447
      %v486 = vpop.f32.mrb[0].mxu0
      %v487 = vadd.f32 %v441, %v486
      %v488 = vpop.f32.mrb[0].mxu0
      %v489 = vpop.f32.mrb[0].mxu0
      %v490 = vpop.f32.mrb[0].mxu0
      %491 = vdwg.mxu0
      %s492 = scalar_lea.vmem %s2, 8
      %v493 = vld [vmem:[%s492] sm:$0xf]
      %494 = vrot.lane.b32.xlu0 %v390, 126
      %v495 = vpop.permute.xlu0 %494
      %496 = vrot.lane.b32.xlu0 %v391, 126
      %v497 = vpop.permute.xlu0 %496
      %vm498 = vcmask 1031168
      %v499 = vsel %vm498, %v495, %v497
      %v501 = vsel %vm398, %v493, 0
      %v504 = vsel %vm402, %v499, 0
      %506 = vmatprep.subr.bf16.mxu0 0
      %507 = vmatpush1.bf16.msra.mxu0 %v504
      %508 = vmatprep.subr.bf16.mxu0 0
      %509 = vmatpush1.bf16.msra.mxu0 0
      %510 = vmatprep.subr.bf16.mxu0 0
      %511 = vmatpush1.bf16.msra.mxu0 0
      %512 = vmatprep.subr.bf16.mxu0 0
      %513 = vmatpush1.bf16.msra.mxu0 0
      %514 = vmatprep.subr.bf16.mxu0 0
      %515 = vmatpush1.bf16.msra.mxu0 0
      %516 = vmatprep.subr.bf16.mxu0 0
      %517 = vmatpush1.bf16.msra.mxu0 0
      %518 = vmatprep.subr.bf16.mxu0 0
      %519 = vmatpush1.bf16.msra.mxu0 0
      %520 = vmatprep.subr.bf16.mxu0 0
      %521 = vmatpush1.bf16.msra.mxu0 0
      %522 = vmatprep.subr.bf16.mxu0 0
      %523 = vmatpush1.bf16.msra.mxu0 0
      %524 = vmatprep.subr.bf16.mxu0 0
      %525 = vmatpush1.bf16.msra.mxu0 0
      %526 = vmatprep.subr.bf16.mxu0 0
      %527 = vmatpush1.bf16.msra.mxu0 0
      %528 = vmatprep.subr.bf16.mxu0 0
      %529 = vmatpush1.bf16.msra.mxu0 0
      %530 = vmatprep.subr.bf16.mxu0 0
      %531 = vmatpush1.bf16.msra.mxu0 0
      %532 = vmatprep.subr.bf16.mxu0 0
      %533 = vmatpush1.bf16.msra.mxu0 0
      %534 = vmatprep.subr.bf16.mxu0 0
      %535 = vmatpush1.bf16.msra.mxu0 0
      %536 = vmatprep.subr.bf16.mxu0 0
      %537 = vmatpush1.bf16.msra.mxu0 0
      %538 = vmatprep.mubr.bf16.mxu0 0
      %539 = vmatmul.mubr.bf16.gmra.mrb[0].mxu0 %v501
      %v540 = vpop.f32.mrb[0].mxu0
      %v541 = vadd.f32 0.0, %v540
      %v542 = vpop.f32.mrb[0].mxu0
      %v543 = vpop.f32.mrb[0].mxu0
      %v544 = vpop.f32.mrb[0].mxu0
      %545 = vdwg.mxu0
      %v546 = vadd.f32 %v487, %v541
      %s547 = scalar_lea.vmem %s2, 12
      %v548 = vld [vmem:[%s547] sm:$0xf]
      %549 = vrot.lane.b32.xlu0 %v390, 110
      %v550 = vpop.permute.xlu0 %549
      %551 = vrot.lane.b32.xlu0 %v391, 110
      %v552 = vpop.permute.xlu0 %551
      %vm553 = vcmask 900096
      %v554 = vsel %vm553, %v550, %v552
      %v556 = vsel %vm398, %v548, 0
      %v559 = vsel %vm402, %v554, 0
      %561 = vmatprep.subr.bf16.mxu0 0
      %562 = vmatpush1.bf16.msra.mxu0 %v559
      %563 = vmatprep.subr.bf16.mxu0 0
      %564 = vmatpush1.bf16.msra.mxu0 0
      %565 = vmatprep.subr.bf16.mxu0 0
      %566 = vmatpush1.bf16.msra.mxu0 0
      %567 = vmatprep.subr.bf16.mxu0 0
      %568 = vmatpush1.bf16.msra.mxu0 0
      %569 = vmatprep.subr.bf16.mxu0 0
      %570 = vmatpush1.bf16.msra.mxu0 0
      %571 = vmatprep.subr.bf16.mxu0 0
      %572 = vmatpush1.bf16.msra.mxu0 0
      %573 = vmatprep.subr.bf16.mxu0 0
      %574 = vmatpush1.bf16.msra.mxu0 0
      %575 = vmatprep.subr.bf16.mxu0 0
      %576 = vmatpush1.bf16.msra.mxu0 0
      %577 = vmatprep.subr.bf16.mxu0 0
      %578 = vmatpush1.bf16.msra.mxu0 0
      %579 = vmatprep.subr.bf16.mxu0 0
      %580 = vmatpush1.bf16.msra.mxu0 0
      %581 = vmatprep.subr.bf16.mxu0 0
      %582 = vmatpush1.bf16.msra.mxu0 0
      %583 = vmatprep.subr.bf16.mxu0 0
      %584 = vmatpush1.bf16.msra.mxu0 0
      %585 = vmatprep.subr.bf16.mxu0 0
      %586 = vmatpush1.bf16.msra.mxu0 0
      %587 = vmatprep.subr.bf16.mxu0 0
      %588 = vmatpush1.bf16.msra.mxu0 0
      %589 = vmatprep.subr.bf16.mxu0 0
      %590 = vmatpush1.bf16.msra.mxu0 0
      %591 = vmatprep.subr.bf16.mxu0 0
      %592 = vmatpush1.bf16.msra.mxu0 0
      %593 = vmatprep.mubr.bf16.mxu0 0
      %594 = vmatmul.mubr.bf16.gmra.mrb[0].mxu0 %v556
      %v595 = vpop.f32.mrb[0].mxu0
      %v596 = vadd.f32 0.0, %v595
      %v597 = vpop.f32.mrb[0].mxu0
      %v598 = vpop.f32.mrb[0].mxu0
      %v599 = vpop.f32.mrb[0].mxu0
      %600 = vdwg.mxu0
      %v601 = vadd.f32 %v546, %v596
      %s602 = scalar_lea.vmem %s2, 16
      %v603 = vld [vmem:[%s602] sm:$0xf]
      %604 = vrot.lane.b32.xlu0 %v390, 109
      %v605 = vpop.permute.xlu0 %604
      %606 = vrot.lane.b32.xlu0 %v391, 109
      %v607 = vpop.permute.xlu0 %606
      %vm608 = vcmask 891904
      %v609 = vsel %vm608, %v605, %v607
      %v611 = vsel %vm398, %v603, 0
      %v614 = vsel %vm402, %v609, 0
      %616 = vmatprep.subr.bf16.mxu0 0
      %617 = vmatpush1.bf16.msra.mxu0 %v614
      %618 = vmatprep.subr.bf16.mxu0 0
      %619 = vmatpush1.bf16.msra.mxu0 0
      %620 = vmatprep.subr.bf16.mxu0 0
      %621 = vmatpush1.bf16.msra.mxu0 0
      %622 = vmatprep.subr.bf16.mxu0 0
      %623 = vmatpush1.bf16.msra.mxu0 0
      %624 = vmatprep.subr.bf16.mxu0 0
      %625 = vmatpush1.bf16.msra.mxu0 0
      %626 = vmatprep.subr.bf16.mxu0 0
      %627 = vmatpush1.bf16.msra.mxu0 0
      %628 = vmatprep.subr.bf16.mxu0 0
      %629 = vmatpush1.bf16.msra.mxu0 0
      %630 = vmatprep.subr.bf16.mxu0 0
      %631 = vmatpush1.bf16.msra.mxu0 0
      %632 = vmatprep.subr.bf16.mxu0 0
      %633 = vmatpush1.bf16.msra.mxu0 0
      %634 = vmatprep.subr.bf16.mxu0 0
      %635 = vmatpush1.bf16.msra.mxu0 0
      %636 = vmatprep.subr.bf16.mxu0 0
      %637 = vmatpush1.bf16.msra.mxu0 0
      %638 = vmatprep.subr.bf16.mxu0 0
      %639 = vmatpush1.bf16.msra.mxu0 0
      %640 = vmatprep.subr.bf16.mxu0 0
      %641 = vmatpush1.bf16.msra.mxu0 0
      %642 = vmatprep.subr.bf16.mxu0 0
      %643 = vmatpush1.bf16.msra.mxu0 0
      %644 = vmatprep.subr.bf16.mxu0 0
      %645 = vmatpush1.bf16.msra.mxu0 0
      %646 = vmatprep.subr.bf16.mxu0 0
      %647 = vmatpush1.bf16.msra.mxu0 0
      %648 = vmatprep.mubr.bf16.mxu0 0
      %649 = vmatmul.mubr.bf16.gmra.mrb[0].mxu0 %v611
      %v650 = vpop.f32.mrb[0].mxu0
      %v651 = vadd.f32 0.0, %v650
      %v652 = vpop.f32.mrb[0].mxu0
      %v653 = vpop.f32.mrb[0].mxu0
      %v654 = vpop.f32.mrb[0].mxu0
      %655 = vdwg.mxu0
      %v656 = vadd.f32 %v601, %v651
      %s657 = scalar_lea.vmem %s2, 20
      %v658 = vld [vmem:[%s657] sm:$0xf]
      %659 = vrot.lane.b32.xlu0 %v390, 108
      %v660 = vpop.permute.xlu0 %659
      %661 = vrot.lane.b32.xlu0 %v391, 108
      %v662 = vpop.permute.xlu0 %661
      %vm663 = vcmask 883712
      %v664 = vsel %vm663, %v660, %v662
      %v666 = vsel %vm398, %v658, 0
      %v669 = vsel %vm402, %v664, 0
      %671 = vmatprep.subr.bf16.mxu0 0
      %672 = vmatpush1.bf16.msra.mxu0 %v669
      %673 = vmatprep.subr.bf16.mxu0 0
      %674 = vmatpush1.bf16.msra.mxu0 0
      %675 = vmatprep.subr.bf16.mxu0 0
      %676 = vmatpush1.bf16.msra.mxu0 0
      %677 = vmatprep.subr.bf16.mxu0 0
      %678 = vmatpush1.bf16.msra.mxu0 0
      %679 = vmatprep.subr.bf16.mxu0 0
      %680 = vmatpush1.bf16.msra.mxu0 0
      %681 = vmatprep.subr.bf16.mxu0 0
      %682 = vmatpush1.bf16.msra.mxu0 0
      %683 = vmatprep.subr.bf16.mxu0 0
      %684 = vmatpush1.bf16.msra.mxu0 0
      %685 = vmatprep.subr.bf16.mxu0 0
      %686 = vmatpush1.bf16.msra.mxu0 0
      %687 = vmatprep.subr.bf16.mxu0 0
      %688 = vmatpush1.bf16.msra.mxu0 0
      %689 = vmatprep.subr.bf16.mxu0 0
      %690 = vmatpush1.bf16.msra.mxu0 0
      %691 = vmatprep.subr.bf16.mxu0 0
      %692 = vmatpush1.bf16.msra.mxu0 0
      %693 = vmatprep.subr.bf16.mxu0 0
      %694 = vmatpush1.bf16.msra.mxu0 0
      %695 = vmatprep.subr.bf16.mxu0 0
      %696 = vmatpush1.bf16.msra.mxu0 0
      %697 = vmatprep.subr.bf16.mxu0 0
      %698 = vmatpush1.bf16.msra.mxu0 0
      %699 = vmatprep.subr.bf16.mxu0 0
      %700 = vmatpush1.bf16.msra.mxu0 0
      %701 = vmatprep.subr.bf16.mxu0 0
      %702 = vmatpush1.bf16.msra.mxu0 0
      %703 = vmatprep.mubr.bf16.mxu0 0
      %704 = vmatmul.mubr.bf16.gmra.mrb[0].mxu0 %v666
      %v705 = vpop.f32.mrb[0].mxu0
      %v706 = vadd.f32 0.0, %v705
      %v707 = vpop.f32.mrb[0].mxu0
      %v708 = vpop.f32.mrb[0].mxu0
      %v709 = vpop.f32.mrb[0].mxu0
      %710 = vdwg.mxu0
      %v711 = vadd.f32 %v656, %v706
      %s712 = scalar_lea.vmem %s2, 24
      %v713 = vld [vmem:[%s712] sm:$0xf]
      %714 = vrot.lane.b32.xlu0 %v390, 92
      %v715 = vpop.permute.xlu0 %714
      %716 = vrot.lane.b32.xlu0 %v391, 92
      %v717 = vpop.permute.xlu0 %716
      %vm718 = vcmask 752640
      %v719 = vsel %vm718, %v715, %v717
      %v721 = vsel %vm398, %v713, 0
      %v724 = vsel %vm402, %v719, 0
      %726 = vmatprep.subr.bf16.mxu0 0
      %727 = vmatpush1.bf16.msra.mxu0 %v724
      %728 = vmatprep.subr.bf16.mxu0 0
      %729 = vmatpush1.bf16.msra.mxu0 0
      %730 = vmatprep.subr.bf16.mxu0 0
      %731 = vmatpush1.bf16.msra.mxu0 0
      %732 = vmatprep.subr.bf16.mxu0 0
      %733 = vmatpush1.bf16.msra.mxu0 0
      %734 = vmatprep.subr.bf16.mxu0 0
      %735 = vmatpush1.bf16.msra.mxu0 0
      %736 = vmatprep.subr.bf16.mxu0 0
      %737 = vmatpush1.bf16.msra.mxu0 0
      %738 = vmatprep.subr.bf16.mxu0 0
      %739 = vmatpush1.bf16.msra.mxu0 0
      %740 = vmatprep.subr.bf16.mxu0 0
      %741 = vmatpush1.bf16.msra.mxu0 0
      %742 = vmatprep.subr.bf16.mxu0 0
      %743 = vmatpush1.bf16.msra.mxu0 0
      %744 = vmatprep.subr.bf16.mxu0 0
      %745 = vmatpush1.bf16.msra.mxu0 0
      %746 = vmatprep.subr.bf16.mxu0 0
      %747 = vmatpush1.bf16.msra.mxu0 0
      %748 = vmatprep.subr.bf16.mxu0 0
      %749 = vmatpush1.bf16.msra.mxu0 0
      %750 = vmatprep.subr.bf16.mxu0 0
      %751 = vmatpush1.bf16.msra.mxu0 0
      %752 = vmatprep.subr.bf16.mxu0 0
      %753 = vmatpush1.bf16.msra.mxu0 0
      %754 = vmatprep.subr.bf16.mxu0 0
      %755 = vmatpush1.bf16.msra.mxu0 0
      %756 = vmatprep.subr.bf16.mxu0 0
      %757 = vmatpush1.bf16.msra.mxu0 0
      %758 = vmatprep.mubr.bf16.mxu0 0
      %759 = vmatmul.mubr.bf16.gmra.mrb[0].mxu0 %v721
      %v760 = vpop.f32.mrb[0].mxu0
      %v761 = vadd.f32 0.0, %v760
      %v762 = vpop.f32.mrb[0].mxu0
      %v763 = vpop.f32.mrb[0].mxu0
      %v764 = vpop.f32.mrb[0].mxu0
      %765 = vdwg.mxu0
      %v766 = vadd.f32 %v711, %v761
      %s767 = scalar_lea.vmem %s2, 28
      %v768 = vld [vmem:[%s767] sm:$0xf]
      %769 = vrot.lane.b32.xlu0 %v390, 91
      %v770 = vpop.permute.xlu0 %769
      %771 = vrot.lane.b32.xlu0 %v391, 91
      %v772 = vpop.permute.xlu0 %771
      %vm773 = vcmask 744448
      %v774 = vsel %vm773, %v770, %v772
      %v776 = vsel %vm398, %v768, 0
      %v779 = vsel %vm402, %v774, 0
      %781 = vmatprep.subr.bf16.mxu0 0
      %782 = vmatpush1.bf16.msra.mxu0 %v779
      %783 = vmatprep.subr.bf16.mxu0 0
      %784 = vmatpush1.bf16.msra.mxu0 0
      %785 = vmatprep.subr.bf16.mxu0 0
      %786 = vmatpush1.bf16.msra.mxu0 0
      %787 = vmatprep.subr.bf16.mxu0 0
      %788 = vmatpush1.bf16.msra.mxu0 0
      %789 = vmatprep.subr.bf16.mxu0 0
      %790 = vmatpush1.bf16.msra.mxu0 0
      %791 = vmatprep.subr.bf16.mxu0 0
      %792 = vmatpush1.bf16.msra.mxu0 0
      %793 = vmatprep.subr.bf16.mxu0 0
      %794 = vmatpush1.bf16.msra.mxu0 0
      %795 = vmatprep.subr.bf16.mxu0 0
      %796 = vmatpush1.bf16.msra.mxu0 0
      %797 = vmatprep.subr.bf16.mxu0 0
      %798 = vmatpush1.bf16.msra.mxu0 0
      %799 = vmatprep.subr.bf16.mxu0 0
      %800 = vmatpush1.bf16.msra.mxu0 0
      %801 = vmatprep.subr.bf16.mxu0 0
      %802 = vmatpush1.bf16.msra.mxu0 0
      %803 = vmatprep.subr.bf16.mxu0 0
      %804 = vmatpush1.bf16.msra.mxu0 0
      %805 = vmatprep.subr.bf16.mxu0 0
      %806 = vmatpush1.bf16.msra.mxu0 0
      %807 = vmatprep.subr.bf16.mxu0 0
      %808 = vmatpush1.bf16.msra.mxu0 0
      %809 = vmatprep.subr.bf16.mxu0 0
      %810 = vmatpush1.bf16.msra.mxu0 0
      %811 = vmatprep.subr.bf16.mxu0 0
      %812 = vmatpush1.bf16.msra.mxu0 0
      %813 = vmatprep.mubr.bf16.mxu0 0
      %814 = vmatmul.mubr.bf16.gmra.mrb[0].mxu0 %v776
      %v815 = vpop.f32.mrb[0].mxu0
      %v816 = vadd.f32 0.0, %v815
      %v817 = vpop.f32.mrb[0].mxu0
      %v818 = vpop.f32.mrb[0].mxu0
      %v819 = vpop.f32.mrb[0].mxu0
      %820 = vdwg.mxu0
      %v821 = vadd.f32 %v766, %v816
      %s822 = scalar_lea.vmem %s2, 32
      %v823 = vld [vmem:[%s822] sm:$0xf]
      %824 = vrot.lane.b32.xlu0 %v390, 90
      %v825 = vpop.permute.xlu0 %824
      %826 = vrot.lane.b32.xlu0 %v391, 90
      %v827 = vpop.permute.xlu0 %826
      %vm828 = vcmask 736256
      %v829 = vsel %vm828, %v825, %v827
      %v831 = vsel %vm398, %v823, 0
      %v834 = vsel %vm402, %v829, 0
      %836 = vmatprep.subr.bf16.mxu0 0
      %837 = vmatpush1.bf16.msra.mxu0 %v834
      %838 = vmatprep.subr.bf16.mxu0 0
      %839 = vmatpush1.bf16.msra.mxu0 0
      %840 = vmatprep.subr.bf16.mxu0 0
      %841 = vmatpush1.bf16.msra.mxu0 0
      %842 = vmatprep.subr.bf16.mxu0 0
      %843 = vmatpush1.bf16.msra.mxu0 0
      %844 = vmatprep.subr.bf16.mxu0 0
      %845 = vmatpush1.bf16.msra.mxu0 0
      %846 = vmatprep.subr.bf16.mxu0 0
      %847 = vmatpush1.bf16.msra.mxu0 0
      %848 = vmatprep.subr.bf16.mxu0 0
      %849 = vmatpush1.bf16.msra.mxu0 0
      %850 = vmatprep.subr.bf16.mxu0 0
      %851 = vmatpush1.bf16.msra.mxu0 0
      %852 = vmatprep.subr.bf16.mxu0 0
      %853 = vmatpush1.bf16.msra.mxu0 0
      %854 = vmatprep.subr.bf16.mxu0 0
      %855 = vmatpush1.bf16.msra.mxu0 0
      %856 = vmatprep.subr.bf16.mxu0 0
      %857 = vmatpush1.bf16.msra.mxu0 0
      %858 = vmatprep.subr.bf16.mxu0 0
      %859 = vmatpush1.bf16.msra.mxu0 0
      %860 = vmatprep.subr.bf16.mxu0 0
      %861 = vmatpush1.bf16.msra.mxu0 0
      %862 = vmatprep.subr.bf16.mxu0 0
      %863 = vmatpush1.bf16.msra.mxu0 0
      %864 = vmatprep.subr.bf16.mxu0 0
      %865 = vmatpush1.bf16.msra.mxu0 0
      %866 = vmatprep.subr.bf16.mxu0 0
      %867 = vmatpush1.bf16.msra.mxu0 0
      %868 = vmatprep.mubr.bf16.mxu0 0
      %869 = vmatmul.mubr.bf16.gmra.mrb[0].mxu0 %v831
      %v870 = vpop.f32.mrb[0].mxu0
      %v871 = vadd.f32 0.0, %v870
      %v872 = vpop.f32.mrb[0].mxu0
      %v873 = vpop.f32.mrb[0].mxu0
      %v874 = vpop.f32.mrb[0].mxu0
      %875 = vdwg.mxu0
      %v876 = vadd.f32 %v821, %v871
      %v877 = vld [vmem:[%s362] sm:$0xff]
      %v878 = vld [vmem:[%s3] sm:$0xf]
      %v880 = vsel %vm398, %v878, 0
      %v883 = vsel %vm402, %v877, 0
      %885 = vmatprep.subr.bf16.mxu0 0
      %886 = vmatpush1.bf16.msra.mxu0 %v883
      %887 = vmatprep.subr.bf16.mxu0 0
      %888 = vmatpush1.bf16.msra.mxu0 0
      %889 = vmatprep.subr.bf16.mxu0 0
      %890 = vmatpush1.bf16.msra.mxu0 0
      %891 = vmatprep.subr.bf16.mxu0 0
      %892 = vmatpush1.bf16.msra.mxu0 0
      %893 = vmatprep.subr.bf16.mxu0 0
      %894 = vmatpush1.bf16.msra.mxu0 0
      %895 = vmatprep.subr.bf16.mxu0 0
      %896 = vmatpush1.bf16.msra.mxu0 0
      %897 = vmatprep.subr.bf16.mxu0 0
      %898 = vmatpush1.bf16.msra.mxu0 0
      %899 = vmatprep.subr.bf16.mxu0 0
      %900 = vmatpush1.bf16.msra.mxu0 0
      %901 = vmatprep.subr.bf16.mxu0 0
      %902 = vmatpush1.bf16.msra.mxu0 0
      %903 = vmatprep.subr.bf16.mxu0 0
      %904 = vmatpush1.bf16.msra.mxu0 0
      %905 = vmatprep.subr.bf16.mxu0 0
      %906 = vmatpush1.bf16.msra.mxu0 0
      %907 = vmatprep.subr.bf16.mxu0 0
      %908 = vmatpush1.bf16.msra.mxu0 0
      %909 = vmatprep.subr.bf16.mxu0 0
      %910 = vmatpush1.bf16.msra.mxu0 0
      %911 = vmatprep.subr.bf16.mxu0 0
      %912 = vmatpush1.bf16.msra.mxu0 0
      %913 = vmatprep.subr.bf16.mxu0 0
      %914 = vmatpush1.bf16.msra.mxu0 0
      %915 = vmatprep.subr.bf16.mxu0 0
      %916 = vmatpush1.bf16.msra.mxu0 0
      %917 = vmatprep.mubr.bf16.mxu0 0
      %918 = vmatmul.mubr.bf16.gmra.mrb[0].mxu0 %v880
      %v919 = vpop.f32.mrb[0].mxu0
      %v920 = vadd.f32 0.0, %v919
      %v921 = vpop.f32.mrb[0].mxu0
      %v922 = vpop.f32.mrb[0].mxu0
      %v923 = vpop.f32.mrb[0].mxu0
      %924 = vdwg.mxu0
      %v925 = vadd.f32 %v876, %v920
      %s926 = scalar_lea.vmem %s3, 4
      %v927 = vld [vmem:[%s926] sm:$0xf]
      %v929 = vunpack.c.l.b16 %v877
      %v930 = vunpack.c.h.b16 %v877
      %v931 = vpack.c.b16 %v929, %v929
      %v932 = vpack.c.b16 %v930, %v930
      %933 = vrot.lane.b32.xlu0 %v931, 127
      %v934 = vpop.permute.xlu0 %933
      %935 = vrot.lane.b32.xlu0 %v932, 127
      %v936 = vpop.permute.xlu0 %935
      %v937 = vsel %vm396, %v934, %v936
      %v939 = vsel %vm398, %v927, 0
      %v942 = vsel %vm402, %v937, 0
      %944 = vmatprep.subr.bf16.mxu0 0
      %945 = vmatpush1.bf16.msra.mxu0 %v942
      %946 = vmatprep.subr.bf16.mxu0 0
      %947 = vmatpush1.bf16.msra.mxu0 0
      %948 = vmatprep.subr.bf16.mxu0 0
      %949 = vmatpush1.bf16.msra.mxu0 0
      %950 = vmatprep.subr.bf16.mxu0 0
      %951 = vmatpush1.bf16.msra.mxu0 0
      %952 = vmatprep.subr.bf16.mxu0 0
      %953 = vmatpush1.bf16.msra.mxu0 0
      %954 = vmatprep.subr.bf16.mxu0 0
      %955 = vmatpush1.bf16.msra.mxu0 0
      %956 = vmatprep.subr.bf16.mxu0 0
      %957 = vmatpush1.bf16.msra.mxu0 0
      %958 = vmatprep.subr.bf16.mxu0 0
      %959 = vmatpush1.bf16.msra.mxu0 0
      %960 = vmatprep.subr.bf16.mxu0 0
      %961 = vmatpush1.bf16.msra.mxu0 0
      %962 = vmatprep.subr.bf16.mxu0 0
      %963 = vmatpush1.bf16.msra.mxu0 0
      %964 = vmatprep.subr.bf16.mxu0 0
      %965 = vmatpush1.bf16.msra.mxu0 0
      %966 = vmatprep.subr.bf16.mxu0 0
      %967 = vmatpush1.bf16.msra.mxu0 0
      %968 = vmatprep.subr.bf16.mxu0 0
      %969 = vmatpush1.bf16.msra.mxu0 0
      %970 = vmatprep.subr.bf16.mxu0 0
      %971 = vmatpush1.bf16.msra.mxu0 0
      %972 = vmatprep.subr.bf16.mxu0 0
      %973 = vmatpush1.bf16.msra.mxu0 0
      %974 = vmatprep.subr.bf16.mxu0 0
      %975 = vmatpush1.bf16.msra.mxu0 0
      %976 = vmatprep.mubr.bf16.mxu0 0
      %977 = vmatmul.mubr.bf16.gmra.mrb[0].mxu0 %v939
      %v978 = vpop.f32.mrb[0].mxu0
      %v979 = vadd.f32 0.0, %v978
      %v980 = vpop.f32.mrb[0].mxu0
      %v981 = vpop.f32.mrb[0].mxu0
      %v982 = vpop.f32.mrb[0].mxu0
      %983 = vdwg.mxu0
      %v984 = vadd.f32 %v925, %v979
      %s985 = scalar_lea.vmem %s3, 8
      %v986 = vld [vmem:[%s985] sm:$0xf]
      %987 = vrot.lane.b32.xlu0 %v931, 126
      %v988 = vpop.permute.xlu0 %987
      %989 = vrot.lane.b32.xlu0 %v932, 126
      %v990 = vpop.permute.xlu0 %989
      %v991 = vsel %vm498, %v988, %v990
      %v993 = vsel %vm398, %v986, 0
      %v996 = vsel %vm402, %v991, 0
      %998 = vmatprep.subr.bf16.mxu0 0
      %999 = vmatpush1.bf16.msra.mxu0 %v996
      %1000 = vmatprep.subr.bf16.mxu0 0
      %1001 = vmatpush1.bf16.msra.mxu0 0
      %1002 = vmatprep.subr.bf16.mxu0 0
      %1003 = vmatpush1.bf16.msra.mxu0 0
      %1004 = vmatprep.subr.bf16.mxu0 0
      %1005 = vmatpush1.bf16.msra.mxu0 0
      %1006 = vmatprep.subr.bf16.mxu0 0
      %1007 = vmatpush1.bf16.msra.mxu0 0
      %1008 = vmatprep.subr.bf16.mxu0 0
      %1009 = vmatpush1.bf16.msra.mxu0 0
      %1010 = vmatprep.subr.bf16.mxu0 0
      %1011 = vmatpush1.bf16.msra.mxu0 0
      %1012 = vmatprep.subr.bf16.mxu0 0
      %1013 = vmatpush1.bf16.msra.mxu0 0
      %1014 = vmatprep.subr.bf16.mxu0 0
      %1015 = vmatpush1.bf16.msra.mxu0 0
      %1016 = vmatprep.subr.bf16.mxu0 0
      %1017 = vmatpush1.bf16.msra.mxu0 0
      %1018 = vmatprep.subr.bf16.mxu0 0
      %1019 = vmatpush1.bf16.msra.mxu0 0
      %1020 = vmatprep.subr.bf16.mxu0 0
      %1021 = vmatpush1.bf16.msra.mxu0 0
      %1022 = vmatprep.subr.bf16.mxu0 0
      %1023 = vmatpush1.bf16.msra.mxu0 0
      %1024 = vmatprep.subr.bf16.mxu0 0
      %1025 = vmatpush1.bf16.msra.mxu0 0
      %1026 = vmatprep.subr.bf16.mxu0 0
      %1027 = vmatpush1.bf16.msra.mxu0 0
      %1028 = vmatprep.subr.bf16.mxu0 0
      %1029 = vmatpush1.bf16.msra.mxu0 0
      %1030 = vmatprep.mubr.bf16.mxu0 0
      %1031 = vmatmul.mubr.bf16.gmra.mrb[0].mxu0 %v993
      %v1032 = vpop.f32.mrb[0].mxu0
      %v1033 = vadd.f32 0.0, %v1032
      %v1034 = vpop.f32.mrb[0].mxu0
      %v1035 = vpop.f32.mrb[0].mxu0
      %v1036 = vpop.f32.mrb[0].mxu0
      %1037 = vdwg.mxu0
      %v1038 = vadd.f32 %v984, %v1033
      %s1039 = scalar_lea.vmem %s3, 12
      %v1040 = vld [vmem:[%s1039] sm:$0xf]
      %1041 = vrot.lane.b32.xlu0 %v931, 110
      %v1042 = vpop.permute.xlu0 %1041
      %1043 = vrot.lane.b32.xlu0 %v932, 110
      %v1044 = vpop.permute.xlu0 %1043
      %v1045 = vsel %vm553, %v1042, %v1044
      %v1047 = vsel %vm398, %v1040, 0
      %v1050 = vsel %vm402, %v1045, 0
      %1052 = vmatprep.subr.bf16.mxu0 0
      %1053 = vmatpush1.bf16.msra.mxu0 %v1050
      %1054 = vmatprep.subr.bf16.mxu0 0
      %1055 = vmatpush1.bf16.msra.mxu0 0
      %1056 = vmatprep.subr.bf16.mxu0 0
      %1057 = vmatpush1.bf16.msra.mxu0 0
      %1058 = vmatprep.subr.bf16.mxu0 0
      %1059 = vmatpush1.bf16.msra.mxu0 0
      %1060 = vmatprep.subr.bf16.mxu0 0
      %1061 = vmatpush1.bf16.msra.mxu0 0
      %1062 = vmatprep.subr.bf16.mxu0 0
      %1063 = vmatpush1.bf16.msra.mxu0 0
      %1064 = vmatprep.subr.bf16.mxu0 0
      %1065 = vmatpush1.bf16.msra.mxu0 0
      %1066 = vmatprep.subr.bf16.mxu0 0
      %1067 = vmatpush1.bf16.msra.mxu0 0
      %1068 = vmatprep.subr.bf16.mxu0 0
      %1069 = vmatpush1.bf16.msra.mxu0 0
      %1070 = vmatprep.subr.bf16.mxu0 0
      %1071 = vmatpush1.bf16.msra.mxu0 0
      %1072 = vmatprep.subr.bf16.mxu0 0
      %1073 = vmatpush1.bf16.msra.mxu0 0
      %1074 = vmatprep.subr.bf16.mxu0 0
      %1075 = vmatpush1.bf16.msra.mxu0 0
      %1076 = vmatprep.subr.bf16.mxu0 0
      %1077 = vmatpush1.bf16.msra.mxu0 0
      %1078 = vmatprep.subr.bf16.mxu0 0
      %1079 = vmatpush1.bf16.msra.mxu0 0
      %1080 = vmatprep.subr.bf16.mxu0 0
      %1081 = vmatpush1.bf16.msra.mxu0 0
      %1082 = vmatprep.subr.bf16.mxu0 0
      %1083 = vmatpush1.bf16.msra.mxu0 0
      %1084 = vmatprep.mubr.bf16.mxu0 0
      %1085 = vmatmul.mubr.bf16.gmra.mrb[0].mxu0 %v1047
      %v1086 = vpop.f32.mrb[0].mxu0
      %v1087 = vadd.f32 0.0, %v1086
      %v1088 = vpop.f32.mrb[0].mxu0
      %v1089 = vpop.f32.mrb[0].mxu0
      %v1090 = vpop.f32.mrb[0].mxu0
      %1091 = vdwg.mxu0
      %v1092 = vadd.f32 %v1038, %v1087
      %s1093 = scalar_lea.vmem %s3, 16
      %v1094 = vld [vmem:[%s1093] sm:$0xf]
      %1095 = vrot.lane.b32.xlu0 %v931, 109
      %v1096 = vpop.permute.xlu0 %1095
      %1097 = vrot.lane.b32.xlu0 %v932, 109
      %v1098 = vpop.permute.xlu0 %1097
      %v1099 = vsel %vm608, %v1096, %v1098
      %v1101 = vsel %vm398, %v1094, 0
      %v1104 = vsel %vm402, %v1099, 0
      %1106 = vmatprep.subr.bf16.mxu0 0
      %1107 = vmatpush1.bf16.msra.mxu0 %v1104
      %1108 = vmatprep.subr.bf16.mxu0 0
      %1109 = vmatpush1.bf16.msra.mxu0 0
      %1110 = vmatprep.subr.bf16.mxu0 0
      %1111 = vmatpush1.bf16.msra.mxu0 0
      %1112 = vmatprep.subr.bf16.mxu0 0
      %1113 = vmatpush1.bf16.msra.mxu0 0
      %1114 = vmatprep.subr.bf16.mxu0 0
      %1115 = vmatpush1.bf16.msra.mxu0 0
      %1116 = vmatprep.subr.bf16.mxu0 0
      %1117 = vmatpush1.bf16.msra.mxu0 0
      %1118 = vmatprep.subr.bf16.mxu0 0
      %1119 = vmatpush1.bf16.msra.mxu0 0
      %1120 = vmatprep.subr.bf16.mxu0 0
      %1121 = vmatpush1.bf16.msra.mxu0 0
      %1122 = vmatprep.subr.bf16.mxu0 0
      %1123 = vmatpush1.bf16.msra.mxu0 0
      %1124 = vmatprep.subr.bf16.mxu0 0
      %1125 = vmatpush1.bf16.msra.mxu0 0
      %1126 = vmatprep.subr.bf16.mxu0 0
      %1127 = vmatpush1.bf16.msra.mxu0 0
      %1128 = vmatprep.subr.bf16.mxu0 0
      %1129 = vmatpush1.bf16.msra.mxu0 0
      %1130 = vmatprep.subr.bf16.mxu0 0
      %1131 = vmatpush1.bf16.msra.mxu0 0
      %1132 = vmatprep.subr.bf16.mxu0 0
      %1133 = vmatpush1.bf16.msra.mxu0 0
      %1134 = vmatprep.subr.bf16.mxu0 0
      %1135 = vmatpush1.bf16.msra.mxu0 0
      %1136 = vmatprep.subr.bf16.mxu0 0
      %1137 = vmatpush1.bf16.msra.mxu0 0
      %1138 = vmatprep.mubr.bf16.mxu0 0
      %1139 = vmatmul.mubr.bf16.gmra.mrb[0].mxu0 %v1101
      %v1140 = vpop.f32.mrb[0].mxu0
      %v1141 = vadd.f32 0.0, %v1140
      %v1142 = vpop.f32.mrb[0].mxu0
      %v1143 = vpop.f32.mrb[0].mxu0
      %v1144 = vpop.f32.mrb[0].mxu0
      %1145 = vdwg.mxu0
      %v1146 = vadd.f32 %v1092, %v1141
      %s1147 = scalar_lea.vmem %s3, 20
      %v1148 = vld [vmem:[%s1147] sm:$0xf]
      %1149 = vrot.lane.b32.xlu0 %v931, 108
      %v1150 = vpop.permute.xlu0 %1149
      %1151 = vrot.lane.b32.xlu0 %v932, 108
      %v1152 = vpop.permute.xlu0 %1151
      %v1153 = vsel %vm663, %v1150, %v1152
      %v1155 = vsel %vm398, %v1148, 0
      %v1158 = vsel %vm402, %v1153, 0
      %1160 = vmatprep.subr.bf16.mxu0 0
      %1161 = vmatpush1.bf16.msra.mxu0 %v1158
      %1162 = vmatprep.subr.bf16.mxu0 0
      %1163 = vmatpush1.bf16.msra.mxu0 0
      %1164 = vmatprep.subr.bf16.mxu0 0
      %1165 = vmatpush1.bf16.msra.mxu0 0
      %1166 = vmatprep.subr.bf16.mxu0 0
      %1167 = vmatpush1.bf16.msra.mxu0 0
      %1168 = vmatprep.subr.bf16.mxu0 0
      %1169 = vmatpush1.bf16.msra.mxu0 0
      %1170 = vmatprep.subr.bf16.mxu0 0
      %1171 = vmatpush1.bf16.msra.mxu0 0
      %1172 = vmatprep.subr.bf16.mxu0 0
      %1173 = vmatpush1.bf16.msra.mxu0 0
      %1174 = vmatprep.subr.bf16.mxu0 0
      %1175 = vmatpush1.bf16.msra.mxu0 0
      %1176 = vmatprep.subr.bf16.mxu0 0
      %1177 = vmatpush1.bf16.msra.mxu0 0
      %1178 = vmatprep.subr.bf16.mxu0 0
      %1179 = vmatpush1.bf16.msra.mxu0 0
      %1180 = vmatprep.subr.bf16.mxu0 0
      %1181 = vmatpush1.bf16.msra.mxu0 0
      %1182 = vmatprep.subr.bf16.mxu0 0
      %1183 = vmatpush1.bf16.msra.mxu0 0
      %1184 = vmatprep.subr.bf16.mxu0 0
      %1185 = vmatpush1.bf16.msra.mxu0 0
      %1186 = vmatprep.subr.bf16.mxu0 0
      %1187 = vmatpush1.bf16.msra.mxu0 0
      %1188 = vmatprep.subr.bf16.mxu0 0
      %1189 = vmatpush1.bf16.msra.mxu0 0
      %1190 = vmatprep.subr.bf16.mxu0 0
      %1191 = vmatpush1.bf16.msra.mxu0 0
      %1192 = vmatprep.mubr.bf16.mxu0 0
      %1193 = vmatmul.mubr.bf16.gmra.mrb[0].mxu0 %v1155
      %v1194 = vpop.f32.mrb[0].mxu0
      %v1195 = vadd.f32 0.0, %v1194
      %v1196 = vpop.f32.mrb[0].mxu0
      %v1197 = vpop.f32.mrb[0].mxu0
      %v1198 = vpop.f32.mrb[0].mxu0
      %1199 = vdwg.mxu0
      %v1200 = vadd.f32 %v1146, %v1195
      %s1201 = scalar_lea.vmem %s3, 24
      %v1202 = vld [vmem:[%s1201] sm:$0xf]
      %1203 = vrot.lane.b32.xlu0 %v931, 92
      %v1204 = vpop.permute.xlu0 %1203
      %1205 = vrot.lane.b32.xlu0 %v932, 92
      %v1206 = vpop.permute.xlu0 %1205
      %v1207 = vsel %vm718, %v1204, %v1206
      %v1209 = vsel %vm398, %v1202, 0
      %v1212 = vsel %vm402, %v1207, 0
      %1214 = vmatprep.subr.bf16.mxu0 0
      %1215 = vmatpush1.bf16.msra.mxu0 %v1212
      %1216 = vmatprep.subr.bf16.mxu0 0
      %1217 = vmatpush1.bf16.msra.mxu0 0
      %1218 = vmatprep.subr.bf16.mxu0 0
      %1219 = vmatpush1.bf16.msra.mxu0 0
      %1220 = vmatprep.subr.bf16.mxu0 0
      %1221 = vmatpush1.bf16.msra.mxu0 0
      %1222 = vmatprep.subr.bf16.mxu0 0
      %1223 = vmatpush1.bf16.msra.mxu0 0
      %1224 = vmatprep.subr.bf16.mxu0 0
      %1225 = vmatpush1.bf16.msra.mxu0 0
      %1226 = vmatprep.subr.bf16.mxu0 0
      %1227 = vmatpush1.bf16.msra.mxu0 0
      %1228 = vmatprep.subr.bf16.mxu0 0
      %1229 = vmatpush1.bf16.msra.mxu0 0
      %1230 = vmatprep.subr.bf16.mxu0 0
      %1231 = vmatpush1.bf16.msra.mxu0 0
      %1232 = vmatprep.subr.bf16.mxu0 0
      %1233 = vmatpush1.bf16.msra.mxu0 0
      %1234 = vmatprep.subr.bf16.mxu0 0
      %1235 = vmatpush1.bf16.msra.mxu0 0
      %1236 = vmatprep.subr.bf16.mxu0 0
      %1237 = vmatpush1.bf16.msra.mxu0 0
      %1238 = vmatprep.subr.bf16.mxu0 0
      %1239 = vmatpush1.bf16.msra.mxu0 0
      %1240 = vmatprep.subr.bf16.mxu0 0
      %1241 = vmatpush1.bf16.msra.mxu0 0
      %1242 = vmatprep.subr.bf16.mxu0 0
      %1243 = vmatpush1.bf16.msra.mxu0 0
      %1244 = vmatprep.subr.bf16.mxu0 0
      %1245 = vmatpush1.bf16.msra.mxu0 0
      %1246 = vmatprep.mubr.bf16.mxu0 0
      %1247 = vmatmul.mubr.bf16.gmra.mrb[0].mxu0 %v1209
      %v1248 = vpop.f32.mrb[0].mxu0
      %v1249 = vadd.f32 0.0, %v1248
      %v1250 = vpop.f32.mrb[0].mxu0
      %v1251 = vpop.f32.mrb[0].mxu0
      %v1252 = vpop.f32.mrb[0].mxu0
      %1253 = vdwg.mxu0
      %v1254 = vadd.f32 %v1200, %v1249
      %s1255 = scalar_lea.vmem %s3, 28
      %v1256 = vld [vmem:[%s1255] sm:$0xf]
      %1257 = vrot.lane.b32.xlu0 %v931, 91
      %v1258 = vpop.permute.xlu0 %1257
      %1259 = vrot.lane.b32.xlu0 %v932, 91
      %v1260 = vpop.permute.xlu0 %1259
      %v1261 = vsel %vm773, %v1258, %v1260
      %v1263 = vsel %vm398, %v1256, 0
      %v1266 = vsel %vm402, %v1261, 0
      %1268 = vmatprep.subr.bf16.mxu0 0
      %1269 = vmatpush1.bf16.msra.mxu0 %v1266
      %1270 = vmatprep.subr.bf16.mxu0 0
      %1271 = vmatpush1.bf16.msra.mxu0 0
      %1272 = vmatprep.subr.bf16.mxu0 0
      %1273 = vmatpush1.bf16.msra.mxu0 0
      %1274 = vmatprep.subr.bf16.mxu0 0
      %1275 = vmatpush1.bf16.msra.mxu0 0
      %1276 = vmatprep.subr.bf16.mxu0 0
      %1277 = vmatpush1.bf16.msra.mxu0 0
      %1278 = vmatprep.subr.bf16.mxu0 0
      %1279 = vmatpush1.bf16.msra.mxu0 0
      %1280 = vmatprep.subr.bf16.mxu0 0
      %1281 = vmatpush1.bf16.msra.mxu0 0
      %1282 = vmatprep.subr.bf16.mxu0 0
      %1283 = vmatpush1.bf16.msra.mxu0 0
      %1284 = vmatprep.subr.bf16.mxu0 0
      %1285 = vmatpush1.bf16.msra.mxu0 0
      %1286 = vmatprep.subr.bf16.mxu0 0
      %1287 = vmatpush1.bf16.msra.mxu0 0
      %1288 = vmatprep.subr.bf16.mxu0 0
      %1289 = vmatpush1.bf16.msra.mxu0 0
      %1290 = vmatprep.subr.bf16.mxu0 0
      %1291 = vmatpush1.bf16.msra.mxu0 0
      %1292 = vmatprep.subr.bf16.mxu0 0
      %1293 = vmatpush1.bf16.msra.mxu0 0
      %1294 = vmatprep.subr.bf16.mxu0 0
      %1295 = vmatpush1.bf16.msra.mxu0 0
      %1296 = vmatprep.subr.bf16.mxu0 0
      %1297 = vmatpush1.bf16.msra.mxu0 0
      %1298 = vmatprep.subr.bf16.mxu0 0
      %1299 = vmatpush1.bf16.msra.mxu0 0
      %1300 = vmatprep.mubr.bf16.mxu0 0
      %1301 = vmatmul.mubr.bf16.gmra.mrb[0].mxu0 %v1263
      %v1302 = vpop.f32.mrb[0].mxu0
      %v1303 = vadd.f32 0.0, %v1302
      %v1304 = vpop.f32.mrb[0].mxu0
      %v1305 = vpop.f32.mrb[0].mxu0
      %v1306 = vpop.f32.mrb[0].mxu0
      %1307 = vdwg.mxu0
      %v1308 = vadd.f32 %v1254, %v1303
      %s1309 = scalar_lea.vmem %s3, 32
      %v1310 = vld [vmem:[%s1309] sm:$0xf]
      %1311 = vrot.lane.b32.xlu0 %v931, 90
      %v1312 = vpop.permute.xlu0 %1311
      %1313 = vrot.lane.b32.xlu0 %v932, 90
      %v1314 = vpop.permute.xlu0 %1313
      %v1315 = vsel %vm828, %v1312, %v1314
      %v1317 = vsel %vm398, %v1310, 0
      %v1320 = vsel %vm402, %v1315, 0
      %1322 = vmatprep.subr.bf16.mxu0 0
      %1323 = vmatpush1.bf16.msra.mxu0 %v1320
      %1324 = vmatprep.subr.bf16.mxu0 0
      %1325 = vmatpush1.bf16.msra.mxu0 0
      %1326 = vmatprep.subr.bf16.mxu0 0
      %1327 = vmatpush1.bf16.msra.mxu0 0
      %1328 = vmatprep.subr.bf16.mxu0 0
      %1329 = vmatpush1.bf16.msra.mxu0 0
      %1330 = vmatprep.subr.bf16.mxu0 0
      %1331 = vmatpush1.bf16.msra.mxu0 0
      %1332 = vmatprep.subr.bf16.mxu0 0
      %1333 = vmatpush1.bf16.msra.mxu0 0
      %1334 = vmatprep.subr.bf16.mxu0 0
      %1335 = vmatpush1.bf16.msra.mxu0 0
      %1336 = vmatprep.subr.bf16.mxu0 0
      %1337 = vmatpush1.bf16.msra.mxu0 0
      %1338 = vmatprep.subr.bf16.mxu0 0
      %1339 = vmatpush1.bf16.msra.mxu0 0
      %1340 = vmatprep.subr.bf16.mxu0 0
      %1341 = vmatpush1.bf16.msra.mxu0 0
      %1342 = vmatprep.subr.bf16.mxu0 0
      %1343 = vmatpush1.bf16.msra.mxu0 0
      %1344 = vmatprep.subr.bf16.mxu0 0
      %1345 = vmatpush1.bf16.msra.mxu0 0
      %1346 = vmatprep.subr.bf16.mxu0 0
      %1347 = vmatpush1.bf16.msra.mxu0 0
      %1348 = vmatprep.subr.bf16.mxu0 0
      %1349 = vmatpush1.bf16.msra.mxu0 0
      %1350 = vmatprep.subr.bf16.mxu0 0
      %1351 = vmatpush1.bf16.msra.mxu0 0
      %1352 = vmatprep.subr.bf16.mxu0 0
      %1353 = vmatpush1.bf16.msra.mxu0 0
      %1354 = vmatprep.mubr.bf16.mxu0 0
      %1355 = vmatmul.mubr.bf16.gmra.mrb[0].mxu0 %v1317
      %v1356 = vpop.f32.mrb[0].mxu0
      %v1357 = vadd.f32 0.0, %v1356
      %v1358 = vpop.f32.mrb[0].mxu0
      %v1359 = vpop.f32.mrb[0].mxu0
      %v1360 = vpop.f32.mrb[0].mxu0
      %1361 = vdwg.mxu0
      %v1362 = vadd.f32 %v1308, %v1357
      %1363 = vst [vmem:[%s373] sm:$0xff] %v1362
      %v1364 = vld [vmem:[%s365] sm:$0x1]
      %v1366 = vlaneseq
      %v1367 = vshrl.u32 %v1366, 7
      %v1368 = vsub.s32 0, %v1367
      %v1369 = vrot.slane %v1364, %v1368
      %v1371 = vmul.f32 %v1362, %v1369
      %p1372 = scmp.eq.s32.totalorder %s24, 0
      // Predicated region
      $region41: #{decoder_block_forward.6} parent=39 // pred_check
        %p1373 = pneg %p1372
      $region42: #{decoder_block_forward.6} parent=39 // pred_check_branch
        %1375 = sbr.rel (%p1373) target = $region44
      $region43: #{decoder_block_forward.6} parent=39 // pred_region
        %vm1376 = vcmask 7168
        %1377 = vst.msk [vmem:[%s377] sm:$0xff] %vm1376, 0.0
        %1378 = vst.msk [vmem:[%s381] sm:$0xff] %vm1376, 0.0
      $region44: #{decoder_block_forward.6} parent=39 // pred_fallthru
        _
      %v1379 = vld [vmem:[%s377] sm:$0xff]
      %1380 = vadd.xlane.f32.xlu0 %v1371
      %v1381 = vpop.xlane.xlu0 %1380
      %v1382 = vadd.f32 %v1379, %v1381
      %vm1383 = vcmask 7168
      %1384 = vst.msk [vmem:[%s377] sm:$0xff] %vm1383, %v1382
      %v1385 = vld [vmem:[%s381] sm:$0xff]
      %v1386 = vmul.f32 %v1371, %v1362
      %1387 = vadd.xlane.f32.xlu0 %v1386
      %v1388 = vpop.xlane.xlu0 %1387
      %v1389 = vadd.f32 %v1385, %v1388
      %1390 = vst.msk [vmem:[%s381] sm:$0xff] %vm1383, %v1389
      %p1391 = scmp.lt.s32.totalorder %s24, 1
      %s1392 = scalar_select %p1391, %s24, 1
      %p1393 = scmp.lt.s32.totalorder %s23, 2
      %s1394 = scalar_select %p1393, %s23, 2
      %s1395 = smul.addr %s1392, 3
      %s1396 = sadd.s32 %s1394, %s1395
      %s1397 = smul.addr %s1396, 8
      %s1398 = scalar_lea.vmem %s5, %s1397
      %p1399 = scmp.lt.s32.totalorder %s23, 2
      %s1400 = scalar_select %p1399, %s23, 2
      %s1401 = smul.addr %s1400, 8
      %s1402 = scalar_lea.vmem %s6, %s1401
      %p1403 = scmp.lt.s32.totalorder %s23, 2
      %s1404 = scalar_select %p1403, %s23, 2
      %s1405 = smul.addr %s1404, 8
      %s1406 = scalar_lea.vmem %s7, %s1405
      // Predicated region
      $region45: #{decoder_block_forward.6} parent=39 // pred_check
        %p1407 = pneg %p175
      $region46: #{decoder_block_forward.6} parent=39 // pred_check_branch
        %1409 = sbr.rel (%p1407) target = $region48
      $region47: #{decoder_block_forward.6} parent=39 // pred_region
        _
      $region48: #{decoder_block_forward.6} parent=39 // pred_fallthru
        _
      // Predicated region
      $region49: #{decoder_block_forward.6} parent=39 // pred_check
        %p1410 = pneg %p201
      $region50: #{decoder_block_forward.6} parent=39 // pred_check_branch
        %1412 = sbr.rel (%p1410) target = $region52
      $region51: #{decoder_block_forward.6} parent=39 // pred_region
        _
      $region52: #{decoder_block_forward.6} parent=39 // pred_fallthru
        _
      // Predicated region
      $region53: #{decoder_block_forward.6} parent=39 // pred_check
        %p1413 = pneg %p227
      $region54: #{decoder_block_forward.6} parent=39 // pred_check_branch
        %1415 = sbr.rel (%p1413) target = $region56
      $region55: #{decoder_block_forward.6} parent=39 // pred_region
        _
      $region56: #{decoder_block_forward.6} parent=39 // pred_fallthru
        _
    $region40: #{decoder_block_forward.6} parent=5 // pred_fallthru
      _
    %p1416 = scmp.le.s32.totalorder 2, %s14
    // Predicated region
    $region57: #{decoder_block_forward.6} parent=5 // pred_check
      %p1417 = pneg %p1416
    $region58: #{decoder_block_forward.6} parent=5 // pred_check_branch
      %1419 = sbr.rel (%p1417) target = $region60
    $region59: #{decoder_block_forward.6} parent=5 // pred_region
      %s1420 = ssub.s32 %s14, 2
      // Predicated region
      $region61: #{decoder_block_forward.6} parent=59 // pred_check
        %p1421 = pneg %p181
      $region62: #{decoder_block_forward.6} parent=59 // pred_check_branch
        %1423 = sbr.rel (%p1421) target = $region64
      $region63: #{decoder_block_forward.6} parent=59 // pred_region
        %p1424 = scmp.lt.s32.totalorder %s26, 1
        %s1425 = scalar_select %p1424, %s26, 1
        %p1426 = scmp.lt.s32.totalorder %s25, 2
        %s1427 = scalar_select %p1426, %s25, 2
        %s1428 = smul.addr %s1425, 3
        %s1429 = sadd.s32 %s1427, %s1428
        %s1430 = smul.addr %s1429, 8
        %s1431 = scalar_lea.vmem %s5, %s1430
      $region64: #{decoder_block_forward.6} parent=59 // pred_fallthru
        _
      // Predicated region
      $region65: #{decoder_block_forward.6} parent=59 // pred_check
        %p1432 = pneg %p207
      $region66: #{decoder_block_forward.6} parent=59 // pred_check_branch
        %1434 = sbr.rel (%p1432) target = $region68
      $region67: #{decoder_block_forward.6} parent=59 // pred_region
        %p1435 = scmp.lt.s32.totalorder %s25, 2
        %s1436 = scalar_select %p1435, %s25, 2
        %s1437 = smul.addr %s1436, 8
        %s1438 = scalar_lea.vmem %s6, %s1437
      $region68: #{decoder_block_forward.6} parent=59 // pred_fallthru
        _
      // Predicated region
      $region69: #{decoder_block_forward.6} parent=59 // pred_check
        %p1439 = pneg %p233
      $region70: #{decoder_block_forward.6} parent=59 // pred_check_branch
        %1441 = sbr.rel (%p1439) target = $region72
      $region71: #{decoder_block_forward.6} parent=59 // pred_region
        %p1442 = scmp.lt.s32.totalorder %s25, 2
        %s1443 = scalar_select %p1442, %s25, 2
        %s1444 = smul.addr %s1443, 8
        %s1445 = scalar_lea.vmem %s7, %s1444
      $region72: #{decoder_block_forward.6} parent=59 // pred_fallthru
        _
    $region60: #{decoder_block_forward.6} parent=5 // pred_fallthru
      _
  $region6: #{decoder_block_forward.6} parent=0 // loop_footer
    %s18 = sadd.s32 1, %s14
  $region7: #{decoder_block_forward.6} parent=0 // loop_footer_branch
    %13 = sbr.rel target = $region3
  $region8: #{decoder_block_forward.6} parent=0 // loop_exit
    _

</llo_original>
